<compile_context>
chip_gen: v7x
topology: tpu7x:2x2x1
jax: 0.10.0
libtpu: 0.0.40
codegen_flags: <defaults>
</compile_context>

<pallas_src>
import functools

import numpy as np
import jax
import jax.numpy as jnp
from jax.experimental import pallas as pl
from jax.experimental.pallas import tpu as pltpu

# ----------------------------- configuration --------------------------------
# Matches Network(num_layers=3, hidden_dim=16) with
# GridEncoder(input_dim=3, num_levels=8, level_dim=2, base_resolution=8,
#             log2_hashmap_size=18, desired_resolution=32, gridtype='hash').
NUM_LAYERS = 3
HIDDEN_DIM = 16
INPUT_DIM = 3
NUM_LEVELS = 8
LEVEL_DIM = 2
BASE_RES = 8
DESIRED_RES = 32
LOG2_HASHMAP = 18
ENC_DIM = NUM_LEVELS * LEVEL_DIM          # encoder output dim = 16 = MLP in_dim
N_CORNERS = 2 ** INPUT_DIM                # 8 trilinear corners

# Per-level resolutions / table layout (torch-ngp style).
_PER_LEVEL_SCALE = np.exp2(np.log2(DESIRED_RES / BASE_RES) / (NUM_LEVELS - 1))
LEVEL_RES = [int(np.ceil(BASE_RES * _PER_LEVEL_SCALE ** i)) for i in range(NUM_LEVELS)]
# All dense grids (res^3) fit inside the 2**18-entry hashmap, so the 'hash'
# grid type degenerates to direct dense indexing at this configuration.
# TODO(synk): the spatial-hash fallback (primes-XOR % hashmap_size) is never
# taken for these resolutions and is therefore not implemented.
assert all(r ** 3 <= 2 ** LOG2_HASHMAP for r in LEVEL_RES)
LEVEL_SIZES = [int(np.ceil((r ** 3) / 8) * 8) for r in LEVEL_RES]
LEVEL_OFFSETS = np.cumsum([0] + LEVEL_SIZES[:-1]).tolist()
TOTAL_PARAMS = int(sum(LEVEL_SIZES))

# Constant lookup arrays for the vectorized encoder glue.
_RES_F = np.asarray(LEVEL_RES, np.float32)                          # (L,)
_RES_I = np.asarray(LEVEL_RES, np.int32)                            # (L,)
_LVL_OFF = np.asarray(LEVEL_OFFSETS, np.int32)                      # (L,)
_CORNER_OFF = np.asarray(
    [[(c >> 0) & 1, (c >> 1) & 1, (c >> 2) & 1] for c in range(N_CORNERS)],
    np.int32)                                                        # (8, 3)


def _round_up(v, m):
    return ((v + m - 1) // m) * m


# --------------- JAX glue: vectorized gather + trilinear blend --------------
def encode(x, table):
    """x: (N,3) in [-1,1]; table: (TOTAL_PARAMS, 2) -> (ENC_DIM, N) features.

    Single batched gather (one (N,64) index array) fused with the trilinear
    weights.  Output is feature-major (ENC_DIM, N) so the Pallas MLP gets
    lane-dense blocks (the transpose is done once here, per the review).
    """
    n = x.shape[0]
    res_f = jnp.asarray(_RES_F)                                     # (L,)
    res_i = jnp.asarray(_RES_I)                                     # (L,)
    lvl_off = jnp.asarray(_LVL_OFF)                                 # (L,)
    corner_off = jnp.asarray(_CORNER_OFF)                           # (8,3)

    x01 = jnp.clip((x + 1.0) * 0.5, 0.0, 1.0)                       # (N,3)
    pos = x01[:, None, :] * (res_f[None, :, None] - 1.0)            # (N,L,3)
    basef = jnp.clip(jnp.floor(pos), 0.0, res_f[None, :, None] - 2.0)
    frac = pos - basef                                              # (N,L,3)
    basei = basef.astype(jnp.int32)                                 # (N,L,3)

    corner = basei[:, :, None, :] + corner_off[None, None, :, :]    # (N,L,8,3)
    idx = (corner[..., 0]
           + corner[..., 1] * res_i[None, :, None]
           + corner[..., 2] * (res_i * res_i)[None, :, None]
           + lvl_off[None, :, None])                                # (N,L,8)

    emb = jnp.take(table, idx.reshape(n, NUM_LEVELS * N_CORNERS), axis=0)
    emb = emb.reshape(n, NUM_LEVELS, N_CORNERS, LEVEL_DIM)          # (N,L,8,2)

    wsel = jnp.where(corner_off[None, None, :, :] > 0,
                     frac[:, :, None, :], 1.0 - frac[:, :, None, :])    # (N,L,8,3)
    w = wsel[..., 0] * wsel[..., 1] * wsel[..., 2]                  # (N,L,8)

    enc = jnp.sum(w[..., None] * emb, axis=2)                       # (N,L,2)
    return enc.reshape(n, ENC_DIM).T                                # (16, N)


# ------------------------------- Pallas kernel -------------------------------
def mlp_kernel(enc_ref, w0_ref, w1_ref, w2_ref, o_ref):
    # enc_ref : (16, TN)  feature-major encoded features (lane-dense)
    # w0_ref  : (16, 16)  layer-0 weight, torch (out, in) layout
    # w1_ref  : (16, 16)  layer-1 weight, torch (out, in) layout
    # w2_ref  : (16, 1)   layer-2 weight as a column (== w2.T)
    # o_ref   : (1, TN)   lane-dense output slab
    h = jnp.maximum(
        jnp.dot(w0_ref[...], enc_ref[...], preferred_element_type=jnp.float32),
        0.0)                                                        # (16, TN)
    h = jnp.maximum(
        jnp.dot(w1_ref[...], h, preferred_element_type=jnp.float32),
        0.0)                                                        # (16, TN)
    # Final 16 -> 1 layer: per-lane multiply + 16-sublane reduce (XLU), giving
    # a (1, TN) result stored with full-lane unmasked vst.
    o_ref[...] = jnp.sum(h * w2_ref[...], axis=0, keepdims=True)


def prepare_params(w0, w1, w2):
    """One-time preprocessing of torch (out,in) weights for the kernel."""
    # Feature-major math uses W directly (h = W @ x_fm); only w2 becomes a
    # (HIDDEN_DIM, 1) column for the broadcast-multiply + sublane reduce.
    return (jnp.asarray(w0, jnp.float32),
            jnp.asarray(w1, jnp.float32),
            jnp.asarray(w2, jnp.float32).reshape(HIDDEN_DIM, 1))


@functools.partial(jax.jit, static_argnames=("tile_n",))
def network_forward(x, table, params, *, tile_n=4096):
    w0, w1, w2col = params
    n = x.shape[0]

    enc_fm = encode(x, table)                                       # (16, N)

    # Tile choice: large tiles amortize the ~0.35 us/grid-step overhead, but we
    # keep >= 2 grid steps when the problem allows it so the 'parallel' axis
    # can shard across v7x's two TensorCores.  No explicit padding: Pallas
    # handles the ragged last block (garbage columns are masked on store).
    tile = max(128, min(tile_n, _round_up(pl.cdiv(n, 2), 128)))
    grid = pl.cdiv(n, tile)

    out_fm = pl.pallas_call(
        mlp_kernel,
        out_shape=jax.ShapeDtypeStruct((1, n), jnp.float32),
        grid_spec=pltpu.PrefetchScalarGridSpec(
            num_scalar_prefetch=0,
            grid=(grid,),
            in_specs=[
                pl.BlockSpec((ENC_DIM, tile), lambda i: (0, i)),
                pl.BlockSpec((HIDDEN_DIM, ENC_DIM), lambda i: (0, 0)),
                pl.BlockSpec((HIDDEN_DIM, HIDDEN_DIM), lambda i: (0, 0)),
                pl.BlockSpec((HIDDEN_DIM, 1), lambda i: (0, 0)),
            ],
            out_specs=pl.BlockSpec((1, tile), lambda i: (0, i)),
        ),
        compiler_params=pltpu.CompilerParams(dimension_semantics=("parallel",)),
    )(enc_fm, w0, w1, w2col)

    return out_fm.reshape(n, 1)                                     # (N, 1)


# --------------------------- pure-JAX reference ------------------------------
def reference_forward(x, table, w0, w1, w2):
    x01 = jnp.clip((x + 1.0) * 0.5, 0.0, 1.0)
    feats = []
    for l in range(NUM_LEVELS):
        res = LEVEL_RES[l]
        pos = x01 * (res - 1.0)
        basef = jnp.clip(jnp.floor(pos), 0.0, res - 2.0)
        frac = pos - basef
        basei = basef.astype(jnp.int32)
        acc = jnp.zeros((x.shape[0], LEVEL_DIM), jnp.float32)
        for c in range(N_CORNERS):
            off = jnp.array([(c >> 0) & 1, (c >> 1) & 1, (c >> 2) & 1], jnp.int32)
            corner = basei + off
            idx = corner[:, 0] + corner[:, 1] * res + corner[:, 2] * res * res
            emb = table[LEVEL_OFFSETS[l] + idx]
            wsel = jnp.where(off > 0, frac, 1.0 - frac)
            w = wsel[:, 0] * wsel[:, 1] * wsel[:, 2]
            acc = acc + w[:, None] * emb
        feats.append(acc)
    h = jnp.concatenate(feats, axis=1)
    h = jnp.maximum(h @ w0.T, 0.0)
    h = jnp.maximum(h @ w1.T, 0.0)
    return h @ w2.T


# ----------------------------------- main ------------------------------------
if __name__ == "__main__":
    key = jax.random.PRNGKey(0)
    k_table, k0, k1, k2, kx = jax.random.split(key, 5)

    # Deterministic synthetic parameters (torch-ngp embeddings ~ U(-1e-4, 1e-4);
    # nn.Linear(bias=False) ~ U(-1/sqrt(fan_in), 1/sqrt(fan_in))).
    table = jax.random.uniform(k_table, (TOTAL_PARAMS, LEVEL_DIM), jnp.float32,
                               -1e-4, 1e-4)
    b0 = 1.0 / np.sqrt(ENC_DIM)
    b1 = 1.0 / np.sqrt(HIDDEN_DIM)
    w0 = jax.random.uniform(k0, (HIDDEN_DIM, ENC_DIM), jnp.float32, -b0, b0)
    w1 = jax.random.uniform(k1, (HIDDEN_DIM, HIDDEN_DIM), jnp.float32, -b1, b1)
    w2 = jax.random.uniform(k2, (1, HIDDEN_DIM), jnp.float32, -b1, b1)

    N = 8192  # number of query points (2 grid steps of 4096 lanes each)
    x = jax.random.uniform(kx, (N, INPUT_DIM), jnp.float32, -1.0, 1.0)

    params = prepare_params(w0, w1, w2)      # one-time weight preprocessing
    out = network_forward(x, table, params)
    out = jax.block_until_ready(out)
    assert out.shape == (N, 1)

    ref = reference_forward(x, table, w0, w1, w2)
    np.testing.assert_allclose(np.asarray(out), np.asarray(ref),
                               rtol=1e-3, atol=1e-6)
    print("KERNEL_OK")
</pallas_src>

<mosaic_0001>
module attributes {stable_mosaic.version = 11 : i64} {
  func.func @mlp_kernel(%arg0: i32, %arg1: memref<16x4096xf32, #tpu.memory_space<vmem>>, %arg2: memref<16x16xf32, #tpu.memory_space<vmem>>, %arg3: memref<16x16xf32, #tpu.memory_space<vmem>>, %arg4: memref<16x1xf32, #tpu.memory_space<vmem>>, %arg5: memref<1x4096xf32, #tpu.memory_space<vmem>>) attributes {dimension_semantics = [#tpu.dimension_semantics<parallel>], iteration_bounds = array<i64: 2>, scalar_prefetch = 0 : i64, scratch_operands = 0 : i64, tpu.core_type = #tpu.core_type<tc>, window_params = [{transform_indices = @transform_0, window_bounds = array<i64: 16, 4096>}, {pipeline_mode = #tpu.pipeline_mode<synchronous>, transform_indices = @transform_1, window_bounds = array<i64: 16, 16>}, {pipeline_mode = #tpu.pipeline_mode<synchronous>, transform_indices = @transform_2, window_bounds = array<i64: 16, 16>}, {pipeline_mode = #tpu.pipeline_mode<synchronous>, transform_indices = @transform_3, window_bounds = array<i64: 16, 1>}, {transform_indices = @transform_4, window_bounds = array<i64: 1, 4096>}]} {
    %c0 = arith.constant 0 : index
    %c0_0 = arith.constant 0 : index
    %0 = vector.load %arg2[%c0, %c0_0] : memref<16x16xf32, #tpu.memory_space<vmem>>, vector<16x16xf32>
    %c0_1 = arith.constant 0 : index
    %c0_2 = arith.constant 0 : index
    %1 = vector.load %arg1[%c0_1, %c0_2] : memref<16x4096xf32, #tpu.memory_space<vmem>>, vector<16x4096xf32>
    %cst = arith.constant dense<0.000000e+00> : vector<16x4096xf32>
    %2 = tpu.matmul %0, %1, %cst {dimension_numbers = #tpu.dot_dimension_numbers<[1], [0], [0], [1], [0, 0, 1, 1], [], []>} : vector<16x16xf32>, vector<16x4096xf32>, vector<16x4096xf32> -> vector<16x4096xf32>
    %cst_3 = arith.constant 0.000000e+00 : f32
    %3 = vector.broadcast %cst_3 : f32 to vector<16x4096xf32>
    %4 = arith.maximumf %2, %3 : vector<16x4096xf32>
    %c0_4 = arith.constant 0 : index
    %c0_5 = arith.constant 0 : index
    %5 = vector.load %arg3[%c0_4, %c0_5] : memref<16x16xf32, #tpu.memory_space<vmem>>, vector<16x16xf32>
    %cst_6 = arith.constant dense<0.000000e+00> : vector<16x4096xf32>
    %6 = tpu.matmul %5, %4, %cst_6 {dimension_numbers = #tpu.dot_dimension_numbers<[1], [0], [0], [1], [0, 0, 1, 1], [], []>} : vector<16x16xf32>, vector<16x4096xf32>, vector<16x4096xf32> -> vector<16x4096xf32>
    %cst_7 = arith.constant 0.000000e+00 : f32
    %7 = vector.broadcast %cst_7 : f32 to vector<16x4096xf32>
    %8 = arith.maximumf %6, %7 : vector<16x4096xf32>
    %c0_8 = arith.constant 0 : index
    %c0_9 = arith.constant 0 : index
    %9 = vector.load %arg4[%c0_8, %c0_9] : memref<16x1xf32, #tpu.memory_space<vmem>>, vector<16x1xf32>
    %10 = vector.broadcast %9 : vector<16x1xf32> to vector<16x4096xf32>
    %11 = arith.mulf %8, %10 : vector<16x4096xf32>
    %cst_10 = arith.constant dense<0.000000e+00> : vector<4096xf32>
    %12 = vector.multi_reduction <add>, %11, %cst_10 [0] : vector<16x4096xf32> to vector<4096xf32>
    %13 = vector.shape_cast %12 : vector<4096xf32> to vector<1x4096xf32>
    %c0_11 = arith.constant 0 : index
    %c0_12 = arith.constant 0 : index
    %14 = vector.load %arg5[%c0_11, %c0_12] : memref<1x4096xf32, #tpu.memory_space<vmem>>, vector<1x4096xf32>
    tpu.vector_store %arg5[%c0_11, %c0_12], %13 {strides = array<i32>} : memref<1x4096xf32, #tpu.memory_space<vmem>>, vector<1x4096xf32>,
    return
  }
  func.func @transform_0(%arg0: i32) -> (i32, i32) {
    %c0_i32 = arith.constant 0 : i32
    %c0_i32_0 = arith.constant 0 : i32
    return %c0_i32, %arg0 : i32, i32
  }
  func.func @transform_1(%arg0: i32) -> (i32, i32) {
    %c0_i32 = arith.constant 0 : i32
    %c0_i32_0 = arith.constant 0 : i32
    %c0_i32_1 = arith.constant 0 : i32
    return %c0_i32, %c0_i32_0 : i32, i32
  }
  func.func @transform_2(%arg0: i32) -> (i32, i32) {
    %c0_i32 = arith.constant 0 : i32
    %c0_i32_0 = arith.constant 0 : i32
    %c0_i32_1 = arith.constant 0 : i32
    return %c0_i32, %c0_i32_0 : i32, i32
  }
  func.func @transform_3(%arg0: i32) -> (i32, i32) {
    %c0_i32 = arith.constant 0 : i32
    %c0_i32_0 = arith.constant 0 : i32
    %c0_i32_1 = arith.constant 0 : i32
    return %c0_i32, %c0_i32_0 : i32, i32
  }
  func.func @transform_4(%arg0: i32) -> (i32, i32) {
    %c0_i32 = arith.constant 0 : i32
    %c0_i32_0 = arith.constant 0 : i32
    return %c0_i32, %arg0 : i32, i32
  }
}

</mosaic_0001>

<llo_original>
// kernel: network_forward.1
$region0: #{network_forward.1}
  #allocation0 [shape = 'u32[]', space=smem, size = 0x4, offset = 0x4, fixed_abs, tag = 'smem constant byte address 0x4 - core index']
  #allocation1 [shape = 'u32[144,128]{1,0:T(1,128)}', space=vmem, size = 0x12000, scoped, tag = 'internal scratch']
  %s0 = inlined_call_operand.vmem [shape: f32[16,8192], index: 0, kind: input, shape index: {}]
  %s1 = inlined_call_operand.hbm [shape: f32[16,16], index: 1, kind: input, shape index: {}]
  %s2 = inlined_call_operand.hbm [shape: f32[16,16], index: 2, kind: input, shape index: {}]
  %s3 = inlined_call_operand.vmem [shape: f32[16,1], index: 3, kind: input, shape index: {}]
  %s4 = inlined_call_operand.hbm [shape: f32[1,8192], index: 4, kind: output, shape index: {}]
  %s5 = sld [smem:[#allocation0]]
  $region80: #{network_forward.1} parent=0
    _
  %s7 = ssub.s32 1, %s5
  %s8 = scalar_select 0, %s7, %s5
  $region1: #{network_forward.1} parent=0
    #allocation2 [shape = 'u8[524288]{0}', space=vmem, size = 0x80000, scoped, tag = 'input window, operand 0']
    #allocation3 [shape = 'u8[8192]{0}', space=vmem, size = 0x2000, scoped, tag = 'input window, operand 1, single buffered']
    #allocation4 [shape = 's32[2]{0}', space=sflag, size = 0x8, scoped, tag = 'scoped memory for network_forward.1']
    #allocation5 [shape = 's32[2]{0}', space=sflag, size = 0x8, scoped, tag = 'scoped memory for network_forward.1']
    #allocation6 [shape = 'u8[8192]{0}', space=vmem, size = 0x2000, scoped, tag = 'input window, operand 2, single buffered']
    #allocation7 [shape = 's32[1]{0}', space=sflag, size = 0x4, scoped, tag = 'scoped memory for network_forward.1']
    #allocation8 [shape = 'u8[32768]{0}', space=vmem, size = 0x8000, scoped, tag = 'output window, operand 0']
    %9 = vsyncpa [#allocation4], 0
    %10 = vsyncpa [#allocation7], 0
    %11 = vsyncpa [#allocation5], 0
    %s12 = scalar_lea.sflag [#allocation5], 1
    %13 = vsyncpa %s12, 0
    loop: start=0, step=1, limit=4
    $region2: #{network_forward.1} parent=1 // loop_pre_header
      _
    $region3: #{network_forward.1} parent=1 // loop_header
      %s15 = sphi 0, %s19
      %p16 = scmp.ge.s32.totalorder %s15, 4
      %s25 = sphi 0, %s27
      %s28 = sphi 0, %s25
      %s29 = sphi 0, %s28
      %s45 = sphi 0, %s29
      %s49 = sphi 0, %s49
      %s51 = sphi 0, %s49
      %s52 = sphi 0, %s51
      %s66 = sphi 0, %s52
      %s70 = sphi 0, %s70
      %s72 = sphi 0, %s70
      %s73 = sphi 0, %s72
      %s87 = sphi 0, %s73
      %s91 = sphi 0, %s91
      %s93 = sphi 0, %s91
      %s94 = sphi 0, %s93
      %s108 = sphi 0, %s94
      %s114 = sphi 0, %s116
      %s117 = sphi 0, %s114
      %s118 = sphi 0, %s117
      %s134 = sphi 0, %s118
    $region4: #{network_forward.1} parent=1 // loop_header_branch
      %18 = sbr.rel (%p16) target = $region8
    $region5: #{network_forward.1} parent=1 // loop_body
      %s20 = ssub.s32 %s15, 1
      %s21 = ssub.s32 %s15, 2
      %s22 = sadd.s32 %s15, 1
      %s23 = ssub.s32 %s15, %s22
      %p24 = scmp.eq.s32.totalorder %s23, 0
      %s26 = sadd.s32 %s25, 1
      %s27 = scalar_select %p24, %s25, %s26
      %p30 = pneg %p24
      %p31 = scmp.eq.s32.totalorder %s15, 1
      %p32 = por %p30, %p31
      %p33 = scmp.ne.s32.totalorder %s25, %s28
      %p34 = scmp.eq.s32.totalorder %s15, 0
      %p35 = por %p33, %p34
      %p36 = scmp.ne.s32.totalorder %s25, %s28
      %p37 = scmp.eq.s32.totalorder %s20, 1
      %p38 = por %p36, %p37
      %p39 = scmp.ne.s32.totalorder %s28, %s29
      %p40 = scmp.eq.s32.totalorder %s20, 0
      %p41 = por %p39, %p40
      %p42 = scmp.ne.s32.totalorder %s28, %s29
      %p43 = scmp.eq.s32.totalorder %s21, 1
      %p44 = por %p42, %p43
      %p46 = scmp.ne.s32.totalorder %s29, %s45
      %p47 = scmp.eq.s32.totalorder %s21, 0
      %p48 = por %p46, %p47
      %s50 = sadd.s32 %s49, 1
      %p53 = scmp.eq.s32.totalorder %s15, 1
      %p54 = scmp.ne.s32.totalorder %s49, %s51
      %p55 = scmp.eq.s32.totalorder %s15, 0
      %p56 = por %p54, %p55
      %p57 = scmp.ne.s32.totalorder %s49, %s51
      %p58 = scmp.eq.s32.totalorder %s20, 1
      %p59 = por %p57, %p58
      %p60 = scmp.ne.s32.totalorder %s51, %s52
      %p61 = scmp.eq.s32.totalorder %s20, 0
      %p62 = por %p60, %p61
      %p63 = scmp.ne.s32.totalorder %s51, %s52
      %p64 = scmp.eq.s32.totalorder %s21, 1
      %p65 = por %p63, %p64
      %p67 = scmp.ne.s32.totalorder %s52, %s66
      %p68 = scmp.eq.s32.totalorder %s21, 0
      %p69 = por %p67, %p68
      %s71 = sadd.s32 %s70, 1
      %p74 = scmp.eq.s32.totalorder %s15, 1
      %p75 = scmp.ne.s32.totalorder %s70, %s72
      %p76 = scmp.eq.s32.totalorder %s15, 0
      %p77 = por %p75, %p76
      %p78 = scmp.ne.s32.totalorder %s70, %s72
      %p79 = scmp.eq.s32.totalorder %s20, 1
      %p80 = por %p78, %p79
      %p81 = scmp.ne.s32.totalorder %s72, %s73
      %p82 = scmp.eq.s32.totalorder %s20, 0
      %p83 = por %p81, %p82
      %p84 = scmp.ne.s32.totalorder %s72, %s73
      %p85 = scmp.eq.s32.totalorder %s21, 1
      %p86 = por %p84, %p85
      %p88 = scmp.ne.s32.totalorder %s73, %s87
      %p89 = scmp.eq.s32.totalorder %s21, 0
      %p90 = por %p88, %p89
      %s92 = sadd.s32 %s91, 1
      %p95 = scmp.eq.s32.totalorder %s15, 1
      %p96 = scmp.ne.s32.totalorder %s91, %s93
      %p97 = scmp.eq.s32.totalorder %s15, 0
      %p98 = por %p96, %p97
      %p99 = scmp.ne.s32.totalorder %s91, %s93
      %p100 = scmp.eq.s32.totalorder %s20, 1
      %p101 = por %p99, %p100
      %p102 = scmp.ne.s32.totalorder %s93, %s94
      %p103 = scmp.eq.s32.totalorder %s20, 0
      %p104 = por %p102, %p103
      %p105 = scmp.ne.s32.totalorder %s93, %s94
      %p106 = scmp.eq.s32.totalorder %s21, 1
      %p107 = por %p105, %p106
      %p109 = scmp.ne.s32.totalorder %s94, %s108
      %p110 = scmp.eq.s32.totalorder %s21, 0
      %p111 = por %p109, %p110
      %s112 = ssub.s32 %s15, %s22
      %p113 = scmp.eq.s32.totalorder %s112, 0
      %s115 = sadd.s32 %s114, 1
      %s116 = scalar_select %p113, %s114, %s115
      %p119 = pneg %p113
      %p120 = scmp.eq.s32.totalorder %s15, 1
      %p121 = por %p119, %p120
      %p122 = scmp.ne.s32.totalorder %s114, %s117
      %p123 = scmp.eq.s32.totalorder %s15, 0
      %p124 = por %p122, %p123
      %p125 = scmp.ne.s32.totalorder %s114, %s117
      %p126 = scmp.eq.s32.totalorder %s20, 1
      %p127 = por %p125, %p126
      %p128 = scmp.ne.s32.totalorder %s117, %s118
      %p129 = scmp.eq.s32.totalorder %s20, 0
      %p130 = por %p128, %p129
      %p131 = scmp.ne.s32.totalorder %s117, %s118
      %p132 = scmp.eq.s32.totalorder %s21, 1
      %p133 = por %p131, %p132
      %p135 = scmp.ne.s32.totalorder %s118, %s134
      %p136 = scmp.eq.s32.totalorder %s21, 0
      %p137 = por %p135, %p136
      %p138 = scmp.le.s32.totalorder 1, %s15
      %p139 = scmp.lt.s32.totalorder %s15, 3
      %p140 = pnand %p138, %p139
      %p141 = pneg %p140
      // Predicated region
      $region9: #{network_forward.1} parent=5 // pred_check
        _
      $region10: #{network_forward.1} parent=5 // pred_check_branch
        %143 = sbr.rel (%p140) target = $region12
      $region11: #{network_forward.1} parent=5 // pred_region
        %s144 = ssub.s32 %s15, 1
        // Predicated region
        $region13: #{network_forward.1} parent=11 // pred_check
          %p145 = pneg %p62
        $region14: #{network_forward.1} parent=11 // pred_check_branch
          %147 = sbr.rel (%p145) target = $region16
        $region15: #{network_forward.1} parent=11 // pred_region
          %s149 = ssub.s32 256, 256
          %150 = vsyncadd [#allocation4], %s149
          %s151 = sshll.u32 [#allocation3], 4
          %s152 = int_to_ptr.vmem [resolvable:$true] %s151
          %157 = dma.hbm_to_vmem [thread:$0]  %s1, 256, %s152, [#allocation4], 128, 128, 8
        $region16: #{network_forward.1} parent=11 // pred_fallthru
          _
        // Predicated region
        $region17: #{network_forward.1} parent=11 // pred_check
          %p158 = pneg %p83
        $region18: #{network_forward.1} parent=11 // pred_check_branch
          %160 = sbr.rel (%p158) target = $region20
        $region19: #{network_forward.1} parent=11 // pred_region
          %s162 = ssub.s32 256, 256
          %163 = vsyncadd [#allocation7], %s162
          %s164 = sshll.u32 [#allocation6], 4
          %s165 = int_to_ptr.vmem [resolvable:$true] %s164
          %170 = dma.hbm_to_vmem [thread:$0]  %s2, 256, %s165, [#allocation7], 128, 128, 8
        $region20: #{network_forward.1} parent=11 // pred_fallthru
          _
        // Predicated region
        $region21: #{network_forward.1} parent=11 // pred_check
          %p171 = pneg %p104
        $region22: #{network_forward.1} parent=11 // pred_check_branch
          %173 = sbr.rel (%p171) target = $region24
        $region23: #{network_forward.1} parent=11 // pred_region
          _
        $region24: #{network_forward.1} parent=11 // pred_fallthru
          _
      $region12: #{network_forward.1} parent=5 // pred_fallthru
        _
      %p174 = scmp.lt.s32.totalorder %s15, 2
      // Predicated region
      $region25: #{network_forward.1} parent=5 // pred_check
        %p175 = pneg %p174
      $region26: #{network_forward.1} parent=5 // pred_check_branch
        %177 = sbr.rel (%p175) target = $region28
      $region27: #{network_forward.1} parent=5 // pred_region
        // Predicated region
        $region29: #{network_forward.1} parent=27 // pred_check
          %p178 = pneg %p35
        $region30: #{network_forward.1} parent=27 // pred_check_branch
          %180 = sbr.rel (%p178) target = $region32
        $region31: #{network_forward.1} parent=27 // pred_region
          %s181 = sand.u32 %s25, 1
          %s182 = sand.u32 %s25, 1
          %s183 = smul.addr %s182, 512
          %s184 = scalar_lea.vmem [#allocation2], %s183
          %s185 = smul.u32 32, %s15
          %s186 = smul.addr %s185, 8
          %s187 = scalar_lea.vmem %s0, %s186
          // Predicated region
          $region33: #{network_forward.1} parent=31 // pred_check
            _
          $region34: #{network_forward.1} parent=31 // pred_check_branch
            %189 = sbr.rel (0) target = $region36
          $region35: #{network_forward.1} parent=31 // pred_region
            // Predicated region
            $region37: #{network_forward.1} parent=35 // pred_check
              _
            $region38: #{network_forward.1} parent=35 // pred_check_branch
              %191 = sbr.rel (0) target = $region40
            $region39: #{network_forward.1} parent=35 // pred_region
              loop: start=0, step=1, limit=1
              $region41: #{network_forward.1} parent=39 // loop_pre_header
                _
              $region42: #{network_forward.1} parent=39 // loop_header
                %s193 = sphi 0, %s197
                %p194 = scmp.ge.s32.totalorder %s193, 1
                %s198 = sphi %s187, %s187
                %s199 = sphi %s184, %s184
              $region43: #{network_forward.1} parent=39 // loop_header_branch
                %196 = sbr.rel (%p194) target = $region47
              $region44: #{network_forward.1} parent=39 // loop_body
                %v200 = vld [vmem:[%s198] sm:$0xff]
                %201 = vst [vmem:[%s199] sm:$0xff] %v200
                %v202 = vld [vmem:[%s198 + $0x8] sm:$0xff]
                %203 = vst [vmem:[%s199 + $0x8] sm:$0xff] %v202
                %v204 = vld [vmem:[%s198 + $0x10] sm:$0xff]
                %205 = vst [vmem:[%s199 + $0x10] sm:$0xff] %v204
                %v206 = vld [vmem:[%s198 + $0x18] sm:$0xff]
                %207 = vst [vmem:[%s199 + $0x18] sm:$0xff] %v206
                %v208 = vld [vmem:[%s198 + $0x20] sm:$0xff]
                %209 = vst [vmem:[%s199 + $0x20] sm:$0xff] %v208
                %v210 = vld [vmem:[%s198 + $0x28] sm:$0xff]
                %211 = vst [vmem:[%s199 + $0x28] sm:$0xff] %v210
                %v212 = vld [vmem:[%s198 + $0x30] sm:$0xff]
                %213 = vst [vmem:[%s199 + $0x30] sm:$0xff] %v212
                %v214 = vld [vmem:[%s198 + $0x38] sm:$0xff]
                %215 = vst [vmem:[%s199 + $0x38] sm:$0xff] %v214
                %v216 = vld [vmem:[%s198 + $0x40] sm:$0xff]
                %217 = vst [vmem:[%s199 + $0x40] sm:$0xff] %v216
                %v218 = vld [vmem:[%s198 + $0x48] sm:$0xff]
                %219 = vst [vmem:[%s199 + $0x48] sm:$0xff] %v218
                %v220 = vld [vmem:[%s198 + $0x50] sm:$0xff]
                %221 = vst [vmem:[%s199 + $0x50] sm:$0xff] %v220
                %v222 = vld [vmem:[%s198 + $0x58] sm:$0xff]
                %223 = vst [vmem:[%s199 + $0x58] sm:$0xff] %v222
                %v224 = vld [vmem:[%s198 + $0x60] sm:$0xff]
                %225 = vst [vmem:[%s199 + $0x60] sm:$0xff] %v224
                %v226 = vld [vmem:[%s198 + $0x68] sm:$0xff]
                %227 = vst [vmem:[%s199 + $0x68] sm:$0xff] %v226
                %v228 = vld [vmem:[%s198 + $0x70] sm:$0xff]
                %229 = vst [vmem:[%s199 + $0x70] sm:$0xff] %v228
                %v230 = vld [vmem:[%s198 + $0x78] sm:$0xff]
                %231 = vst [vmem:[%s199 + $0x78] sm:$0xff] %v230
                %v232 = vld [vmem:[%s198 + $0x80] sm:$0xff]
                %233 = vst [vmem:[%s199 + $0x80] sm:$0xff] %v232
                %v234 = vld [vmem:[%s198 + $0x88] sm:$0xff]
                %235 = vst [vmem:[%s199 + $0x88] sm:$0xff] %v234
                %v236 = vld [vmem:[%s198 + $0x90] sm:$0xff]
                %237 = vst [vmem:[%s199 + $0x90] sm:$0xff] %v236
                %v238 = vld [vmem:[%s198 + $0x98] sm:$0xff]
                %239 = vst [vmem:[%s199 + $0x98] sm:$0xff] %v238
                %v240 = vld [vmem:[%s198 + $0xa0] sm:$0xff]
                %241 = vst [vmem:[%s199 + $0xa0] sm:$0xff] %v240
                %v242 = vld [vmem:[%s198 + $0xa8] sm:$0xff]
                %243 = vst [vmem:[%s199 + $0xa8] sm:$0xff] %v242
                %v244 = vld [vmem:[%s198 + $0xb0] sm:$0xff]
                %245 = vst [vmem:[%s199 + $0xb0] sm:$0xff] %v244
                %v246 = vld [vmem:[%s198 + $0xb8] sm:$0xff]
                %247 = vst [vmem:[%s199 + $0xb8] sm:$0xff] %v246
                %v248 = vld [vmem:[%s198 + $0xc0] sm:$0xff]
                %249 = vst [vmem:[%s199 + $0xc0] sm:$0xff] %v248
                %v250 = vld [vmem:[%s198 + $0xc8] sm:$0xff]
                %251 = vst [vmem:[%s199 + $0xc8] sm:$0xff] %v250
                %v252 = vld [vmem:[%s198 + $0xd0] sm:$0xff]
                %253 = vst [vmem:[%s199 + $0xd0] sm:$0xff] %v252
                %v254 = vld [vmem:[%s198 + $0xd8] sm:$0xff]
                %255 = vst [vmem:[%s199 + $0xd8] sm:$0xff] %v254
                %v256 = vld [vmem:[%s198 + $0xe0] sm:$0xff]
                %257 = vst [vmem:[%s199 + $0xe0] sm:$0xff] %v256
                %v258 = vld [vmem:[%s198 + $0xe8] sm:$0xff]
                %259 = vst [vmem:[%s199 + $0xe8] sm:$0xff] %v258
                %v260 = vld [vmem:[%s198 + $0xf0] sm:$0xff]
                %261 = vst [vmem:[%s199 + $0xf0] sm:$0xff] %v260
                %v262 = vld [vmem:[%s198 + $0xf8] sm:$0xff]
                %263 = vst [vmem:[%s199 + $0xf8] sm:$0xff] %v262
                %v264 = vld [vmem:[%s198 + $0x200] sm:$0xff]
                %265 = vst [vmem:[%s199 + $0x100] sm:$0xff] %v264
                %v266 = vld [vmem:[%s198 + $0x208] sm:$0xff]
                %267 = vst [vmem:[%s199 + $0x108] sm:$0xff] %v266
                %v268 = vld [vmem:[%s198 + $0x210] sm:$0xff]
                %269 = vst [vmem:[%s199 + $0x110] sm:$0xff] %v268
                %v270 = vld [vmem:[%s198 + $0x218] sm:$0xff]
                %271 = vst [vmem:[%s199 + $0x118] sm:$0xff] %v270
                %v272 = vld [vmem:[%s198 + $0x220] sm:$0xff]
                %273 = vst [vmem:[%s199 + $0x120] sm:$0xff] %v272
                %v274 = vld [vmem:[%s198 + $0x228] sm:$0xff]
                %275 = vst [vmem:[%s199 + $0x128] sm:$0xff] %v274
                %v276 = vld [vmem:[%s198 + $0x230] sm:$0xff]
                %277 = vst [vmem:[%s199 + $0x130] sm:$0xff] %v276
                %v278 = vld [vmem:[%s198 + $0x238] sm:$0xff]
                %279 = vst [vmem:[%s199 + $0x138] sm:$0xff] %v278
                %v280 = vld [vmem:[%s198 + $0x240] sm:$0xff]
                %281 = vst [vmem:[%s199 + $0x140] sm:$0xff] %v280
                %v282 = vld [vmem:[%s198 + $0x248] sm:$0xff]
                %283 = vst [vmem:[%s199 + $0x148] sm:$0xff] %v282
                %v284 = vld [vmem:[%s198 + $0x250] sm:$0xff]
                %285 = vst [vmem:[%s199 + $0x150] sm:$0xff] %v284
                %v286 = vld [vmem:[%s198 + $0x258] sm:$0xff]
                %287 = vst [vmem:[%s199 + $0x158] sm:$0xff] %v286
                %v288 = vld [vmem:[%s198 + $0x260] sm:$0xff]
                %289 = vst [vmem:[%s199 + $0x160] sm:$0xff] %v288
                %v290 = vld [vmem:[%s198 + $0x268] sm:$0xff]
                %291 = vst [vmem:[%s199 + $0x168] sm:$0xff] %v290
                %v292 = vld [vmem:[%s198 + $0x270] sm:$0xff]
                %293 = vst [vmem:[%s199 + $0x170] sm:$0xff] %v292
                %v294 = vld [vmem:[%s198 + $0x278] sm:$0xff]
                %295 = vst [vmem:[%s199 + $0x178] sm:$0xff] %v294
                %v296 = vld [vmem:[%s198 + $0x280] sm:$0xff]
                %297 = vst [vmem:[%s199 + $0x180] sm:$0xff] %v296
                %v298 = vld [vmem:[%s198 + $0x288] sm:$0xff]
                %299 = vst [vmem:[%s199 + $0x188] sm:$0xff] %v298
                %v300 = vld [vmem:[%s198 + $0x290] sm:$0xff]
                %301 = vst [vmem:[%s199 + $0x190] sm:$0xff] %v300
                %v302 = vld [vmem:[%s198 + $0x298] sm:$0xff]
                %303 = vst [vmem:[%s199 + $0x198] sm:$0xff] %v302
                %v304 = vld [vmem:[%s198 + $0x2a0] sm:$0xff]
                %305 = vst [vmem:[%s199 + $0x1a0] sm:$0xff] %v304
                %v306 = vld [vmem:[%s198 + $0x2a8] sm:$0xff]
                %307 = vst [vmem:[%s199 + $0x1a8] sm:$0xff] %v306
                %v308 = vld [vmem:[%s198 + $0x2b0] sm:$0xff]
                %309 = vst [vmem:[%s199 + $0x1b0] sm:$0xff] %v308
                %v310 = vld [vmem:[%s198 + $0x2b8] sm:$0xff]
                %311 = vst [vmem:[%s199 + $0x1b8] sm:$0xff] %v310
                %v312 = vld [vmem:[%s198 + $0x2c0] sm:$0xff]
                %313 = vst [vmem:[%s199 + $0x1c0] sm:$0xff] %v312
                %v314 = vld [vmem:[%s198 + $0x2c8] sm:$0xff]
                %315 = vst [vmem:[%s199 + $0x1c8] sm:$0xff] %v314
                %v316 = vld [vmem:[%s198 + $0x2d0] sm:$0xff]
                %317 = vst [vmem:[%s199 + $0x1d0] sm:$0xff] %v316
                %v318 = vld [vmem:[%s198 + $0x2d8] sm:$0xff]
                %319 = vst [vmem:[%s199 + $0x1d8] sm:$0xff] %v318
                %v320 = vld [vmem:[%s198 + $0x2e0] sm:$0xff]
                %321 = vst [vmem:[%s199 + $0x1e0] sm:$0xff] %v320
                %v322 = vld [vmem:[%s198 + $0x2e8] sm:$0xff]
                %323 = vst [vmem:[%s199 + $0x1e8] sm:$0xff] %v322
                %v324 = vld [vmem:[%s198 + $0x2f0] sm:$0xff]
                %325 = vst [vmem:[%s199 + $0x1f0] sm:$0xff] %v324
                %v326 = vld [vmem:[%s198 + $0x2f8] sm:$0xff]
                %327 = vst [vmem:[%s199 + $0x1f8] sm:$0xff] %v326
              $region45: #{network_forward.1} parent=39 // loop_footer
                %s197 = sadd.s32 1, %s193
              $region46: #{network_forward.1} parent=39 // loop_footer_branch
                %192 = sbr.rel target = $region42
              $region47: #{network_forward.1} parent=39 // loop_exit
                _
            $region40: #{network_forward.1} parent=35 // pred_fallthru
              _
            // Predicated region
            $region48: #{network_forward.1} parent=35 // pred_check
              _
            $region49: #{network_forward.1} parent=35 // pred_check_branch
              %329 = sbr.rel target = $region51
            $region50: #{network_forward.1} parent=35 // pred_region
              _
            $region51: #{network_forward.1} parent=35 // pred_fallthru
              _
          $region36: #{network_forward.1} parent=31 // pred_fallthru
            _
          %330 = vnop
        $region32: #{network_forward.1} parent=27 // pred_fallthru
          _
      $region28: #{network_forward.1} parent=5 // pred_fallthru
        _
      %p331 = scmp.le.s32.totalorder 1, %s15
      %p332 = scmp.lt.s32.totalorder %s15, 3
      %p333 = pnand %p331, %p332
      %p334 = pneg %p333
      // Predicated region
      $region52: #{network_forward.1} parent=5 // pred_check
        _
      $region53: #{network_forward.1} parent=5 // pred_check_branch
        %336 = sbr.rel (%p333) target = $region55
      $region54: #{network_forward.1} parent=5 // pred_region
        %s337 = ssub.s32 %s15, 1
        %s338 = sand.u32 %s28, 1
        %s339 = sand.u32 %s28, 1
        %s340 = smul.addr %s339, 512
        %s341 = scalar_lea.vmem [#allocation2], %s340
        // Predicated region
        $region56: #{network_forward.1} parent=54 // pred_check
          %p342 = pneg %p41
        $region57: #{network_forward.1} parent=54 // pred_check_branch
          %344 = sbr.rel (%p342) target = $region59
        $region58: #{network_forward.1} parent=54 // pred_region
          _
        $region59: #{network_forward.1} parent=54 // pred_fallthru
          _
        // Predicated region
        $region60: #{network_forward.1} parent=54 // pred_check
          %p345 = pneg %p62
        $region61: #{network_forward.1} parent=54 // pred_check_branch
          %347 = sbr.rel (%p345) target = $region63
        $region62: #{network_forward.1} parent=54 // pred_region
          %348 = dma.done [#allocation4], 256
        $region63: #{network_forward.1} parent=54 // pred_fallthru
          _
        // Predicated region
        $region64: #{network_forward.1} parent=54 // pred_check
          %p349 = pneg %p83
        $region65: #{network_forward.1} parent=54 // pred_check_branch
          %351 = sbr.rel (%p349) target = $region67
        $region66: #{network_forward.1} parent=54 // pred_region
          %352 = dma.done [#allocation7], 256
        $region67: #{network_forward.1} parent=54 // pred_fallthru
          _
        %s353 = sand.u32 %s28, 1
        %s354 = sand.u32 %s28, 1
        %s355 = smul.addr %s354, 512
        %s356 = scalar_lea.vmem [#allocation2], %s355
        %p357 = pneg %p41
        %p358 = pneg %p38
        %p359 = pneg %p62
        %p360 = pneg %p59
        %p361 = pneg %p83
        %p362 = pneg %p80
        %p363 = pneg %p104
        %p364 = pneg %p101
        %p365 = pneg %p130
        %p366 = pneg %p127
        %s367 = sand.u32 %s117, 1
        %s368 = scalar_lea.sflag [#allocation5], %s367
        %s369 = sand.u32 %s117, 1
        %s370 = smul.addr %s369, 32
        %s371 = scalar_lea.vmem [#allocation8], %s370
        %s372 = smul.u32 32, %s20
        %s373 = smul.u32 32, %s20
        %v374 = vld [vmem:[#allocation3] sm:$0xff]
        %v375 = vld [vmem:[#allocation3 + $0x8] sm:$0xff]
        %v376 = vld [vmem:[%s341] sm:$0xff]
        %v377 = vld [vmem:[%s341 + $0x8] sm:$0xff]
        %v378 = vld [vmem:[%s341 + $0x10] sm:$0xff]
        %v379 = vld [vmem:[%s341 + $0x18] sm:$0xff]
        %v380 = vld [vmem:[%s341 + $0x20] sm:$0xff]
        %v381 = vld [vmem:[%s341 + $0x28] sm:$0xff]
        %v382 = vld [vmem:[%s341 + $0x30] sm:$0xff]
        %v383 = vld [vmem:[%s341 + $0x38] sm:$0xff]
        %v384 = vld [vmem:[%s341 + $0x40] sm:$0xff]
        %v385 = vld [vmem:[%s341 + $0x48] sm:$0xff]
        %v386 = vld [vmem:[%s341 + $0x50] sm:$0xff]
        %v387 = vld [vmem:[%s341 + $0x58] sm:$0xff]
        %v388 = vld [vmem:[%s341 + $0x60] sm:$0xff]
        %v389 = vld [vmem:[%s341 + $0x68] sm:$0xff]
        %v390 = vld [vmem:[%s341 + $0x70] sm:$0xff]
        %v391 = vld [vmem:[%s341 + $0x78] sm:$0xff]
        %v392 = vld [vmem:[%s341 + $0x80] sm:$0xff]
        %v393 = vld [vmem:[%s341 + $0x88] sm:$0xff]
        %v394 = vld [vmem:[%s341 + $0x90] sm:$0xff]
        %v395 = vld [vmem:[%s341 + $0x98] sm:$0xff]
        %v396 = vld [vmem:[%s341 + $0xa0] sm:$0xff]
        %v397 = vld [vmem:[%s341 + $0xa8] sm:$0xff]
        %v398 = vld [vmem:[%s341 + $0xb0] sm:$0xff]
        %v399 = vld [vmem:[%s341 + $0xb8] sm:$0xff]
        %v400 = vld [vmem:[%s341 + $0xc0] sm:$0xff]
        %v401 = vld [vmem:[%s341 + $0xc8] sm:$0xff]
        %v402 = vld [vmem:[%s341 + $0xd0] sm:$0xff]
        %v403 = vld [vmem:[%s341 + $0xd8] sm:$0xff]
        %v404 = vld [vmem:[%s341 + $0xe0] sm:$0xff]
        %v405 = vld [vmem:[%s341 + $0xe8] sm:$0xff]
        %v406 = vld [vmem:[%s341 + $0xf0] sm:$0xff]
        %v407 = vld [vmem:[%s341 + $0xf8] sm:$0xff]
        %v408 = vld [vmem:[%s341 + $0x100] sm:$0xff]
        %v409 = vld [vmem:[%s341 + $0x108] sm:$0xff]
        %v410 = vld [vmem:[%s341 + $0x110] sm:$0xff]
        %v411 = vld [vmem:[%s341 + $0x118] sm:$0xff]
        %v412 = vld [vmem:[%s341 + $0x120] sm:$0xff]
        %v413 = vld [vmem:[%s341 + $0x128] sm:$0xff]
        %v414 = vld [vmem:[%s341 + $0x130] sm:$0xff]
        %v415 = vld [vmem:[%s341 + $0x138] sm:$0xff]
        %v416 = vld [vmem:[%s341 + $0x140] sm:$0xff]
        %v417 = vld [vmem:[%s341 + $0x148] sm:$0xff]
        %v418 = vld [vmem:[%s341 + $0x150] sm:$0xff]
        %v419 = vld [vmem:[%s341 + $0x158] sm:$0xff]
        %v420 = vld [vmem:[%s341 + $0x160] sm:$0xff]
        %v421 = vld [vmem:[%s341 + $0x168] sm:$0xff]
        %v422 = vld [vmem:[%s341 + $0x170] sm:$0xff]
        %v423 = vld [vmem:[%s341 + $0x178] sm:$0xff]
        %v424 = vld [vmem:[%s341 + $0x180] sm:$0xff]
        %v425 = vld [vmem:[%s341 + $0x188] sm:$0xff]
        %v426 = vld [vmem:[%s341 + $0x190] sm:$0xff]
        %v427 = vld [vmem:[%s341 + $0x198] sm:$0xff]
        %v428 = vld [vmem:[%s341 + $0x1a0] sm:$0xff]
        %v429 = vld [vmem:[%s341 + $0x1a8] sm:$0xff]
        %v430 = vld [vmem:[%s341 + $0x1b0] sm:$0xff]
        %v431 = vld [vmem:[%s341 + $0x1b8] sm:$0xff]
        %v432 = vld [vmem:[%s341 + $0x1c0] sm:$0xff]
        %v433 = vld [vmem:[%s341 + $0x1c8] sm:$0xff]
        %v434 = vld [vmem:[%s341 + $0x1d0] sm:$0xff]
        %v435 = vld [vmem:[%s341 + $0x1d8] sm:$0xff]
        %v436 = vld [vmem:[%s341 + $0x1e0] sm:$0xff]
        %v437 = vld [vmem:[%s341 + $0x1e8] sm:$0xff]
        %v438 = vld [vmem:[%s341 + $0x1f0] sm:$0xff]
        %v439 = vld [vmem:[%s341 + $0x1f8] sm:$0xff]
        %vm440 = vcmask 130048
        %v442 = vsel %vm440, %v374, 0
        %v445 = vsel %vm440, %v375, 0
        %447 = vmatprep.subr.mxu0 %v377
        %448 = vmatpush1.msra.mxu0 %v376
        %449 = vmatprep.subr.mxu0 %v409
        %450 = vmatpush1.msra.mxu0 %v408
        %451 = vmatprep.subr.mxu0 0.0
        %452 = vmatpush1.msra.mxu0 0.0
        %453 = vmatprep.subr.mxu0 0.0
        %454 = vmatpush1.msra.mxu0 0.0
        %455 = vmatprep.subr.mxu0 0.0
        %456 = vmatpush1.msra.mxu0 0.0
        %457 = vmatprep.subr.mxu0 0.0
        %458 = vmatpush1.msra.mxu0 0.0
        %459 = vmatprep.subr.mxu0 0.0
        %460 = vmatpush1.msra.mxu0 0.0
        %461 = vmatprep.subr.mxu0 0.0
        %462 = vmatpush1.msra.mxu0 0.0
        %463 = vmatprep.subr.mxu0 0.0
        %464 = vmatpush1.msra.mxu0 0.0
        %465 = vmatprep.subr.mxu0 0.0
        %466 = vmatpush1.msra.mxu0 0.0
        %467 = vmatprep.subr.mxu0 0.0
        %468 = vmatpush1.msra.mxu0 0.0
        %469 = vmatprep.subr.mxu0 0.0
        %470 = vmatpush1.msra.mxu0 0.0
        %471 = vmatprep.subr.mxu0 0.0
        %472 = vmatpush1.msra.mxu0 0.0
        %473 = vmatprep.subr.mxu0 0.0
        %474 = vmatpush1.msra.mxu0 0.0
        %475 = vmatprep.subr.mxu0 0.0
        %476 = vmatpush1.msra.mxu0 0.0
        %477 = vmatprep.subr.mxu0 0.0
        %478 = vmatpush1.msra.mxu0 0.0
        %479 = vmatprep.subr.mxu0 0.0
        %480 = vmatpush1.msra.mxu0 0.0
        %481 = vmatprep.subr.mxu0 0.0
        %482 = vmatpush1.msra.mxu0 0.0
        %483 = vmatprep.subr.mxu0 0.0
        %484 = vmatpush1.msra.mxu0 0.0
        %485 = vmatprep.subr.mxu0 0.0
        %486 = vmatpush1.msra.mxu0 0.0
        %487 = vmatprep.subr.mxu0 0.0
        %488 = vmatpush1.msra.mxu0 0.0
        %489 = vmatprep.subr.mxu0 0.0
        %490 = vmatpush1.msra.mxu0 0.0
        %491 = vmatprep.subr.mxu0 0.0
        %492 = vmatpush1.msra.mxu0 0.0
        %493 = vmatprep.subr.mxu0 0.0
        %494 = vmatpush1.msra.mxu0 0.0
        %495 = vmatprep.subr.mxu0 0.0
        %496 = vmatpush1.msra.mxu0 0.0
        %497 = vmatprep.subr.mxu0 0.0
        %498 = vmatpush1.msra.mxu0 0.0
        %499 = vmatprep.subr.mxu0 0.0
        %500 = vmatpush1.msra.mxu0 0.0
        %501 = vmatprep.subr.mxu0 0.0
        %502 = vmatpush1.msra.mxu0 0.0
        %503 = vmatprep.subr.mxu0 0.0
        %504 = vmatpush1.msra.mxu0 0.0
        %505 = vmatprep.subr.mxu0 0.0
        %506 = vmatpush1.msra.mxu0 0.0
        %507 = vmatprep.subr.mxu0 0.0
        %508 = vmatpush1.msra.mxu0 0.0
        %509 = vmatprep.subr.mxu0 0.0
        %510 = vmatpush1.msra.mxu0 0.0
        %511 = vmatprep.mubr.f32.mxu0 0.0
        %512 = vmatmul.mubr.f32.gmra.mrb[0].mxu0 %v442
        %v513 = vpop.f32.mrb[0].mxu0
        %v514 = vadd.f32 0.0, %v513
        %v515 = vpop.f32.mrb[0].mxu0
        %v516 = vadd.f32 0.0, %v515
        %517 = vmatprep.mubr.f32.mxu0 0.0
        %518 = vmatmul.mubr.f32.gmra.mrb[0].mxu0 %v445
        %v519 = vpop.f32.mrb[0].mxu0
        %v520 = vadd.f32 0.0, %v519
        %v521 = vpop.f32.mrb[0].mxu0
        %v522 = vadd.f32 0.0, %v521
        %523 = vdwg.mxu0
        %524 = vmatprep.subr.mxu0 %v379
        %525 = vmatpush1.msra.mxu0 %v378
        %526 = vmatprep.subr.mxu0 %v411
        %527 = vmatpush1.msra.mxu0 %v410
        %528 = vmatprep.subr.mxu0 0.0
        %529 = vmatpush1.msra.mxu0 0.0
        %530 = vmatprep.subr.mxu0 0.0
        %531 = vmatpush1.msra.mxu0 0.0
        %532 = vmatprep.subr.mxu0 0.0
        %533 = vmatpush1.msra.mxu0 0.0
        %534 = vmatprep.subr.mxu0 0.0
        %535 = vmatpush1.msra.mxu0 0.0
        %536 = vmatprep.subr.mxu0 0.0
        %537 = vmatpush1.msra.mxu0 0.0
        %538 = vmatprep.subr.mxu0 0.0
        %539 = vmatpush1.msra.mxu0 0.0
        %540 = vmatprep.subr.mxu0 0.0
        %541 = vmatpush1.msra.mxu0 0.0
        %542 = vmatprep.subr.mxu0 0.0
        %543 = vmatpush1.msra.mxu0 0.0
        %544 = vmatprep.subr.mxu0 0.0
        %545 = vmatpush1.msra.mxu0 0.0
        %546 = vmatprep.subr.mxu0 0.0
        %547 = vmatpush1.msra.mxu0 0.0
        %548 = vmatprep.subr.mxu0 0.0
        %549 = vmatpush1.msra.mxu0 0.0
        %550 = vmatprep.subr.mxu0 0.0
        %551 = vmatpush1.msra.mxu0 0.0
        %552 = vmatprep.subr.mxu0 0.0
        %553 = vmatpush1.msra.mxu0 0.0
        %554 = vmatprep.subr.mxu0 0.0
        %555 = vmatpush1.msra.mxu0 0.0
        %556 = vmatprep.subr.mxu0 0.0
        %557 = vmatpush1.msra.mxu0 0.0
        %558 = vmatprep.subr.mxu0 0.0
        %559 = vmatpush1.msra.mxu0 0.0
        %560 = vmatprep.subr.mxu0 0.0
        %561 = vmatpush1.msra.mxu0 0.0
        %562 = vmatprep.subr.mxu0 0.0
        %563 = vmatpush1.msra.mxu0 0.0
        %564 = vmatprep.subr.mxu0 0.0
        %565 = vmatpush1.msra.mxu0 0.0
        %566 = vmatprep.subr.mxu0 0.0
        %567 = vmatpush1.msra.mxu0 0.0
        %568 = vmatprep.subr.mxu0 0.0
        %569 = vmatpush1.msra.mxu0 0.0
        %570 = vmatprep.subr.mxu0 0.0
        %571 = vmatpush1.msra.mxu0 0.0
        %572 = vmatprep.subr.mxu0 0.0
        %573 = vmatpush1.msra.mxu0 0.0
        %574 = vmatprep.subr.mxu0 0.0
        %575 = vmatpush1.msra.mxu0 0.0
        %576 = vmatprep.subr.mxu0 0.0
        %577 = vmatpush1.msra.mxu0 0.0
        %578 = vmatprep.subr.mxu0 0.0
        %579 = vmatpush1.msra.mxu0 0.0
        %580 = vmatprep.subr.mxu0 0.0
        %581 = vmatpush1.msra.mxu0 0.0
        %582 = vmatprep.subr.mxu0 0.0
        %583 = vmatpush1.msra.mxu0 0.0
        %584 = vmatprep.subr.mxu0 0.0
        %585 = vmatpush1.msra.mxu0 0.0
        %586 = vmatprep.subr.mxu0 0.0
        %587 = vmatpush1.msra.mxu0 0.0
        %588 = vmatprep.mubr.f32.mxu0 0.0
        %589 = vmatmul.mubr.f32.gmra.mrb[0].mxu0 %v442
        %v590 = vpop.f32.mrb[0].mxu0
        %v591 = vadd.f32 0.0, %v590
        %v592 = vpop.f32.mrb[0].mxu0
        %v593 = vadd.f32 0.0, %v592
        %594 = vmatprep.mubr.f32.mxu0 0.0
        %595 = vmatmul.mubr.f32.gmra.mrb[0].mxu0 %v445
        %v596 = vpop.f32.mrb[0].mxu0
        %v597 = vadd.f32 0.0, %v596
        %v598 = vpop.f32.mrb[0].mxu0
        %v599 = vadd.f32 0.0, %v598
        %600 = vdwg.mxu0
        %601 = vmatprep.subr.mxu0 %v381
        %602 = vmatpush1.msra.mxu0 %v380
        %603 = vmatprep.subr.mxu0 %v413
        %604 = vmatpush1.msra.mxu0 %v412
        %605 = vmatprep.subr.mxu0 0.0
        %606 = vmatpush1.msra.mxu0 0.0
        %607 = vmatprep.subr.mxu0 0.0
        %608 = vmatpush1.msra.mxu0 0.0
        %609 = vmatprep.subr.mxu0 0.0
        %610 = vmatpush1.msra.mxu0 0.0
        %611 = vmatprep.subr.mxu0 0.0
        %612 = vmatpush1.msra.mxu0 0.0
        %613 = vmatprep.subr.mxu0 0.0
        %614 = vmatpush1.msra.mxu0 0.0
        %615 = vmatprep.subr.mxu0 0.0
        %616 = vmatpush1.msra.mxu0 0.0
        %617 = vmatprep.subr.mxu0 0.0
        %618 = vmatpush1.msra.mxu0 0.0
        %619 = vmatprep.subr.mxu0 0.0
        %620 = vmatpush1.msra.mxu0 0.0
        %621 = vmatprep.subr.mxu0 0.0
        %622 = vmatpush1.msra.mxu0 0.0
        %623 = vmatprep.subr.mxu0 0.0
        %624 = vmatpush1.msra.mxu0 0.0
        %625 = vmatprep.subr.mxu0 0.0
        %626 = vmatpush1.msra.mxu0 0.0
        %627 = vmatprep.subr.mxu0 0.0
        %628 = vmatpush1.msra.mxu0 0.0
        %629 = vmatprep.subr.mxu0 0.0
        %630 = vmatpush1.msra.mxu0 0.0
        %631 = vmatprep.subr.mxu0 0.0
        %632 = vmatpush1.msra.mxu0 0.0
        %633 = vmatprep.subr.mxu0 0.0
        %634 = vmatpush1.msra.mxu0 0.0
        %635 = vmatprep.subr.mxu0 0.0
        %636 = vmatpush1.msra.mxu0 0.0
        %637 = vmatprep.subr.mxu0 0.0
        %638 = vmatpush1.msra.mxu0 0.0
        %639 = vmatprep.subr.mxu0 0.0
        %640 = vmatpush1.msra.mxu0 0.0
        %641 = vmatprep.subr.mxu0 0.0
        %642 = vmatpush1.msra.mxu0 0.0
        %643 = vmatprep.subr.mxu0 0.0
        %644 = vmatpush1.msra.mxu0 0.0
        %645 = vmatprep.subr.mxu0 0.0
        %646 = vmatpush1.msra.mxu0 0.0
        %647 = vmatprep.subr.mxu0 0.0
        %648 = vmatpush1.msra.mxu0 0.0
        %649 = vmatprep.subr.mxu0 0.0
        %650 = vmatpush1.msra.mxu0 0.0
        %651 = vmatprep.subr.mxu0 0.0
        %652 = vmatpush1.msra.mxu0 0.0
        %653 = vmatprep.subr.mxu0 0.0
        %654 = vmatpush1.msra.mxu0 0.0
        %655 = vmatprep.subr.mxu0 0.0
        %656 = vmatpush1.msra.mxu0 0.0
        %657 = vmatprep.subr.mxu0 0.0
        %658 = vmatpush1.msra.mxu0 0.0
        %659 = vmatprep.subr.mxu0 0.0
        %660 = vmatpush1.msra.mxu0 0.0
        %661 = vmatprep.subr.mxu0 0.0
        %662 = vmatpush1.msra.mxu0 0.0
        %663 = vmatprep.subr.mxu0 0.0
        %664 = vmatpush1.msra.mxu0 0.0
        %665 = vmatprep.mubr.f32.mxu0 0.0
        %666 = vmatmul.mubr.f32.gmra.mrb[0].mxu0 %v442
        %v667 = vpop.f32.mrb[0].mxu0
        %v668 = vadd.f32 0.0, %v667
        %v669 = vpop.f32.mrb[0].mxu0
        %v670 = vadd.f32 0.0, %v669
        %671 = vmatprep.mubr.f32.mxu0 0.0
        %672 = vmatmul.mubr.f32.gmra.mrb[0].mxu0 %v445
        %v673 = vpop.f32.mrb[0].mxu0
        %v674 = vadd.f32 0.0, %v673
        %v675 = vpop.f32.mrb[0].mxu0
        %v676 = vadd.f32 0.0, %v675
        %677 = vdwg.mxu0
        %678 = vmatprep.subr.mxu0 %v383
        %679 = vmatpush1.msra.mxu0 %v382
        %680 = vmatprep.subr.mxu0 %v415
        %681 = vmatpush1.msra.mxu0 %v414
        %682 = vmatprep.subr.mxu0 0.0
        %683 = vmatpush1.msra.mxu0 0.0
        %684 = vmatprep.subr.mxu0 0.0
        %685 = vmatpush1.msra.mxu0 0.0
        %686 = vmatprep.subr.mxu0 0.0
        %687 = vmatpush1.msra.mxu0 0.0
        %688 = vmatprep.subr.mxu0 0.0
        %689 = vmatpush1.msra.mxu0 0.0
        %690 = vmatprep.subr.mxu0 0.0
        %691 = vmatpush1.msra.mxu0 0.0
        %692 = vmatprep.subr.mxu0 0.0
        %693 = vmatpush1.msra.mxu0 0.0
        %694 = vmatprep.subr.mxu0 0.0
        %695 = vmatpush1.msra.mxu0 0.0
        %696 = vmatprep.subr.mxu0 0.0
        %697 = vmatpush1.msra.mxu0 0.0
        %698 = vmatprep.subr.mxu0 0.0
        %699 = vmatpush1.msra.mxu0 0.0
        %700 = vmatprep.subr.mxu0 0.0
        %701 = vmatpush1.msra.mxu0 0.0
        %702 = vmatprep.subr.mxu0 0.0
        %703 = vmatpush1.msra.mxu0 0.0
        %704 = vmatprep.subr.mxu0 0.0
        %705 = vmatpush1.msra.mxu0 0.0
        %706 = vmatprep.subr.mxu0 0.0
        %707 = vmatpush1.msra.mxu0 0.0
        %708 = vmatprep.subr.mxu0 0.0
        %709 = vmatpush1.msra.mxu0 0.0
        %710 = vmatprep.subr.mxu0 0.0
        %711 = vmatpush1.msra.mxu0 0.0
        %712 = vmatprep.subr.mxu0 0.0
        %713 = vmatpush1.msra.mxu0 0.0
        %714 = vmatprep.subr.mxu0 0.0
        %715 = vmatpush1.msra.mxu0 0.0
        %716 = vmatprep.subr.mxu0 0.0
        %717 = vmatpush1.msra.mxu0 0.0
        %718 = vmatprep.subr.mxu0 0.0
        %719 = vmatpush1.msra.mxu0 0.0
        %720 = vmatprep.subr.mxu0 0.0
        %721 = vmatpush1.msra.mxu0 0.0
        %722 = vmatprep.subr.mxu0 0.0
        %723 = vmatpush1.msra.mxu0 0.0
        %724 = vmatprep.subr.mxu0 0.0
        %725 = vmatpush1.msra.mxu0 0.0
        %726 = vmatprep.subr.mxu0 0.0
        %727 = vmatpush1.msra.mxu0 0.0
        %728 = vmatprep.subr.mxu0 0.0
        %729 = vmatpush1.msra.mxu0 0.0
        %730 = vmatprep.subr.mxu0 0.0
        %731 = vmatpush1.msra.mxu0 0.0
        %732 = vmatprep.subr.mxu0 0.0
        %733 = vmatpush1.msra.mxu0 0.0
        %734 = vmatprep.subr.mxu0 0.0
        %735 = vmatpush1.msra.mxu0 0.0
        %736 = vmatprep.subr.mxu0 0.0
        %737 = vmatpush1.msra.mxu0 0.0
        %738 = vmatprep.subr.mxu0 0.0
        %739 = vmatpush1.msra.mxu0 0.0
        %740 = vmatprep.subr.mxu0 0.0
        %741 = vmatpush1.msra.mxu0 0.0
        %742 = vmatprep.mubr.f32.mxu0 0.0
        %743 = vmatmul.mubr.f32.gmra.mrb[0].mxu0 %v442
        %v744 = vpop.f32.mrb[0].mxu0
        %v745 = vadd.f32 0.0, %v744
        %v746 = vpop.f32.mrb[0].mxu0
        %v747 = vadd.f32 0.0, %v746
        %748 = vmatprep.mubr.f32.mxu0 0.0
        %749 = vmatmul.mubr.f32.gmra.mrb[0].mxu0 %v445
        %v750 = vpop.f32.mrb[0].mxu0
        %v751 = vadd.f32 0.0, %v750
        %v752 = vpop.f32.mrb[0].mxu0
        %v753 = vadd.f32 0.0, %v752
        %754 = vdwg.mxu0
        %755 = vmatprep.subr.mxu0 %v385
        %756 = vmatpush1.msra.mxu0 %v384
        %757 = vmatprep.subr.mxu0 %v417
        %758 = vmatpush1.msra.mxu0 %v416
        %759 = vmatprep.subr.mxu0 0.0
        %760 = vmatpush1.msra.mxu0 0.0
        %761 = vmatprep.subr.mxu0 0.0
        %762 = vmatpush1.msra.mxu0 0.0
        %763 = vmatprep.subr.mxu0 0.0
        %764 = vmatpush1.msra.mxu0 0.0
        %765 = vmatprep.subr.mxu0 0.0
        %766 = vmatpush1.msra.mxu0 0.0
        %767 = vmatprep.subr.mxu0 0.0
        %768 = vmatpush1.msra.mxu0 0.0
        %769 = vmatprep.subr.mxu0 0.0
        %770 = vmatpush1.msra.mxu0 0.0
        %771 = vmatprep.subr.mxu0 0.0
        %772 = vmatpush1.msra.mxu0 0.0
        %773 = vmatprep.subr.mxu0 0.0
        %774 = vmatpush1.msra.mxu0 0.0
        %775 = vmatprep.subr.mxu0 0.0
        %776 = vmatpush1.msra.mxu0 0.0
        %777 = vmatprep.subr.mxu0 0.0
        %778 = vmatpush1.msra.mxu0 0.0
        %779 = vmatprep.subr.mxu0 0.0
        %780 = vmatpush1.msra.mxu0 0.0
        %781 = vmatprep.subr.mxu0 0.0
        %782 = vmatpush1.msra.mxu0 0.0
        %783 = vmatprep.subr.mxu0 0.0
        %784 = vmatpush1.msra.mxu0 0.0
        %785 = vmatprep.subr.mxu0 0.0
        %786 = vmatpush1.msra.mxu0 0.0
        %787 = vmatprep.subr.mxu0 0.0
        %788 = vmatpush1.msra.mxu0 0.0
        %789 = vmatprep.subr.mxu0 0.0
        %790 = vmatpush1.msra.mxu0 0.0
        %791 = vmatprep.subr.mxu0 0.0
        %792 = vmatpush1.msra.mxu0 0.0
        %793 = vmatprep.subr.mxu0 0.0
        %794 = vmatpush1.msra.mxu0 0.0
        %795 = vmatprep.subr.mxu0 0.0
        %796 = vmatpush1.msra.mxu0 0.0
        %797 = vmatprep.subr.mxu0 0.0
        %798 = vmatpush1.msra.mxu0 0.0
        %799 = vmatprep.subr.mxu0 0.0
        %800 = vmatpush1.msra.mxu0 0.0
        %801 = vmatprep.subr.mxu0 0.0
        %802 = vmatpush1.msra.mxu0 0.0
        %803 = vmatprep.subr.mxu0 0.0
        %804 = vmatpush1.msra.mxu0 0.0
        %805 = vmatprep.subr.mxu0 0.0
        %806 = vmatpush1.msra.mxu0 0.0
        %807 = vmatprep.subr.mxu0 0.0
        %808 = vmatpush1.msra.mxu0 0.0
        %809 = vmatprep.subr.mxu0 0.0
        %810 = vmatpush1.msra.mxu0 0.0
        %811 = vmatprep.subr.mxu0 0.0
        %812 = vmatpush1.msra.mxu0 0.0
        %813 = vmatprep.subr.mxu0 0.0
        %814 = vmatpush1.msra.mxu0 0.0
        %815 = vmatprep.subr.mxu0 0.0
        %816 = vmatpush1.msra.mxu0 0.0
        %817 = vmatprep.subr.mxu0 0.0
        %818 = vmatpush1.msra.mxu0 0.0
        %819 = vmatprep.mubr.f32.mxu0 0.0
        %820 = vmatmul.mubr.f32.gmra.mrb[0].mxu0 %v442
        %v821 = vpop.f32.mrb[0].mxu0
        %v822 = vadd.f32 0.0, %v821
        %v823 = vpop.f32.mrb[0].mxu0
        %v824 = vadd.f32 0.0, %v823
        %825 = vmatprep.mubr.f32.mxu0 0.0
        %826 = vmatmul.mubr.f32.gmra.mrb[0].mxu0 %v445
        %v827 = vpop.f32.mrb[0].mxu0
        %v828 = vadd.f32 0.0, %v827
        %v829 = vpop.f32.mrb[0].mxu0
        %v830 = vadd.f32 0.0, %v829
        %831 = vdwg.mxu0
        %832 = vmatprep.subr.mxu0 %v387
        %833 = vmatpush1.msra.mxu0 %v386
        %834 = vmatprep.subr.mxu0 %v419
        %835 = vmatpush1.msra.mxu0 %v418
        %836 = vmatprep.subr.mxu0 0.0
        %837 = vmatpush1.msra.mxu0 0.0
        %838 = vmatprep.subr.mxu0 0.0
        %839 = vmatpush1.msra.mxu0 0.0
        %840 = vmatprep.subr.mxu0 0.0
        %841 = vmatpush1.msra.mxu0 0.0
        %842 = vmatprep.subr.mxu0 0.0
        %843 = vmatpush1.msra.mxu0 0.0
        %844 = vmatprep.subr.mxu0 0.0
        %845 = vmatpush1.msra.mxu0 0.0
        %846 = vmatprep.subr.mxu0 0.0
        %847 = vmatpush1.msra.mxu0 0.0
        %848 = vmatprep.subr.mxu0 0.0
        %849 = vmatpush1.msra.mxu0 0.0
        %850 = vmatprep.subr.mxu0 0.0
        %851 = vmatpush1.msra.mxu0 0.0
        %852 = vmatprep.subr.mxu0 0.0
        %853 = vmatpush1.msra.mxu0 0.0
        %854 = vmatprep.subr.mxu0 0.0
        %855 = vmatpush1.msra.mxu0 0.0
        %856 = vmatprep.subr.mxu0 0.0
        %857 = vmatpush1.msra.mxu0 0.0
        %858 = vmatprep.subr.mxu0 0.0
        %859 = vmatpush1.msra.mxu0 0.0
        %860 = vmatprep.subr.mxu0 0.0
        %861 = vmatpush1.msra.mxu0 0.0
        %862 = vmatprep.subr.mxu0 0.0
        %863 = vmatpush1.msra.mxu0 0.0
        %864 = vmatprep.subr.mxu0 0.0
        %865 = vmatpush1.msra.mxu0 0.0
        %866 = vmatprep.subr.mxu0 0.0
        %867 = vmatpush1.msra.mxu0 0.0
        %868 = vmatprep.subr.mxu0 0.0
        %869 = vmatpush1.msra.mxu0 0.0
        %870 = vmatprep.subr.mxu0 0.0
        %871 = vmatpush1.msra.mxu0 0.0
        %872 = vmatprep.subr.mxu0 0.0
        %873 = vmatpush1.msra.mxu0 0.0
        %874 = vmatprep.subr.mxu0 0.0
        %875 = vmatpush1.msra.mxu0 0.0
        %876 = vmatprep.subr.mxu0 0.0
        %877 = vmatpush1.msra.mxu0 0.0
        %878 = vmatprep.subr.mxu0 0.0
        %879 = vmatpush1.msra.mxu0 0.0
        %880 = vmatprep.subr.mxu0 0.0
        %881 = vmatpush1.msra.mxu0 0.0
        %882 = vmatprep.subr.mxu0 0.0
        %883 = vmatpush1.msra.mxu0 0.0
        %884 = vmatprep.subr.mxu0 0.0
        %885 = vmatpush1.msra.mxu0 0.0
        %886 = vmatprep.subr.mxu0 0.0
        %887 = vmatpush1.msra.mxu0 0.0
        %888 = vmatprep.subr.mxu0 0.0
        %889 = vmatpush1.msra.mxu0 0.0
        %890 = vmatprep.subr.mxu0 0.0
        %891 = vmatpush1.msra.mxu0 0.0
        %892 = vmatprep.subr.mxu0 0.0
        %893 = vmatpush1.msra.mxu0 0.0
        %894 = vmatprep.subr.mxu0 0.0
        %895 = vmatpush1.msra.mxu0 0.0
        %896 = vmatprep.mubr.f32.mxu0 0.0
        %897 = vmatmul.mubr.f32.gmra.mrb[0].mxu0 %v442
        %v898 = vpop.f32.mrb[0].mxu0
        %v899 = vadd.f32 0.0, %v898
        %v900 = vpop.f32.mrb[0].mxu0
        %v901 = vadd.f32 0.0, %v900
        %902 = vmatprep.mubr.f32.mxu0 0.0
        %903 = vmatmul.mubr.f32.gmra.mrb[0].mxu0 %v445
        %v904 = vpop.f32.mrb[0].mxu0
        %v905 = vadd.f32 0.0, %v904
        %v906 = vpop.f32.mrb[0].mxu0
        %v907 = vadd.f32 0.0, %v906
        %908 = vdwg.mxu0
        %909 = vmatprep.subr.mxu0 %v389
        %910 = vmatpush1.msra.mxu0 %v388
        %911 = vmatprep.subr.mxu0 %v421
        %912 = vmatpush1.msra.mxu0 %v420
        %913 = vmatprep.subr.mxu0 0.0
        %914 = vmatpush1.msra.mxu0 0.0
        %915 = vmatprep.subr.mxu0 0.0
        %916 = vmatpush1.msra.mxu0 0.0
        %917 = vmatprep.subr.mxu0 0.0
        %918 = vmatpush1.msra.mxu0 0.0
        %919 = vmatprep.subr.mxu0 0.0
        %920 = vmatpush1.msra.mxu0 0.0
        %921 = vmatprep.subr.mxu0 0.0
        %922 = vmatpush1.msra.mxu0 0.0
        %923 = vmatprep.subr.mxu0 0.0
        %924 = vmatpush1.msra.mxu0 0.0
        %925 = vmatprep.subr.mxu0 0.0
        %926 = vmatpush1.msra.mxu0 0.0
        %927 = vmatprep.subr.mxu0 0.0
        %928 = vmatpush1.msra.mxu0 0.0
        %929 = vmatprep.subr.mxu0 0.0
        %930 = vmatpush1.msra.mxu0 0.0
        %931 = vmatprep.subr.mxu0 0.0
        %932 = vmatpush1.msra.mxu0 0.0
        %933 = vmatprep.subr.mxu0 0.0
        %934 = vmatpush1.msra.mxu0 0.0
        %935 = vmatprep.subr.mxu0 0.0
        %936 = vmatpush1.msra.mxu0 0.0
        %937 = vmatprep.subr.mxu0 0.0
        %938 = vmatpush1.msra.mxu0 0.0
        %939 = vmatprep.subr.mxu0 0.0
        %940 = vmatpush1.msra.mxu0 0.0
        %941 = vmatprep.subr.mxu0 0.0
        %942 = vmatpush1.msra.mxu0 0.0
        %943 = vmatprep.subr.mxu0 0.0
        %944 = vmatpush1.msra.mxu0 0.0
        %945 = vmatprep.subr.mxu0 0.0
        %946 = vmatpush1.msra.mxu0 0.0
        %947 = vmatprep.subr.mxu0 0.0
        %948 = vmatpush1.msra.mxu0 0.0
        %949 = vmatprep.subr.mxu0 0.0
        %950 = vmatpush1.msra.mxu0 0.0
        %951 = vmatprep.subr.mxu0 0.0
        %952 = vmatpush1.msra.mxu0 0.0
        %953 = vmatprep.subr.mxu0 0.0
        %954 = vmatpush1.msra.mxu0 0.0
        %955 = vmatprep.subr.mxu0 0.0
        %956 = vmatpush1.msra.mxu0 0.0
        %957 = vmatprep.subr.mxu0 0.0
        %958 = vmatpush1.msra.mxu0 0.0
        %959 = vmatprep.subr.mxu0 0.0
        %960 = vmatpush1.msra.mxu0 0.0
        %961 = vmatprep.subr.mxu0 0.0
        %962 = vmatpush1.msra.mxu0 0.0
        %963 = vmatprep.subr.mxu0 0.0
        %964 = vmatpush1.msra.mxu0 0.0
        %965 = vmatprep.subr.mxu0 0.0
        %966 = vmatpush1.msra.mxu0 0.0
        %967 = vmatprep.subr.mxu0 0.0
        %968 = vmatpush1.msra.mxu0 0.0
        %969 = vmatprep.subr.mxu0 0.0
        %970 = vmatpush1.msra.mxu0 0.0
        %971 = vmatprep.subr.mxu0 0.0
        %972 = vmatpush1.msra.mxu0 0.0
        %973 = vmatprep.mubr.f32.mxu0 0.0
        %974 = vmatmul.mubr.f32.gmra.mrb[0].mxu0 %v442
        %v975 = vpop.f32.mrb[0].mxu0
        %v976 = vadd.f32 0.0, %v975
        %v977 = vpop.f32.mrb[0].mxu0
        %v978 = vadd.f32 0.0, %v977
        %979 = vmatprep.mubr.f32.mxu0 0.0
        %980 = vmatmul.mubr.f32.gmra.mrb[0].mxu0 %v445
        %v981 = vpop.f32.mrb[0].mxu0
        %v982 = vadd.f32 0.0, %v981
        %v983 = vpop.f32.mrb[0].mxu0
        %v984 = vadd.f32 0.0, %v983
        %985 = vdwg.mxu0
        %986 = vmatprep.subr.mxu0 %v391
        %987 = vmatpush1.msra.mxu0 %v390
        %988 = vmatprep.subr.mxu0 %v423
        %989 = vmatpush1.msra.mxu0 %v422
        %990 = vmatprep.subr.mxu0 0.0
        %991 = vmatpush1.msra.mxu0 0.0
        %992 = vmatprep.subr.mxu0 0.0
        %993 = vmatpush1.msra.mxu0 0.0
        %994 = vmatprep.subr.mxu0 0.0
        %995 = vmatpush1.msra.mxu0 0.0
        %996 = vmatprep.subr.mxu0 0.0
        %997 = vmatpush1.msra.mxu0 0.0
        %998 = vmatprep.subr.mxu0 0.0
        %999 = vmatpush1.msra.mxu0 0.0
        %1000 = vmatprep.subr.mxu0 0.0
        %1001 = vmatpush1.msra.mxu0 0.0
        %1002 = vmatprep.subr.mxu0 0.0
        %1003 = vmatpush1.msra.mxu0 0.0
        %1004 = vmatprep.subr.mxu0 0.0
        %1005 = vmatpush1.msra.mxu0 0.0
        %1006 = vmatprep.subr.mxu0 0.0
        %1007 = vmatpush1.msra.mxu0 0.0
        %1008 = vmatprep.subr.mxu0 0.0
        %1009 = vmatpush1.msra.mxu0 0.0
        %1010 = vmatprep.subr.mxu0 0.0
        %1011 = vmatpush1.msra.mxu0 0.0
        %1012 = vmatprep.subr.mxu0 0.0
        %1013 = vmatpush1.msra.mxu0 0.0
        %1014 = vmatprep.subr.mxu0 0.0
        %1015 = vmatpush1.msra.mxu0 0.0
        %1016 = vmatprep.subr.mxu0 0.0
        %1017 = vmatpush1.msra.mxu0 0.0
        %1018 = vmatprep.subr.mxu0 0.0
        %1019 = vmatpush1.msra.mxu0 0.0
        %1020 = vmatprep.subr.mxu0 0.0
        %1021 = vmatpush1.msra.mxu0 0.0
        %1022 = vmatprep.subr.mxu0 0.0
        %1023 = vmatpush1.msra.mxu0 0.0
        %1024 = vmatprep.subr.mxu0 0.0
        %1025 = vmatpush1.msra.mxu0 0.0
        %1026 = vmatprep.subr.mxu0 0.0
        %1027 = vmatpush1.msra.mxu0 0.0
        %1028 = vmatprep.subr.mxu0 0.0
        %1029 = vmatpush1.msra.mxu0 0.0
        %1030 = vmatprep.subr.mxu0 0.0
        %1031 = vmatpush1.msra.mxu0 0.0
        %1032 = vmatprep.subr.mxu0 0.0
        %1033 = vmatpush1.msra.mxu0 0.0
        %1034 = vmatprep.subr.mxu0 0.0
        %1035 = vmatpush1.msra.mxu0 0.0
        %1036 = vmatprep.subr.mxu0 0.0
        %1037 = vmatpush1.msra.mxu0 0.0
        %1038 = vmatprep.subr.mxu0 0.0
        %1039 = vmatpush1.msra.mxu0 0.0
        %1040 = vmatprep.subr.mxu0 0.0
        %1041 = vmatpush1.msra.mxu0 0.0
        %1042 = vmatprep.subr.mxu0 0.0
        %1043 = vmatpush1.msra.mxu0 0.0
        %1044 = vmatprep.subr.mxu0 0.0
        %1045 = vmatpush1.msra.mxu0 0.0
        %1046 = vmatprep.subr.mxu0 0.0
        %1047 = vmatpush1.msra.mxu0 0.0
        %1048 = vmatprep.subr.mxu0 0.0
        %1049 = vmatpush1.msra.mxu0 0.0
        %1050 = vmatprep.mubr.f32.mxu0 0.0
        %1051 = vmatmul.mubr.f32.gmra.mrb[0].mxu0 %v442
        %v1052 = vpop.f32.mrb[0].mxu0
        %v1053 = vadd.f32 0.0, %v1052
        %v1054 = vpop.f32.mrb[0].mxu0
        %v1055 = vadd.f32 0.0, %v1054
        %1056 = vmatprep.mubr.f32.mxu0 0.0
        %1057 = vmatmul.mubr.f32.gmra.mrb[0].mxu0 %v445
        %v1058 = vpop.f32.mrb[0].mxu0
        %v1059 = vadd.f32 0.0, %v1058
        %v1060 = vpop.f32.mrb[0].mxu0
        %v1061 = vadd.f32 0.0, %v1060
        %1062 = vdwg.mxu0
        %1063 = vmatprep.subr.mxu0 %v393
        %1064 = vmatpush1.msra.mxu0 %v392
        %1065 = vmatprep.subr.mxu0 %v425
        %1066 = vmatpush1.msra.mxu0 %v424
        %1067 = vmatprep.subr.mxu0 0.0
        %1068 = vmatpush1.msra.mxu0 0.0
        %1069 = vmatprep.subr.mxu0 0.0
        %1070 = vmatpush1.msra.mxu0 0.0
        %1071 = vmatprep.subr.mxu0 0.0
        %1072 = vmatpush1.msra.mxu0 0.0
        %1073 = vmatprep.subr.mxu0 0.0
        %1074 = vmatpush1.msra.mxu0 0.0
        %1075 = vmatprep.subr.mxu0 0.0
        %1076 = vmatpush1.msra.mxu0 0.0
        %1077 = vmatprep.subr.mxu0 0.0
        %1078 = vmatpush1.msra.mxu0 0.0
        %1079 = vmatprep.subr.mxu0 0.0
        %1080 = vmatpush1.msra.mxu0 0.0
        %1081 = vmatprep.subr.mxu0 0.0
        %1082 = vmatpush1.msra.mxu0 0.0
        %1083 = vmatprep.subr.mxu0 0.0
        %1084 = vmatpush1.msra.mxu0 0.0
        %1085 = vmatprep.subr.mxu0 0.0
        %1086 = vmatpush1.msra.mxu0 0.0
        %1087 = vmatprep.subr.mxu0 0.0
        %1088 = vmatpush1.msra.mxu0 0.0
        %1089 = vmatprep.subr.mxu0 0.0
        %1090 = vmatpush1.msra.mxu0 0.0
        %1091 = vmatprep.subr.mxu0 0.0
        %1092 = vmatpush1.msra.mxu0 0.0
        %1093 = vmatprep.subr.mxu0 0.0
        %1094 = vmatpush1.msra.mxu0 0.0
        %1095 = vmatprep.subr.mxu0 0.0
        %1096 = vmatpush1.msra.mxu0 0.0
        %1097 = vmatprep.subr.mxu0 0.0
        %1098 = vmatpush1.msra.mxu0 0.0
        %1099 = vmatprep.subr.mxu0 0.0
        %1100 = vmatpush1.msra.mxu0 0.0
        %1101 = vmatprep.subr.mxu0 0.0
        %1102 = vmatpush1.msra.mxu0 0.0
        %1103 = vmatprep.subr.mxu0 0.0
        %1104 = vmatpush1.msra.mxu0 0.0
        %1105 = vmatprep.subr.mxu0 0.0
        %1106 = vmatpush1.msra.mxu0 0.0
        %1107 = vmatprep.subr.mxu0 0.0
        %1108 = vmatpush1.msra.mxu0 0.0
        %1109 = vmatprep.subr.mxu0 0.0
        %1110 = vmatpush1.msra.mxu0 0.0
        %1111 = vmatprep.subr.mxu0 0.0
        %1112 = vmatpush1.msra.mxu0 0.0
        %1113 = vmatprep.subr.mxu0 0.0
        %1114 = vmatpush1.msra.mxu0 0.0
        %1115 = vmatprep.subr.mxu0 0.0
        %1116 = vmatpush1.msra.mxu0 0.0
        %1117 = vmatprep.subr.mxu0 0.0
        %1118 = vmatpush1.msra.mxu0 0.0
        %1119 = vmatprep.subr.mxu0 0.0
        %1120 = vmatpush1.msra.mxu0 0.0
        %1121 = vmatprep.subr.mxu0 0.0
        %1122 = vmatpush1.msra.mxu0 0.0
        %1123 = vmatprep.subr.mxu0 0.0
        %1124 = vmatpush1.msra.mxu0 0.0
        %1125 = vmatprep.subr.mxu0 0.0
        %1126 = vmatpush1.msra.mxu0 0.0
        %1127 = vmatprep.mubr.f32.mxu0 0.0
        %1128 = vmatmul.mubr.f32.gmra.mrb[0].mxu0 %v442
        %v1129 = vpop.f32.mrb[0].mxu0
        %v1130 = vadd.f32 0.0, %v1129
        %v1131 = vpop.f32.mrb[0].mxu0
        %v1132 = vadd.f32 0.0, %v1131
        %1133 = vmatprep.mubr.f32.mxu0 0.0
        %1134 = vmatmul.mubr.f32.gmra.mrb[0].mxu0 %v445
        %v1135 = vpop.f32.mrb[0].mxu0
        %v1136 = vadd.f32 0.0, %v1135
        %v1137 = vpop.f32.mrb[0].mxu0
        %v1138 = vadd.f32 0.0, %v1137
        %1139 = vdwg.mxu0
        %1140 = vmatprep.subr.mxu0 %v395
        %1141 = vmatpush1.msra.mxu0 %v394
        %1142 = vmatprep.subr.mxu0 %v427
        %1143 = vmatpush1.msra.mxu0 %v426
        %1144 = vmatprep.subr.mxu0 0.0
        %1145 = vmatpush1.msra.mxu0 0.0
        %1146 = vmatprep.subr.mxu0 0.0
        %1147 = vmatpush1.msra.mxu0 0.0
        %1148 = vmatprep.subr.mxu0 0.0
        %1149 = vmatpush1.msra.mxu0 0.0
        %1150 = vmatprep.subr.mxu0 0.0
        %1151 = vmatpush1.msra.mxu0 0.0
        %1152 = vmatprep.subr.mxu0 0.0
        %1153 = vmatpush1.msra.mxu0 0.0
        %1154 = vmatprep.subr.mxu0 0.0
        %1155 = vmatpush1.msra.mxu0 0.0
        %1156 = vmatprep.subr.mxu0 0.0
        %1157 = vmatpush1.msra.mxu0 0.0
        %1158 = vmatprep.subr.mxu0 0.0
        %1159 = vmatpush1.msra.mxu0 0.0
        %1160 = vmatprep.subr.mxu0 0.0
        %1161 = vmatpush1.msra.mxu0 0.0
        %1162 = vmatprep.subr.mxu0 0.0
        %1163 = vmatpush1.msra.mxu0 0.0
        %1164 = vmatprep.subr.mxu0 0.0
        %1165 = vmatpush1.msra.mxu0 0.0
        %1166 = vmatprep.subr.mxu0 0.0
        %1167 = vmatpush1.msra.mxu0 0.0
        %1168 = vmatprep.subr.mxu0 0.0
        %1169 = vmatpush1.msra.mxu0 0.0
        %1170 = vmatprep.subr.mxu0 0.0
        %1171 = vmatpush1.msra.mxu0 0.0
        %1172 = vmatprep.subr.mxu0 0.0
        %1173 = vmatpush1.msra.mxu0 0.0
        %1174 = vmatprep.subr.mxu0 0.0
        %1175 = vmatpush1.msra.mxu0 0.0
        %1176 = vmatprep.subr.mxu0 0.0
        %1177 = vmatpush1.msra.mxu0 0.0
        %1178 = vmatprep.subr.mxu0 0.0
        %1179 = vmatpush1.msra.mxu0 0.0
        %1180 = vmatprep.subr.mxu0 0.0
        %1181 = vmatpush1.msra.mxu0 0.0
        %1182 = vmatprep.subr.mxu0 0.0
        %1183 = vmatpush1.msra.mxu0 0.0
        %1184 = vmatprep.subr.mxu0 0.0
        %1185 = vmatpush1.msra.mxu0 0.0
        %1186 = vmatprep.subr.mxu0 0.0
        %1187 = vmatpush1.msra.mxu0 0.0
        %1188 = vmatprep.subr.mxu0 0.0
        %1189 = vmatpush1.msra.mxu0 0.0
        %1190 = vmatprep.subr.mxu0 0.0
        %1191 = vmatpush1.msra.mxu0 0.0
        %1192 = vmatprep.subr.mxu0 0.0
        %1193 = vmatpush1.msra.mxu0 0.0
        %1194 = vmatprep.subr.mxu0 0.0
        %1195 = vmatpush1.msra.mxu0 0.0
        %1196 = vmatprep.subr.mxu0 0.0
        %1197 = vmatpush1.msra.mxu0 0.0
        %1198 = vmatprep.subr.mxu0 0.0
        %1199 = vmatpush1.msra.mxu0 0.0
        %1200 = vmatprep.subr.mxu0 0.0
        %1201 = vmatpush1.msra.mxu0 0.0
        %1202 = vmatprep.subr.mxu0 0.0
        %1203 = vmatpush1.msra.mxu0 0.0
        %1204 = vmatprep.mubr.f32.mxu0 0.0
        %1205 = vmatmul.mubr.f32.gmra.mrb[0].mxu0 %v442
        %v1206 = vpop.f32.mrb[0].mxu0
        %v1207 = vadd.f32 0.0, %v1206
        %v1208 = vpop.f32.mrb[0].mxu0
        %v1209 = vadd.f32 0.0, %v1208
        %1210 = vmatprep.mubr.f32.mxu0 0.0
        %1211 = vmatmul.mubr.f32.gmra.mrb[0].mxu0 %v445
        %v1212 = vpop.f32.mrb[0].mxu0
        %v1213 = vadd.f32 0.0, %v1212
        %v1214 = vpop.f32.mrb[0].mxu0
        %v1215 = vadd.f32 0.0, %v1214
        %1216 = vdwg.mxu0
        %1217 = vmatprep.subr.mxu0 %v397
        %1218 = vmatpush1.msra.mxu0 %v396
        %1219 = vmatprep.subr.mxu0 %v429
        %1220 = vmatpush1.msra.mxu0 %v428
        %1221 = vmatprep.subr.mxu0 0.0
        %1222 = vmatpush1.msra.mxu0 0.0
        %1223 = vmatprep.subr.mxu0 0.0
        %1224 = vmatpush1.msra.mxu0 0.0
        %1225 = vmatprep.subr.mxu0 0.0
        %1226 = vmatpush1.msra.mxu0 0.0
        %1227 = vmatprep.subr.mxu0 0.0
        %1228 = vmatpush1.msra.mxu0 0.0
        %1229 = vmatprep.subr.mxu0 0.0
        %1230 = vmatpush1.msra.mxu0 0.0
        %1231 = vmatprep.subr.mxu0 0.0
        %1232 = vmatpush1.msra.mxu0 0.0
        %1233 = vmatprep.subr.mxu0 0.0
        %1234 = vmatpush1.msra.mxu0 0.0
        %1235 = vmatprep.subr.mxu0 0.0
        %1236 = vmatpush1.msra.mxu0 0.0
        %1237 = vmatprep.subr.mxu0 0.0
        %1238 = vmatpush1.msra.mxu0 0.0
        %1239 = vmatprep.subr.mxu0 0.0
        %1240 = vmatpush1.msra.mxu0 0.0
        %1241 = vmatprep.subr.mxu0 0.0
        %1242 = vmatpush1.msra.mxu0 0.0
        %1243 = vmatprep.subr.mxu0 0.0
        %1244 = vmatpush1.msra.mxu0 0.0
        %1245 = vmatprep.subr.mxu0 0.0
        %1246 = vmatpush1.msra.mxu0 0.0
        %1247 = vmatprep.subr.mxu0 0.0
        %1248 = vmatpush1.msra.mxu0 0.0
        %1249 = vmatprep.subr.mxu0 0.0
        %1250 = vmatpush1.msra.mxu0 0.0
        %1251 = vmatprep.subr.mxu0 0.0
        %1252 = vmatpush1.msra.mxu0 0.0
        %1253 = vmatprep.subr.mxu0 0.0
        %1254 = vmatpush1.msra.mxu0 0.0
        %1255 = vmatprep.subr.mxu0 0.0
        %1256 = vmatpush1.msra.mxu0 0.0
        %1257 = vmatprep.subr.mxu0 0.0
        %1258 = vmatpush1.msra.mxu0 0.0
        %1259 = vmatprep.subr.mxu0 0.0
        %1260 = vmatpush1.msra.mxu0 0.0
        %1261 = vmatprep.subr.mxu0 0.0
        %1262 = vmatpush1.msra.mxu0 0.0
        %1263 = vmatprep.subr.mxu0 0.0
        %1264 = vmatpush1.msra.mxu0 0.0
        %1265 = vmatprep.subr.mxu0 0.0
        %1266 = vmatpush1.msra.mxu0 0.0
        %1267 = vmatprep.subr.mxu0 0.0
        %1268 = vmatpush1.msra.mxu0 0.0
        %1269 = vmatprep.subr.mxu0 0.0
        %1270 = vmatpush1.msra.mxu0 0.0
        %1271 = vmatprep.subr.mxu0 0.0
        %1272 = vmatpush1.msra.mxu0 0.0
        %1273 = vmatprep.subr.mxu0 0.0
        %1274 = vmatpush1.msra.mxu0 0.0
        %1275 = vmatprep.subr.mxu0 0.0
        %1276 = vmatpush1.msra.mxu0 0.0
        %1277 = vmatprep.subr.mxu0 0.0
        %1278 = vmatpush1.msra.mxu0 0.0
        %1279 = vmatprep.subr.mxu0 0.0
        %1280 = vmatpush1.msra.mxu0 0.0
        %1281 = vmatprep.mubr.f32.mxu0 0.0
        %1282 = vmatmul.mubr.f32.gmra.mrb[0].mxu0 %v442
        %v1283 = vpop.f32.mrb[0].mxu0
        %v1284 = vadd.f32 0.0, %v1283
        %v1285 = vpop.f32.mrb[0].mxu0
        %v1286 = vadd.f32 0.0, %v1285
        %1287 = vmatprep.mubr.f32.mxu0 0.0
        %1288 = vmatmul.mubr.f32.gmra.mrb[0].mxu0 %v445
        %v1289 = vpop.f32.mrb[0].mxu0
        %v1290 = vadd.f32 0.0, %v1289
        %v1291 = vpop.f32.mrb[0].mxu0
        %v1292 = vadd.f32 0.0, %v1291
        %1293 = vdwg.mxu0
        %1294 = vmatprep.subr.mxu0 %v399
        %1295 = vmatpush1.msra.mxu0 %v398
        %1296 = vmatprep.subr.mxu0 %v431
        %1297 = vmatpush1.msra.mxu0 %v430
        %1298 = vmatprep.subr.mxu0 0.0
        %1299 = vmatpush1.msra.mxu0 0.0
        %1300 = vmatprep.subr.mxu0 0.0
        %1301 = vmatpush1.msra.mxu0 0.0
        %1302 = vmatprep.subr.mxu0 0.0
        %1303 = vmatpush1.msra.mxu0 0.0
        %1304 = vmatprep.subr.mxu0 0.0
        %1305 = vmatpush1.msra.mxu0 0.0
        %1306 = vmatprep.subr.mxu0 0.0
        %1307 = vmatpush1.msra.mxu0 0.0
        %1308 = vmatprep.subr.mxu0 0.0
        %1309 = vmatpush1.msra.mxu0 0.0
        %1310 = vmatprep.subr.mxu0 0.0
        %1311 = vmatpush1.msra.mxu0 0.0
        %1312 = vmatprep.subr.mxu0 0.0
        %1313 = vmatpush1.msra.mxu0 0.0
        %1314 = vmatprep.subr.mxu0 0.0
        %1315 = vmatpush1.msra.mxu0 0.0
        %1316 = vmatprep.subr.mxu0 0.0
        %1317 = vmatpush1.msra.mxu0 0.0
        %1318 = vmatprep.subr.mxu0 0.0
        %1319 = vmatpush1.msra.mxu0 0.0
        %1320 = vmatprep.subr.mxu0 0.0
        %1321 = vmatpush1.msra.mxu0 0.0
        %1322 = vmatprep.subr.mxu0 0.0
        %1323 = vmatpush1.msra.mxu0 0.0
        %1324 = vmatprep.subr.mxu0 0.0
        %1325 = vmatpush1.msra.mxu0 0.0
        %1326 = vmatprep.subr.mxu0 0.0
        %1327 = vmatpush1.msra.mxu0 0.0
        %1328 = vmatprep.subr.mxu0 0.0
        %1329 = vmatpush1.msra.mxu0 0.0
        %1330 = vmatprep.subr.mxu0 0.0
        %1331 = vmatpush1.msra.mxu0 0.0
        %1332 = vmatprep.subr.mxu0 0.0
        %1333 = vmatpush1.msra.mxu0 0.0
        %1334 = vmatprep.subr.mxu0 0.0
        %1335 = vmatpush1.msra.mxu0 0.0
        %1336 = vmatprep.subr.mxu0 0.0
        %1337 = vmatpush1.msra.mxu0 0.0
        %1338 = vmatprep.subr.mxu0 0.0
        %1339 = vmatpush1.msra.mxu0 0.0
        %1340 = vmatprep.subr.mxu0 0.0
        %1341 = vmatpush1.msra.mxu0 0.0
        %1342 = vmatprep.subr.mxu0 0.0
        %1343 = vmatpush1.msra.mxu0 0.0
        %1344 = vmatprep.subr.mxu0 0.0
        %1345 = vmatpush1.msra.mxu0 0.0
        %1346 = vmatprep.subr.mxu0 0.0
        %1347 = vmatpush1.msra.mxu0 0.0
        %1348 = vmatprep.subr.mxu0 0.0
        %1349 = vmatpush1.msra.mxu0 0.0
        %1350 = vmatprep.subr.mxu0 0.0
        %1351 = vmatpush1.msra.mxu0 0.0
        %1352 = vmatprep.subr.mxu0 0.0
        %1353 = vmatpush1.msra.mxu0 0.0
        %1354 = vmatprep.subr.mxu0 0.0
        %1355 = vmatpush1.msra.mxu0 0.0
        %1356 = vmatprep.subr.mxu0 0.0
        %1357 = vmatpush1.msra.mxu0 0.0
        %1358 = vmatprep.mubr.f32.mxu0 0.0
        %1359 = vmatmul.mubr.f32.gmra.mrb[0].mxu0 %v442
        %v1360 = vpop.f32.mrb[0].mxu0
        %v1361 = vadd.f32 0.0, %v1360
        %v1362 = vpop.f32.mrb[0].mxu0
        %v1363 = vadd.f32 0.0, %v1362
        %1364 = vmatprep.mubr.f32.mxu0 0.0
        %1365 = vmatmul.mubr.f32.gmra.mrb[0].mxu0 %v445
        %v1366 = vpop.f32.mrb[0].mxu0
        %v1367 = vadd.f32 0.0, %v1366
        %v1368 = vpop.f32.mrb[0].mxu0
        %v1369 = vadd.f32 0.0, %v1368
        %1370 = vdwg.mxu0
        %1371 = vmatprep.subr.mxu0 %v401
        %1372 = vmatpush1.msra.mxu0 %v400
        %1373 = vmatprep.subr.mxu0 %v433
        %1374 = vmatpush1.msra.mxu0 %v432
        %1375 = vmatprep.subr.mxu0 0.0
        %1376 = vmatpush1.msra.mxu0 0.0
        %1377 = vmatprep.subr.mxu0 0.0
        %1378 = vmatpush1.msra.mxu0 0.0
        %1379 = vmatprep.subr.mxu0 0.0
        %1380 = vmatpush1.msra.mxu0 0.0
        %1381 = vmatprep.subr.mxu0 0.0
        %1382 = vmatpush1.msra.mxu0 0.0
        %1383 = vmatprep.subr.mxu0 0.0
        %1384 = vmatpush1.msra.mxu0 0.0
        %1385 = vmatprep.subr.mxu0 0.0
        %1386 = vmatpush1.msra.mxu0 0.0
        %1387 = vmatprep.subr.mxu0 0.0
        %1388 = vmatpush1.msra.mxu0 0.0
        %1389 = vmatprep.subr.mxu0 0.0
        %1390 = vmatpush1.msra.mxu0 0.0
        %1391 = vmatprep.subr.mxu0 0.0
        %1392 = vmatpush1.msra.mxu0 0.0
        %1393 = vmatprep.subr.mxu0 0.0
        %1394 = vmatpush1.msra.mxu0 0.0
        %1395 = vmatprep.subr.mxu0 0.0
        %1396 = vmatpush1.msra.mxu0 0.0
        %1397 = vmatprep.subr.mxu0 0.0
        %1398 = vmatpush1.msra.mxu0 0.0
        %1399 = vmatprep.subr.mxu0 0.0
        %1400 = vmatpush1.msra.mxu0 0.0
        %1401 = vmatprep.subr.mxu0 0.0
        %1402 = vmatpush1.msra.mxu0 0.0
        %1403 = vmatprep.subr.mxu0 0.0
        %1404 = vmatpush1.msra.mxu0 0.0
        %1405 = vmatprep.subr.mxu0 0.0
        %1406 = vmatpush1.msra.mxu0 0.0
        %1407 = vmatprep.subr.mxu0 0.0
        %1408 = vmatpush1.msra.mxu0 0.0
        %1409 = vmatprep.subr.mxu0 0.0
        %1410 = vmatpush1.msra.mxu0 0.0
        %1411 = vmatprep.subr.mxu0 0.0
        %1412 = vmatpush1.msra.mxu0 0.0
        %1413 = vmatprep.subr.mxu0 0.0
        %1414 = vmatpush1.msra.mxu0 0.0
        %1415 = vmatprep.subr.mxu0 0.0
        %1416 = vmatpush1.msra.mxu0 0.0
        %1417 = vmatprep.subr.mxu0 0.0
        %1418 = vmatpush1.msra.mxu0 0.0
        %1419 = vmatprep.subr.mxu0 0.0
        %1420 = vmatpush1.msra.mxu0 0.0
        %1421 = vmatprep.subr.mxu0 0.0
        %1422 = vmatpush1.msra.mxu0 0.0
        %1423 = vmatprep.subr.mxu0 0.0
        %1424 = vmatpush1.msra.mxu0 0.0
        %1425 = vmatprep.subr.mxu0 0.0
        %1426 = vmatpush1.msra.mxu0 0.0
        %1427 = vmatprep.subr.mxu0 0.0
        %1428 = vmatpush1.msra.mxu0 0.0
        %1429 = vmatprep.subr.mxu0 0.0
        %1430 = vmatpush1.msra.mxu0 0.0
        %1431 = vmatprep.subr.mxu0 0.0
        %1432 = vmatpush1.msra.mxu0 0.0
        %1433 = vmatprep.subr.mxu0 0.0
        %1434 = vmatpush1.msra.mxu0 0.0
        %1435 = vmatprep.mubr.f32.mxu0 0.0
        %1436 = vmatmul.mubr.f32.gmra.mrb[0].mxu0 %v442
        %v1437 = vpop.f32.mrb[0].mxu0
        %v1438 = vadd.f32 0.0, %v1437
        %v1439 = vpop.f32.mrb[0].mxu0
        %v1440 = vadd.f32 0.0, %v1439
        %1441 = vmatprep.mubr.f32.mxu0 0.0
        %1442 = vmatmul.mubr.f32.gmra.mrb[0].mxu0 %v445
        %v1443 = vpop.f32.mrb[0].mxu0
        %v1444 = vadd.f32 0.0, %v1443
        %v1445 = vpop.f32.mrb[0].mxu0
        %v1446 = vadd.f32 0.0, %v1445
        %1447 = vdwg.mxu0
        %1448 = vmatprep.subr.mxu0 %v403
        %1449 = vmatpush1.msra.mxu0 %v402
        %1450 = vmatprep.subr.mxu0 %v435
        %1451 = vmatpush1.msra.mxu0 %v434
        %1452 = vmatprep.subr.mxu0 0.0
        %1453 = vmatpush1.msra.mxu0 0.0
        %1454 = vmatprep.subr.mxu0 0.0
        %1455 = vmatpush1.msra.mxu0 0.0
        %1456 = vmatprep.subr.mxu0 0.0
        %1457 = vmatpush1.msra.mxu0 0.0
        %1458 = vmatprep.subr.mxu0 0.0
        %1459 = vmatpush1.msra.mxu0 0.0
        %1460 = vmatprep.subr.mxu0 0.0
        %1461 = vmatpush1.msra.mxu0 0.0
        %1462 = vmatprep.subr.mxu0 0.0
        %1463 = vmatpush1.msra.mxu0 0.0
        %1464 = vmatprep.subr.mxu0 0.0
        %1465 = vmatpush1.msra.mxu0 0.0
        %1466 = vmatprep.subr.mxu0 0.0
        %1467 = vmatpush1.msra.mxu0 0.0
        %1468 = vmatprep.subr.mxu0 0.0
        %1469 = vmatpush1.msra.mxu0 0.0
        %1470 = vmatprep.subr.mxu0 0.0
        %1471 = vmatpush1.msra.mxu0 0.0
        %1472 = vmatprep.subr.mxu0 0.0
        %1473 = vmatpush1.msra.mxu0 0.0
        %1474 = vmatprep.subr.mxu0 0.0
        %1475 = vmatpush1.msra.mxu0 0.0
        %1476 = vmatprep.subr.mxu0 0.0
        %1477 = vmatpush1.msra.mxu0 0.0
        %1478 = vmatprep.subr.mxu0 0.0
        %1479 = vmatpush1.msra.mxu0 0.0
        %1480 = vmatprep.subr.mxu0 0.0
        %1481 = vmatpush1.msra.mxu0 0.0
        %1482 = vmatprep.subr.mxu0 0.0
        %1483 = vmatpush1.msra.mxu0 0.0
        %1484 = vmatprep.subr.mxu0 0.0
        %1485 = vmatpush1.msra.mxu0 0.0
        %1486 = vmatprep.subr.mxu0 0.0
        %1487 = vmatpush1.msra.mxu0 0.0
        %1488 = vmatprep.subr.mxu0 0.0
        %1489 = vmatpush1.msra.mxu0 0.0
        %1490 = vmatprep.subr.mxu0 0.0
        %1491 = vmatpush1.msra.mxu0 0.0
        %1492 = vmatprep.subr.mxu0 0.0
        %1493 = vmatpush1.msra.mxu0 0.0
        %1494 = vmatprep.subr.mxu0 0.0
        %1495 = vmatpush1.msra.mxu0 0.0
        %1496 = vmatprep.subr.mxu0 0.0
        %1497 = vmatpush1.msra.mxu0 0.0
        %1498 = vmatprep.subr.mxu0 0.0
        %1499 = vmatpush1.msra.mxu0 0.0
        %1500 = vmatprep.subr.mxu0 0.0
        %1501 = vmatpush1.msra.mxu0 0.0
        %1502 = vmatprep.subr.mxu0 0.0
        %1503 = vmatpush1.msra.mxu0 0.0
        %1504 = vmatprep.subr.mxu0 0.0
        %1505 = vmatpush1.msra.mxu0 0.0
        %1506 = vmatprep.subr.mxu0 0.0
        %1507 = vmatpush1.msra.mxu0 0.0
        %1508 = vmatprep.subr.mxu0 0.0
        %1509 = vmatpush1.msra.mxu0 0.0
        %1510 = vmatprep.subr.mxu0 0.0
        %1511 = vmatpush1.msra.mxu0 0.0
        %1512 = vmatprep.mubr.f32.mxu0 0.0
        %1513 = vmatmul.mubr.f32.gmra.mrb[0].mxu0 %v442
        %v1514 = vpop.f32.mrb[0].mxu0
        %v1515 = vadd.f32 0.0, %v1514
        %v1516 = vpop.f32.mrb[0].mxu0
        %v1517 = vadd.f32 0.0, %v1516
        %1518 = vmatprep.mubr.f32.mxu0 0.0
        %1519 = vmatmul.mubr.f32.gmra.mrb[0].mxu0 %v445
        %v1520 = vpop.f32.mrb[0].mxu0
        %v1521 = vadd.f32 0.0, %v1520
        %v1522 = vpop.f32.mrb[0].mxu0
        %v1523 = vadd.f32 0.0, %v1522
        %1524 = vdwg.mxu0
        %1525 = vmatprep.subr.mxu0 %v405
        %1526 = vmatpush1.msra.mxu0 %v404
        %1527 = vmatprep.subr.mxu0 %v437
        %1528 = vmatpush1.msra.mxu0 %v436
        %1529 = vmatprep.subr.mxu0 0.0
        %1530 = vmatpush1.msra.mxu0 0.0
        %1531 = vmatprep.subr.mxu0 0.0
        %1532 = vmatpush1.msra.mxu0 0.0
        %1533 = vmatprep.subr.mxu0 0.0
        %1534 = vmatpush1.msra.mxu0 0.0
        %1535 = vmatprep.subr.mxu0 0.0
        %1536 = vmatpush1.msra.mxu0 0.0
        %1537 = vmatprep.subr.mxu0 0.0
        %1538 = vmatpush1.msra.mxu0 0.0
        %1539 = vmatprep.subr.mxu0 0.0
        %1540 = vmatpush1.msra.mxu0 0.0
        %1541 = vmatprep.subr.mxu0 0.0
        %1542 = vmatpush1.msra.mxu0 0.0
        %1543 = vmatprep.subr.mxu0 0.0
        %1544 = vmatpush1.msra.mxu0 0.0
        %1545 = vmatprep.subr.mxu0 0.0
        %1546 = vmatpush1.msra.mxu0 0.0
        %1547 = vmatprep.subr.mxu0 0.0
        %1548 = vmatpush1.msra.mxu0 0.0
        %1549 = vmatprep.subr.mxu0 0.0
        %1550 = vmatpush1.msra.mxu0 0.0
        %1551 = vmatprep.subr.mxu0 0.0
        %1552 = vmatpush1.msra.mxu0 0.0
        %1553 = vmatprep.subr.mxu0 0.0
        %1554 = vmatpush1.msra.mxu0 0.0
        %1555 = vmatprep.subr.mxu0 0.0
        %1556 = vmatpush1.msra.mxu0 0.0
        %1557 = vmatprep.subr.mxu0 0.0
        %1558 = vmatpush1.msra.mxu0 0.0
        %1559 = vmatprep.subr.mxu0 0.0
        %1560 = vmatpush1.msra.mxu0 0.0
        %1561 = vmatprep.subr.mxu0 0.0
        %1562 = vmatpush1.msra.mxu0 0.0
        %1563 = vmatprep.subr.mxu0 0.0
        %1564 = vmatpush1.msra.mxu0 0.0
        %1565 = vmatprep.subr.mxu0 0.0
        %1566 = vmatpush1.msra.mxu0 0.0
        %1567 = vmatprep.subr.mxu0 0.0
        %1568 = vmatpush1.msra.mxu0 0.0
        %1569 = vmatprep.subr.mxu0 0.0
        %1570 = vmatpush1.msra.mxu0 0.0
        %1571 = vmatprep.subr.mxu0 0.0
        %1572 = vmatpush1.msra.mxu0 0.0
        %1573 = vmatprep.subr.mxu0 0.0
        %1574 = vmatpush1.msra.mxu0 0.0
        %1575 = vmatprep.subr.mxu0 0.0
        %1576 = vmatpush1.msra.mxu0 0.0
        %1577 = vmatprep.subr.mxu0 0.0
        %1578 = vmatpush1.msra.mxu0 0.0
        %1579 = vmatprep.subr.mxu0 0.0
        %1580 = vmatpush1.msra.mxu0 0.0
        %1581 = vmatprep.subr.mxu0 0.0
        %1582 = vmatpush1.msra.mxu0 0.0
        %1583 = vmatprep.subr.mxu0 0.0
        %1584 = vmatpush1.msra.mxu0 0.0
        %1585 = vmatprep.subr.mxu0 0.0
        %1586 = vmatpush1.msra.mxu0 0.0
        %1587 = vmatprep.subr.mxu0 0.0
        %1588 = vmatpush1.msra.mxu0 0.0
        %1589 = vmatprep.mubr.f32.mxu0 0.0
        %1590 = vmatmul.mubr.f32.gmra.mrb[0].mxu0 %v442
        %v1591 = vpop.f32.mrb[0].mxu0
        %v1592 = vadd.f32 0.0, %v1591
        %v1593 = vpop.f32.mrb[0].mxu0
        %v1594 = vadd.f32 0.0, %v1593
        %1595 = vmatprep.mubr.f32.mxu0 0.0
        %1596 = vmatmul.mubr.f32.gmra.mrb[0].mxu0 %v445
        %v1597 = vpop.f32.mrb[0].mxu0
        %v1598 = vadd.f32 0.0, %v1597
        %v1599 = vpop.f32.mrb[0].mxu0
        %v1600 = vadd.f32 0.0, %v1599
        %1601 = vdwg.mxu0
        %1602 = vmatprep.subr.mxu0 %v407
        %1603 = vmatpush1.msra.mxu0 %v406
        %1604 = vmatprep.subr.mxu0 %v439
        %1605 = vmatpush1.msra.mxu0 %v438
        %1606 = vmatprep.subr.mxu0 0.0
        %1607 = vmatpush1.msra.mxu0 0.0
        %1608 = vmatprep.subr.mxu0 0.0
        %1609 = vmatpush1.msra.mxu0 0.0
        %1610 = vmatprep.subr.mxu0 0.0
        %1611 = vmatpush1.msra.mxu0 0.0
        %1612 = vmatprep.subr.mxu0 0.0
        %1613 = vmatpush1.msra.mxu0 0.0
        %1614 = vmatprep.subr.mxu0 0.0
        %1615 = vmatpush1.msra.mxu0 0.0
        %1616 = vmatprep.subr.mxu0 0.0
        %1617 = vmatpush1.msra.mxu0 0.0
        %1618 = vmatprep.subr.mxu0 0.0
        %1619 = vmatpush1.msra.mxu0 0.0
        %1620 = vmatprep.subr.mxu0 0.0
        %1621 = vmatpush1.msra.mxu0 0.0
        %1622 = vmatprep.subr.mxu0 0.0
        %1623 = vmatpush1.msra.mxu0 0.0
        %1624 = vmatprep.subr.mxu0 0.0
        %1625 = vmatpush1.msra.mxu0 0.0
        %1626 = vmatprep.subr.mxu0 0.0
        %1627 = vmatpush1.msra.mxu0 0.0
        %1628 = vmatprep.subr.mxu0 0.0
        %1629 = vmatpush1.msra.mxu0 0.0
        %1630 = vmatprep.subr.mxu0 0.0
        %1631 = vmatpush1.msra.mxu0 0.0
        %1632 = vmatprep.subr.mxu0 0.0
        %1633 = vmatpush1.msra.mxu0 0.0
        %1634 = vmatprep.subr.mxu0 0.0
        %1635 = vmatpush1.msra.mxu0 0.0
        %1636 = vmatprep.subr.mxu0 0.0
        %1637 = vmatpush1.msra.mxu0 0.0
        %1638 = vmatprep.subr.mxu0 0.0
        %1639 = vmatpush1.msra.mxu0 0.0
        %1640 = vmatprep.subr.mxu0 0.0
        %1641 = vmatpush1.msra.mxu0 0.0
        %1642 = vmatprep.subr.mxu0 0.0
        %1643 = vmatpush1.msra.mxu0 0.0
        %1644 = vmatprep.subr.mxu0 0.0
        %1645 = vmatpush1.msra.mxu0 0.0
        %1646 = vmatprep.subr.mxu0 0.0
        %1647 = vmatpush1.msra.mxu0 0.0
        %1648 = vmatprep.subr.mxu0 0.0
        %1649 = vmatpush1.msra.mxu0 0.0
        %1650 = vmatprep.subr.mxu0 0.0
        %1651 = vmatpush1.msra.mxu0 0.0
        %1652 = vmatprep.subr.mxu0 0.0
        %1653 = vmatpush1.msra.mxu0 0.0
        %1654 = vmatprep.subr.mxu0 0.0
        %1655 = vmatpush1.msra.mxu0 0.0
        %1656 = vmatprep.subr.mxu0 0.0
        %1657 = vmatpush1.msra.mxu0 0.0
        %1658 = vmatprep.subr.mxu0 0.0
        %1659 = vmatpush1.msra.mxu0 0.0
        %1660 = vmatprep.subr.mxu0 0.0
        %1661 = vmatpush1.msra.mxu0 0.0
        %1662 = vmatprep.subr.mxu0 0.0
        %1663 = vmatpush1.msra.mxu0 0.0
        %1664 = vmatprep.subr.mxu0 0.0
        %1665 = vmatpush1.msra.mxu0 0.0
        %1666 = vmatprep.mubr.f32.mxu0 0.0
        %1667 = vmatmul.mubr.f32.gmra.mrb[0].mxu0 %v442
        %v1668 = vpop.f32.mrb[0].mxu0
        %v1669 = vadd.f32 0.0, %v1668
        %v1670 = vpop.f32.mrb[0].mxu0
        %v1671 = vadd.f32 0.0, %v1670
        %1672 = vmatprep.mubr.f32.mxu0 0.0
        %1673 = vmatmul.mubr.f32.gmra.mrb[0].mxu0 %v445
        %v1674 = vpop.f32.mrb[0].mxu0
        %v1675 = vadd.f32 0.0, %v1674
        %v1676 = vpop.f32.mrb[0].mxu0
        %v1677 = vadd.f32 0.0, %v1676
        %1678 = vdwg.mxu0
        %v1679 = vmax.f32 %v514, 0.0
        %v1680 = vmax.f32 %v516, 0.0
        %v1681 = vmax.f32 %v591, 0.0
        %v1682 = vmax.f32 %v593, 0.0
        %v1683 = vmax.f32 %v668, 0.0
        %v1684 = vmax.f32 %v670, 0.0
        %v1685 = vmax.f32 %v745, 0.0
        %v1686 = vmax.f32 %v747, 0.0
        %v1687 = vmax.f32 %v822, 0.0
        %v1688 = vmax.f32 %v824, 0.0
        %v1689 = vmax.f32 %v899, 0.0
        %v1690 = vmax.f32 %v901, 0.0
        %v1691 = vmax.f32 %v976, 0.0
        %v1692 = vmax.f32 %v978, 0.0
        %v1693 = vmax.f32 %v1053, 0.0
        %v1694 = vmax.f32 %v1055, 0.0
        %v1695 = vmax.f32 %v1130, 0.0
        %v1696 = vmax.f32 %v1132, 0.0
        %v1697 = vmax.f32 %v1207, 0.0
        %v1698 = vmax.f32 %v1209, 0.0
        %v1699 = vmax.f32 %v1284, 0.0
        %v1700 = vmax.f32 %v1286, 0.0
        %v1701 = vmax.f32 %v1361, 0.0
        %v1702 = vmax.f32 %v1363, 0.0
        %v1703 = vmax.f32 %v1438, 0.0
        %v1704 = vmax.f32 %v1440, 0.0
        %v1705 = vmax.f32 %v1515, 0.0
        %v1706 = vmax.f32 %v1517, 0.0
        %v1707 = vmax.f32 %v1592, 0.0
        %v1708 = vmax.f32 %v1594, 0.0
        %v1709 = vmax.f32 %v1669, 0.0
        %v1710 = vmax.f32 %v1671, 0.0
        %v1711 = vmax.f32 %v520, 0.0
        %v1712 = vmax.f32 %v522, 0.0
        %v1713 = vmax.f32 %v597, 0.0
        %v1714 = vmax.f32 %v599, 0.0
        %v1715 = vmax.f32 %v674, 0.0
        %v1716 = vmax.f32 %v676, 0.0
        %v1717 = vmax.f32 %v751, 0.0
        %v1718 = vmax.f32 %v753, 0.0
        %v1719 = vmax.f32 %v828, 0.0
        %v1720 = vmax.f32 %v830, 0.0
        %v1721 = vmax.f32 %v905, 0.0
        %v1722 = vmax.f32 %v907, 0.0
        %v1723 = vmax.f32 %v982, 0.0
        %v1724 = vmax.f32 %v984, 0.0
        %v1725 = vmax.f32 %v1059, 0.0
        %v1726 = vmax.f32 %v1061, 0.0
        %v1727 = vmax.f32 %v1136, 0.0
        %v1728 = vmax.f32 %v1138, 0.0
        %v1729 = vmax.f32 %v1213, 0.0
        %v1730 = vmax.f32 %v1215, 0.0
        %v1731 = vmax.f32 %v1290, 0.0
        %v1732 = vmax.f32 %v1292, 0.0
        %v1733 = vmax.f32 %v1367, 0.0
        %v1734 = vmax.f32 %v1369, 0.0
        %v1735 = vmax.f32 %v1444, 0.0
        %v1736 = vmax.f32 %v1446, 0.0
        %v1737 = vmax.f32 %v1521, 0.0
        %v1738 = vmax.f32 %v1523, 0.0
        %v1739 = vmax.f32 %v1598, 0.0
        %v1740 = vmax.f32 %v1600, 0.0
        %v1741 = vmax.f32 %v1675, 0.0
        %v1742 = vmax.f32 %v1677, 0.0
        %v1743 = vld [vmem:[#allocation6] sm:$0xff]
        %v1744 = vld [vmem:[#allocation6 + $0x8] sm:$0xff]
        %v1746 = vsel %vm440, %v1743, 0
        %v1749 = vsel %vm440, %v1744, 0
        %1751 = vmatprep.subr.mxu0 %v1680
        %1752 = vmatpush1.msra.mxu0 %v1679
        %1753 = vmatprep.subr.mxu0 %v1712
        %1754 = vmatpush1.msra.mxu0 %v1711
        %1755 = vmatprep.subr.mxu0 0.0
        %1756 = vmatpush1.msra.mxu0 0.0
        %1757 = vmatprep.subr.mxu0 0.0
        %1758 = vmatpush1.msra.mxu0 0.0
        %1759 = vmatprep.subr.mxu0 0.0
        %1760 = vmatpush1.msra.mxu0 0.0
        %1761 = vmatprep.subr.mxu0 0.0
        %1762 = vmatpush1.msra.mxu0 0.0
        %1763 = vmatprep.subr.mxu0 0.0
        %1764 = vmatpush1.msra.mxu0 0.0
        %1765 = vmatprep.subr.mxu0 0.0
        %1766 = vmatpush1.msra.mxu0 0.0
        %1767 = vmatprep.subr.mxu0 0.0
        %1768 = vmatpush1.msra.mxu0 0.0
        %1769 = vmatprep.subr.mxu0 0.0
        %1770 = vmatpush1.msra.mxu0 0.0
        %1771 = vmatprep.subr.mxu0 0.0
        %1772 = vmatpush1.msra.mxu0 0.0
        %1773 = vmatprep.subr.mxu0 0.0
        %1774 = vmatpush1.msra.mxu0 0.0
        %1775 = vmatprep.subr.mxu0 0.0
        %1776 = vmatpush1.msra.mxu0 0.0
        %1777 = vmatprep.subr.mxu0 0.0
        %1778 = vmatpush1.msra.mxu0 0.0
        %1779 = vmatprep.subr.mxu0 0.0
        %1780 = vmatpush1.msra.mxu0 0.0
        %1781 = vmatprep.subr.mxu0 0.0
        %1782 = vmatpush1.msra.mxu0 0.0
        %1783 = vmatprep.subr.mxu0 0.0
        %1784 = vmatpush1.msra.mxu0 0.0
        %1785 = vmatprep.subr.mxu0 0.0
        %1786 = vmatpush1.msra.mxu0 0.0
        %1787 = vmatprep.subr.mxu0 0.0
        %1788 = vmatpush1.msra.mxu0 0.0
        %1789 = vmatprep.subr.mxu0 0.0
        %1790 = vmatpush1.msra.mxu0 0.0
        %1791 = vmatprep.subr.mxu0 0.0
        %1792 = vmatpush1.msra.mxu0 0.0
        %1793 = vmatprep.subr.mxu0 0.0
        %1794 = vmatpush1.msra.mxu0 0.0
        %1795 = vmatprep.subr.mxu0 0.0
        %1796 = vmatpush1.msra.mxu0 0.0
        %1797 = vmatprep.subr.mxu0 0.0
        %1798 = vmatpush1.msra.mxu0 0.0
        %1799 = vmatprep.subr.mxu0 0.0
        %1800 = vmatpush1.msra.mxu0 0.0
        %1801 = vmatprep.subr.mxu0 0.0
        %1802 = vmatpush1.msra.mxu0 0.0
        %1803 = vmatprep.subr.mxu0 0.0
        %1804 = vmatpush1.msra.mxu0 0.0
        %1805 = vmatprep.subr.mxu0 0.0
        %1806 = vmatpush1.msra.mxu0 0.0
        %1807 = vmatprep.subr.mxu0 0.0
        %1808 = vmatpush1.msra.mxu0 0.0
        %1809 = vmatprep.subr.mxu0 0.0
        %1810 = vmatpush1.msra.mxu0 0.0
        %1811 = vmatprep.subr.mxu0 0.0
        %1812 = vmatpush1.msra.mxu0 0.0
        %1813 = vmatprep.subr.mxu0 0.0
        %1814 = vmatpush1.msra.mxu0 0.0
        %1815 = vmatprep.mubr.f32.mxu0 0.0
        %1816 = vmatmul.mubr.f32.gmra.mrb[0].mxu0 %v1746
        %v1817 = vpop.f32.mrb[0].mxu0
        %v1818 = vadd.f32 0.0, %v1817
        %v1819 = vpop.f32.mrb[0].mxu0
        %v1820 = vadd.f32 0.0, %v1819
        %1821 = vmatprep.mubr.f32.mxu0 0.0
        %1822 = vmatmul.mubr.f32.gmra.mrb[0].mxu0 %v1749
        %v1823 = vpop.f32.mrb[0].mxu0
        %v1824 = vadd.f32 0.0, %v1823
        %v1825 = vpop.f32.mrb[0].mxu0
        %v1826 = vadd.f32 0.0, %v1825
        %1827 = vdwg.mxu0
        %1828 = vmatprep.subr.mxu0 %v1682
        %1829 = vmatpush1.msra.mxu0 %v1681
        %1830 = vmatprep.subr.mxu0 %v1714
        %1831 = vmatpush1.msra.mxu0 %v1713
        %1832 = vmatprep.subr.mxu0 0.0
        %1833 = vmatpush1.msra.mxu0 0.0
        %1834 = vmatprep.subr.mxu0 0.0
        %1835 = vmatpush1.msra.mxu0 0.0
        %1836 = vmatprep.subr.mxu0 0.0
        %1837 = vmatpush1.msra.mxu0 0.0
        %1838 = vmatprep.subr.mxu0 0.0
        %1839 = vmatpush1.msra.mxu0 0.0
        %1840 = vmatprep.subr.mxu0 0.0
        %1841 = vmatpush1.msra.mxu0 0.0
        %1842 = vmatprep.subr.mxu0 0.0
        %1843 = vmatpush1.msra.mxu0 0.0
        %1844 = vmatprep.subr.mxu0 0.0
        %1845 = vmatpush1.msra.mxu0 0.0
        %1846 = vmatprep.subr.mxu0 0.0
        %1847 = vmatpush1.msra.mxu0 0.0
        %1848 = vmatprep.subr.mxu0 0.0
        %1849 = vmatpush1.msra.mxu0 0.0
        %1850 = vmatprep.subr.mxu0 0.0
        %1851 = vmatpush1.msra.mxu0 0.0
        %1852 = vmatprep.subr.mxu0 0.0
        %1853 = vmatpush1.msra.mxu0 0.0
        %1854 = vmatprep.subr.mxu0 0.0
        %1855 = vmatpush1.msra.mxu0 0.0
        %1856 = vmatprep.subr.mxu0 0.0
        %1857 = vmatpush1.msra.mxu0 0.0
        %1858 = vmatprep.subr.mxu0 0.0
        %1859 = vmatpush1.msra.mxu0 0.0
        %1860 = vmatprep.subr.mxu0 0.0
        %1861 = vmatpush1.msra.mxu0 0.0
        %1862 = vmatprep.subr.mxu0 0.0
        %1863 = vmatpush1.msra.mxu0 0.0
        %1864 = vmatprep.subr.mxu0 0.0
        %1865 = vmatpush1.msra.mxu0 0.0
        %1866 = vmatprep.subr.mxu0 0.0
        %1867 = vmatpush1.msra.mxu0 0.0
        %1868 = vmatprep.subr.mxu0 0.0
        %1869 = vmatpush1.msra.mxu0 0.0
        %1870 = vmatprep.subr.mxu0 0.0
        %1871 = vmatpush1.msra.mxu0 0.0
        %1872 = vmatprep.subr.mxu0 0.0
        %1873 = vmatpush1.msra.mxu0 0.0
        %1874 = vmatprep.subr.mxu0 0.0
        %1875 = vmatpush1.msra.mxu0 0.0
        %1876 = vmatprep.subr.mxu0 0.0
        %1877 = vmatpush1.msra.mxu0 0.0
        %1878 = vmatprep.subr.mxu0 0.0
        %1879 = vmatpush1.msra.mxu0 0.0
        %1880 = vmatprep.subr.mxu0 0.0
        %1881 = vmatpush1.msra.mxu0 0.0
        %1882 = vmatprep.subr.mxu0 0.0
        %1883 = vmatpush1.msra.mxu0 0.0
        %1884 = vmatprep.subr.mxu0 0.0
        %1885 = vmatpush1.msra.mxu0 0.0
        %1886 = vmatprep.subr.mxu0 0.0
        %1887 = vmatpush1.msra.mxu0 0.0
        %1888 = vmatprep.subr.mxu0 0.0
        %1889 = vmatpush1.msra.mxu0 0.0
        %1890 = vmatprep.subr.mxu0 0.0
        %1891 = vmatpush1.msra.mxu0 0.0
        %1892 = vmatprep.mubr.f32.mxu0 0.0
        %1893 = vmatmul.mubr.f32.gmra.mrb[0].mxu0 %v1746
        %v1894 = vpop.f32.mrb[0].mxu0
        %v1895 = vadd.f32 0.0, %v1894
        %v1896 = vpop.f32.mrb[0].mxu0
        %v1897 = vadd.f32 0.0, %v1896
        %1898 = vmatprep.mubr.f32.mxu0 0.0
        %1899 = vmatmul.mubr.f32.gmra.mrb[0].mxu0 %v1749
        %v1900 = vpop.f32.mrb[0].mxu0
        %v1901 = vadd.f32 0.0, %v1900
        %v1902 = vpop.f32.mrb[0].mxu0
        %v1903 = vadd.f32 0.0, %v1902
        %1904 = vdwg.mxu0
        %1905 = vmatprep.subr.mxu0 %v1684
        %1906 = vmatpush1.msra.mxu0 %v1683
        %1907 = vmatprep.subr.mxu0 %v1716
        %1908 = vmatpush1.msra.mxu0 %v1715
        %1909 = vmatprep.subr.mxu0 0.0
        %1910 = vmatpush1.msra.mxu0 0.0
        %1911 = vmatprep.subr.mxu0 0.0
        %1912 = vmatpush1.msra.mxu0 0.0
        %1913 = vmatprep.subr.mxu0 0.0
        %1914 = vmatpush1.msra.mxu0 0.0
        %1915 = vmatprep.subr.mxu0 0.0
        %1916 = vmatpush1.msra.mxu0 0.0
        %1917 = vmatprep.subr.mxu0 0.0
        %1918 = vmatpush1.msra.mxu0 0.0
        %1919 = vmatprep.subr.mxu0 0.0
        %1920 = vmatpush1.msra.mxu0 0.0
        %1921 = vmatprep.subr.mxu0 0.0
        %1922 = vmatpush1.msra.mxu0 0.0
        %1923 = vmatprep.subr.mxu0 0.0
        %1924 = vmatpush1.msra.mxu0 0.0
        %1925 = vmatprep.subr.mxu0 0.0
        %1926 = vmatpush1.msra.mxu0 0.0
        %1927 = vmatprep.subr.mxu0 0.0
        %1928 = vmatpush1.msra.mxu0 0.0
        %1929 = vmatprep.subr.mxu0 0.0
        %1930 = vmatpush1.msra.mxu0 0.0
        %1931 = vmatprep.subr.mxu0 0.0
        %1932 = vmatpush1.msra.mxu0 0.0
        %1933 = vmatprep.subr.mxu0 0.0
        %1934 = vmatpush1.msra.mxu0 0.0
        %1935 = vmatprep.subr.mxu0 0.0
        %1936 = vmatpush1.msra.mxu0 0.0
        %1937 = vmatprep.subr.mxu0 0.0
        %1938 = vmatpush1.msra.mxu0 0.0
        %1939 = vmatprep.subr.mxu0 0.0
        %1940 = vmatpush1.msra.mxu0 0.0
        %1941 = vmatprep.subr.mxu0 0.0
        %1942 = vmatpush1.msra.mxu0 0.0
        %1943 = vmatprep.subr.mxu0 0.0
        %1944 = vmatpush1.msra.mxu0 0.0
        %1945 = vmatprep.subr.mxu0 0.0
        %1946 = vmatpush1.msra.mxu0 0.0
        %1947 = vmatprep.subr.mxu0 0.0
        %1948 = vmatpush1.msra.mxu0 0.0
        %1949 = vmatprep.subr.mxu0 0.0
        %1950 = vmatpush1.msra.mxu0 0.0
        %1951 = vmatprep.subr.mxu0 0.0
        %1952 = vmatpush1.msra.mxu0 0.0
        %1953 = vmatprep.subr.mxu0 0.0
        %1954 = vmatpush1.msra.mxu0 0.0
        %1955 = vmatprep.subr.mxu0 0.0
        %1956 = vmatpush1.msra.mxu0 0.0
        %1957 = vmatprep.subr.mxu0 0.0
        %1958 = vmatpush1.msra.mxu0 0.0
        %1959 = vmatprep.subr.mxu0 0.0
        %1960 = vmatpush1.msra.mxu0 0.0
        %1961 = vmatprep.subr.mxu0 0.0
        %1962 = vmatpush1.msra.mxu0 0.0
        %1963 = vmatprep.subr.mxu0 0.0
        %1964 = vmatpush1.msra.mxu0 0.0
        %1965 = vmatprep.subr.mxu0 0.0
        %1966 = vmatpush1.msra.mxu0 0.0
        %1967 = vmatprep.subr.mxu0 0.0
        %1968 = vmatpush1.msra.mxu0 0.0
        %1969 = vmatprep.mubr.f32.mxu0 0.0
        %1970 = vmatmul.mubr.f32.gmra.mrb[0].mxu0 %v1746
        %v1971 = vpop.f32.mrb[0].mxu0
        %v1972 = vadd.f32 0.0, %v1971
        %v1973 = vpop.f32.mrb[0].mxu0
        %v1974 = vadd.f32 0.0, %v1973
        %1975 = vmatprep.mubr.f32.mxu0 0.0
        %1976 = vmatmul.mubr.f32.gmra.mrb[0].mxu0 %v1749
        %v1977 = vpop.f32.mrb[0].mxu0
        %v1978 = vadd.f32 0.0, %v1977
        %v1979 = vpop.f32.mrb[0].mxu0
        %v1980 = vadd.f32 0.0, %v1979
        %1981 = vdwg.mxu0
        %1982 = vmatprep.subr.mxu0 %v1686
        %1983 = vmatpush1.msra.mxu0 %v1685
        %1984 = vmatprep.subr.mxu0 %v1718
        %1985 = vmatpush1.msra.mxu0 %v1717
        %1986 = vmatprep.subr.mxu0 0.0
        %1987 = vmatpush1.msra.mxu0 0.0
        %1988 = vmatprep.subr.mxu0 0.0
        %1989 = vmatpush1.msra.mxu0 0.0
        %1990 = vmatprep.subr.mxu0 0.0
        %1991 = vmatpush1.msra.mxu0 0.0
        %1992 = vmatprep.subr.mxu0 0.0
        %1993 = vmatpush1.msra.mxu0 0.0
        %1994 = vmatprep.subr.mxu0 0.0
        %1995 = vmatpush1.msra.mxu0 0.0
        %1996 = vmatprep.subr.mxu0 0.0
        %1997 = vmatpush1.msra.mxu0 0.0
        %1998 = vmatprep.subr.mxu0 0.0
        %1999 = vmatpush1.msra.mxu0 0.0
        %2000 = vmatprep.subr.mxu0 0.0
        %2001 = vmatpush1.msra.mxu0 0.0
        %2002 = vmatprep.subr.mxu0 0.0
        %2003 = vmatpush1.msra.mxu0 0.0
        %2004 = vmatprep.subr.mxu0 0.0
        %2005 = vmatpush1.msra.mxu0 0.0
        %2006 = vmatprep.subr.mxu0 0.0
        %2007 = vmatpush1.msra.mxu0 0.0
        %2008 = vmatprep.subr.mxu0 0.0
        %2009 = vmatpush1.msra.mxu0 0.0
        %2010 = vmatprep.subr.mxu0 0.0
        %2011 = vmatpush1.msra.mxu0 0.0
        %2012 = vmatprep.subr.mxu0 0.0
        %2013 = vmatpush1.msra.mxu0 0.0
        %2014 = vmatprep.subr.mxu0 0.0
        %2015 = vmatpush1.msra.mxu0 0.0
        %2016 = vmatprep.subr.mxu0 0.0
        %2017 = vmatpush1.msra.mxu0 0.0
        %2018 = vmatprep.subr.mxu0 0.0
        %2019 = vmatpush1.msra.mxu0 0.0
        %2020 = vmatprep.subr.mxu0 0.0
        %2021 = vmatpush1.msra.mxu0 0.0
        %2022 = vmatprep.subr.mxu0 0.0
        %2023 = vmatpush1.msra.mxu0 0.0
        %2024 = vmatprep.subr.mxu0 0.0
        %2025 = vmatpush1.msra.mxu0 0.0
        %2026 = vmatprep.subr.mxu0 0.0
        %2027 = vmatpush1.msra.mxu0 0.0
        %2028 = vmatprep.subr.mxu0 0.0
        %2029 = vmatpush1.msra.mxu0 0.0
        %2030 = vmatprep.subr.mxu0 0.0
        %2031 = vmatpush1.msra.mxu0 0.0
        %2032 = vmatprep.subr.mxu0 0.0
        %2033 = vmatpush1.msra.mxu0 0.0
        %2034 = vmatprep.subr.mxu0 0.0
        %2035 = vmatpush1.msra.mxu0 0.0
        %2036 = vmatprep.subr.mxu0 0.0
        %2037 = vmatpush1.msra.mxu0 0.0
        %2038 = vmatprep.subr.mxu0 0.0
        %2039 = vmatpush1.msra.mxu0 0.0
        %2040 = vmatprep.subr.mxu0 0.0
        %2041 = vmatpush1.msra.mxu0 0.0
        %2042 = vmatprep.subr.mxu0 0.0
        %2043 = vmatpush1.msra.mxu0 0.0
        %2044 = vmatprep.subr.mxu0 0.0
        %2045 = vmatpush1.msra.mxu0 0.0
        %2046 = vmatprep.mubr.f32.mxu0 0.0
        %2047 = vmatmul.mubr.f32.gmra.mrb[0].mxu0 %v1746
        %v2048 = vpop.f32.mrb[0].mxu0
        %v2049 = vadd.f32 0.0, %v2048
        %v2050 = vpop.f32.mrb[0].mxu0
        %v2051 = vadd.f32 0.0, %v2050
        %2052 = vmatprep.mubr.f32.mxu0 0.0
        %2053 = vmatmul.mubr.f32.gmra.mrb[0].mxu0 %v1749
        %v2054 = vpop.f32.mrb[0].mxu0
        %v2055 = vadd.f32 0.0, %v2054
        %v2056 = vpop.f32.mrb[0].mxu0
        %v2057 = vadd.f32 0.0, %v2056
        %2058 = vdwg.mxu0
        %2059 = vmatprep.subr.mxu0 %v1688
        %2060 = vmatpush1.msra.mxu0 %v1687
        %2061 = vmatprep.subr.mxu0 %v1720
        %2062 = vmatpush1.msra.mxu0 %v1719
        %2063 = vmatprep.subr.mxu0 0.0
        %2064 = vmatpush1.msra.mxu0 0.0
        %2065 = vmatprep.subr.mxu0 0.0
        %2066 = vmatpush1.msra.mxu0 0.0
        %2067 = vmatprep.subr.mxu0 0.0
        %2068 = vmatpush1.msra.mxu0 0.0
        %2069 = vmatprep.subr.mxu0 0.0
        %2070 = vmatpush1.msra.mxu0 0.0
        %2071 = vmatprep.subr.mxu0 0.0
        %2072 = vmatpush1.msra.mxu0 0.0
        %2073 = vmatprep.subr.mxu0 0.0
        %2074 = vmatpush1.msra.mxu0 0.0
        %2075 = vmatprep.subr.mxu0 0.0
        %2076 = vmatpush1.msra.mxu0 0.0
        %2077 = vmatprep.subr.mxu0 0.0
        %2078 = vmatpush1.msra.mxu0 0.0
        %2079 = vmatprep.subr.mxu0 0.0
        %2080 = vmatpush1.msra.mxu0 0.0
        %2081 = vmatprep.subr.mxu0 0.0
        %2082 = vmatpush1.msra.mxu0 0.0
        %2083 = vmatprep.subr.mxu0 0.0
        %2084 = vmatpush1.msra.mxu0 0.0
        %2085 = vmatprep.subr.mxu0 0.0
        %2086 = vmatpush1.msra.mxu0 0.0
        %2087 = vmatprep.subr.mxu0 0.0
        %2088 = vmatpush1.msra.mxu0 0.0
        %2089 = vmatprep.subr.mxu0 0.0
        %2090 = vmatpush1.msra.mxu0 0.0
        %2091 = vmatprep.subr.mxu0 0.0
        %2092 = vmatpush1.msra.mxu0 0.0
        %2093 = vmatprep.subr.mxu0 0.0
        %2094 = vmatpush1.msra.mxu0 0.0
        %2095 = vmatprep.subr.mxu0 0.0
        %2096 = vmatpush1.msra.mxu0 0.0
        %2097 = vmatprep.subr.mxu0 0.0
        %2098 = vmatpush1.msra.mxu0 0.0
        %2099 = vmatprep.subr.mxu0 0.0
        %2100 = vmatpush1.msra.mxu0 0.0
        %2101 = vmatprep.subr.mxu0 0.0
        %2102 = vmatpush1.msra.mxu0 0.0
        %2103 = vmatprep.subr.mxu0 0.0
        %2104 = vmatpush1.msra.mxu0 0.0
        %2105 = vmatprep.subr.mxu0 0.0
        %2106 = vmatpush1.msra.mxu0 0.0
        %2107 = vmatprep.subr.mxu0 0.0
        %2108 = vmatpush1.msra.mxu0 0.0
        %2109 = vmatprep.subr.mxu0 0.0
        %2110 = vmatpush1.msra.mxu0 0.0
        %2111 = vmatprep.subr.mxu0 0.0
        %2112 = vmatpush1.msra.mxu0 0.0
        %2113 = vmatprep.subr.mxu0 0.0
        %2114 = vmatpush1.msra.mxu0 0.0
        %2115 = vmatprep.subr.mxu0 0.0
        %2116 = vmatpush1.msra.mxu0 0.0
        %2117 = vmatprep.subr.mxu0 0.0
        %2118 = vmatpush1.msra.mxu0 0.0
        %2119 = vmatprep.subr.mxu0 0.0
        %2120 = vmatpush1.msra.mxu0 0.0
        %2121 = vmatprep.subr.mxu0 0.0
        %2122 = vmatpush1.msra.mxu0 0.0
        %2123 = vmatprep.mubr.f32.mxu0 0.0
        %2124 = vmatmul.mubr.f32.gmra.mrb[0].mxu0 %v1746
        %v2125 = vpop.f32.mrb[0].mxu0
        %v2126 = vadd.f32 0.0, %v2125
        %v2127 = vpop.f32.mrb[0].mxu0
        %v2128 = vadd.f32 0.0, %v2127
        %2129 = vmatprep.mubr.f32.mxu0 0.0
        %2130 = vmatmul.mubr.f32.gmra.mrb[0].mxu0 %v1749
        %v2131 = vpop.f32.mrb[0].mxu0
        %v2132 = vadd.f32 0.0, %v2131
        %v2133 = vpop.f32.mrb[0].mxu0
        %v2134 = vadd.f32 0.0, %v2133
        %2135 = vdwg.mxu0
        %2136 = vmatprep.subr.mxu0 %v1690
        %2137 = vmatpush1.msra.mxu0 %v1689
        %2138 = vmatprep.subr.mxu0 %v1722
        %2139 = vmatpush1.msra.mxu0 %v1721
        %2140 = vmatprep.subr.mxu0 0.0
        %2141 = vmatpush1.msra.mxu0 0.0
        %2142 = vmatprep.subr.mxu0 0.0
        %2143 = vmatpush1.msra.mxu0 0.0
        %2144 = vmatprep.subr.mxu0 0.0
        %2145 = vmatpush1.msra.mxu0 0.0
        %2146 = vmatprep.subr.mxu0 0.0
        %2147 = vmatpush1.msra.mxu0 0.0
        %2148 = vmatprep.subr.mxu0 0.0
        %2149 = vmatpush1.msra.mxu0 0.0
        %2150 = vmatprep.subr.mxu0 0.0
        %2151 = vmatpush1.msra.mxu0 0.0
        %2152 = vmatprep.subr.mxu0 0.0
        %2153 = vmatpush1.msra.mxu0 0.0
        %2154 = vmatprep.subr.mxu0 0.0
        %2155 = vmatpush1.msra.mxu0 0.0
        %2156 = vmatprep.subr.mxu0 0.0
        %2157 = vmatpush1.msra.mxu0 0.0
        %2158 = vmatprep.subr.mxu0 0.0
        %2159 = vmatpush1.msra.mxu0 0.0
        %2160 = vmatprep.subr.mxu0 0.0
        %2161 = vmatpush1.msra.mxu0 0.0
        %2162 = vmatprep.subr.mxu0 0.0
        %2163 = vmatpush1.msra.mxu0 0.0
        %2164 = vmatprep.subr.mxu0 0.0
        %2165 = vmatpush1.msra.mxu0 0.0
        %2166 = vmatprep.subr.mxu0 0.0
        %2167 = vmatpush1.msra.mxu0 0.0
        %2168 = vmatprep.subr.mxu0 0.0
        %2169 = vmatpush1.msra.mxu0 0.0
        %2170 = vmatprep.subr.mxu0 0.0
        %2171 = vmatpush1.msra.mxu0 0.0
        %2172 = vmatprep.subr.mxu0 0.0
        %2173 = vmatpush1.msra.mxu0 0.0
        %2174 = vmatprep.subr.mxu0 0.0
        %2175 = vmatpush1.msra.mxu0 0.0
        %2176 = vmatprep.subr.mxu0 0.0
        %2177 = vmatpush1.msra.mxu0 0.0
        %2178 = vmatprep.subr.mxu0 0.0
        %2179 = vmatpush1.msra.mxu0 0.0
        %2180 = vmatprep.subr.mxu0 0.0
        %2181 = vmatpush1.msra.mxu0 0.0
        %2182 = vmatprep.subr.mxu0 0.0
        %2183 = vmatpush1.msra.mxu0 0.0
        %2184 = vmatprep.subr.mxu0 0.0
        %2185 = vmatpush1.msra.mxu0 0.0
        %2186 = vmatprep.subr.mxu0 0.0
        %2187 = vmatpush1.msra.mxu0 0.0
        %2188 = vmatprep.subr.mxu0 0.0
        %2189 = vmatpush1.msra.mxu0 0.0
        %2190 = vmatprep.subr.mxu0 0.0
        %2191 = vmatpush1.msra.mxu0 0.0
        %2192 = vmatprep.subr.mxu0 0.0
        %2193 = vmatpush1.msra.mxu0 0.0
        %2194 = vmatprep.subr.mxu0 0.0
        %2195 = vmatpush1.msra.mxu0 0.0
        %2196 = vmatprep.subr.mxu0 0.0
        %2197 = vmatpush1.msra.mxu0 0.0
        %2198 = vmatprep.subr.mxu0 0.0
        %2199 = vmatpush1.msra.mxu0 0.0
        %2200 = vmatprep.mubr.f32.mxu0 0.0
        %2201 = vmatmul.mubr.f32.gmra.mrb[0].mxu0 %v1746
        %v2202 = vpop.f32.mrb[0].mxu0
        %v2203 = vadd.f32 0.0, %v2202
        %v2204 = vpop.f32.mrb[0].mxu0
        %v2205 = vadd.f32 0.0, %v2204
        %2206 = vmatprep.mubr.f32.mxu0 0.0
        %2207 = vmatmul.mubr.f32.gmra.mrb[0].mxu0 %v1749
        %v2208 = vpop.f32.mrb[0].mxu0
        %v2209 = vadd.f32 0.0, %v2208
        %v2210 = vpop.f32.mrb[0].mxu0
        %v2211 = vadd.f32 0.0, %v2210
        %2212 = vdwg.mxu0
        %2213 = vmatprep.subr.mxu0 %v1692
        %2214 = vmatpush1.msra.mxu0 %v1691
        %2215 = vmatprep.subr.mxu0 %v1724
        %2216 = vmatpush1.msra.mxu0 %v1723
        %2217 = vmatprep.subr.mxu0 0.0
        %2218 = vmatpush1.msra.mxu0 0.0
        %2219 = vmatprep.subr.mxu0 0.0
        %2220 = vmatpush1.msra.mxu0 0.0
        %2221 = vmatprep.subr.mxu0 0.0
        %2222 = vmatpush1.msra.mxu0 0.0
        %2223 = vmatprep.subr.mxu0 0.0
        %2224 = vmatpush1.msra.mxu0 0.0
        %2225 = vmatprep.subr.mxu0 0.0
        %2226 = vmatpush1.msra.mxu0 0.0
        %2227 = vmatprep.subr.mxu0 0.0
        %2228 = vmatpush1.msra.mxu0 0.0
        %2229 = vmatprep.subr.mxu0 0.0
        %2230 = vmatpush1.msra.mxu0 0.0
        %2231 = vmatprep.subr.mxu0 0.0
        %2232 = vmatpush1.msra.mxu0 0.0
        %2233 = vmatprep.subr.mxu0 0.0
        %2234 = vmatpush1.msra.mxu0 0.0
        %2235 = vmatprep.subr.mxu0 0.0
        %2236 = vmatpush1.msra.mxu0 0.0
        %2237 = vmatprep.subr.mxu0 0.0
        %2238 = vmatpush1.msra.mxu0 0.0
        %2239 = vmatprep.subr.mxu0 0.0
        %2240 = vmatpush1.msra.mxu0 0.0
        %2241 = vmatprep.subr.mxu0 0.0
        %2242 = vmatpush1.msra.mxu0 0.0
        %2243 = vmatprep.subr.mxu0 0.0
        %2244 = vmatpush1.msra.mxu0 0.0
        %2245 = vmatprep.subr.mxu0 0.0
        %2246 = vmatpush1.msra.mxu0 0.0
        %2247 = vmatprep.subr.mxu0 0.0
        %2248 = vmatpush1.msra.mxu0 0.0
        %2249 = vmatprep.subr.mxu0 0.0
        %2250 = vmatpush1.msra.mxu0 0.0
        %2251 = vmatprep.subr.mxu0 0.0
        %2252 = vmatpush1.msra.mxu0 0.0
        %2253 = vmatprep.subr.mxu0 0.0
        %2254 = vmatpush1.msra.mxu0 0.0
        %2255 = vmatprep.subr.mxu0 0.0
        %2256 = vmatpush1.msra.mxu0 0.0
        %2257 = vmatprep.subr.mxu0 0.0
        %2258 = vmatpush1.msra.mxu0 0.0
        %2259 = vmatprep.subr.mxu0 0.0
        %2260 = vmatpush1.msra.mxu0 0.0
        %2261 = vmatprep.subr.mxu0 0.0
        %2262 = vmatpush1.msra.mxu0 0.0
        %2263 = vmatprep.subr.mxu0 0.0
        %2264 = vmatpush1.msra.mxu0 0.0
        %2265 = vmatprep.subr.mxu0 0.0
        %2266 = vmatpush1.msra.mxu0 0.0
        %2267 = vmatprep.subr.mxu0 0.0
        %2268 = vmatpush1.msra.mxu0 0.0
        %2269 = vmatprep.subr.mxu0 0.0
        %2270 = vmatpush1.msra.mxu0 0.0
        %2271 = vmatprep.subr.mxu0 0.0
        %2272 = vmatpush1.msra.mxu0 0.0
        %2273 = vmatprep.subr.mxu0 0.0
        %2274 = vmatpush1.msra.mxu0 0.0
        %2275 = vmatprep.subr.mxu0 0.0
        %2276 = vmatpush1.msra.mxu0 0.0
        %2277 = vmatprep.mubr.f32.mxu0 0.0
        %2278 = vmatmul.mubr.f32.gmra.mrb[0].mxu0 %v1746
        %v2279 = vpop.f32.mrb[0].mxu0
        %v2280 = vadd.f32 0.0, %v2279
        %v2281 = vpop.f32.mrb[0].mxu0
        %v2282 = vadd.f32 0.0, %v2281
        %2283 = vmatprep.mubr.f32.mxu0 0.0
        %2284 = vmatmul.mubr.f32.gmra.mrb[0].mxu0 %v1749
        %v2285 = vpop.f32.mrb[0].mxu0
        %v2286 = vadd.f32 0.0, %v2285
        %v2287 = vpop.f32.mrb[0].mxu0
        %v2288 = vadd.f32 0.0, %v2287
        %2289 = vdwg.mxu0
        %2290 = vmatprep.subr.mxu0 %v1694
        %2291 = vmatpush1.msra.mxu0 %v1693
        %2292 = vmatprep.subr.mxu0 %v1726
        %2293 = vmatpush1.msra.mxu0 %v1725
        %2294 = vmatprep.subr.mxu0 0.0
        %2295 = vmatpush1.msra.mxu0 0.0
        %2296 = vmatprep.subr.mxu0 0.0
        %2297 = vmatpush1.msra.mxu0 0.0
        %2298 = vmatprep.subr.mxu0 0.0
        %2299 = vmatpush1.msra.mxu0 0.0
        %2300 = vmatprep.subr.mxu0 0.0
        %2301 = vmatpush1.msra.mxu0 0.0
        %2302 = vmatprep.subr.mxu0 0.0
        %2303 = vmatpush1.msra.mxu0 0.0
        %2304 = vmatprep.subr.mxu0 0.0
        %2305 = vmatpush1.msra.mxu0 0.0
        %2306 = vmatprep.subr.mxu0 0.0
        %2307 = vmatpush1.msra.mxu0 0.0
        %2308 = vmatprep.subr.mxu0 0.0
        %2309 = vmatpush1.msra.mxu0 0.0
        %2310 = vmatprep.subr.mxu0 0.0
        %2311 = vmatpush1.msra.mxu0 0.0
        %2312 = vmatprep.subr.mxu0 0.0
        %2313 = vmatpush1.msra.mxu0 0.0
        %2314 = vmatprep.subr.mxu0 0.0
        %2315 = vmatpush1.msra.mxu0 0.0
        %2316 = vmatprep.subr.mxu0 0.0
        %2317 = vmatpush1.msra.mxu0 0.0
        %2318 = vmatprep.subr.mxu0 0.0
        %2319 = vmatpush1.msra.mxu0 0.0
        %2320 = vmatprep.subr.mxu0 0.0
        %2321 = vmatpush1.msra.mxu0 0.0
        %2322 = vmatprep.subr.mxu0 0.0
        %2323 = vmatpush1.msra.mxu0 0.0
        %2324 = vmatprep.subr.mxu0 0.0
        %2325 = vmatpush1.msra.mxu0 0.0
        %2326 = vmatprep.subr.mxu0 0.0
        %2327 = vmatpush1.msra.mxu0 0.0
        %2328 = vmatprep.subr.mxu0 0.0
        %2329 = vmatpush1.msra.mxu0 0.0
        %2330 = vmatprep.subr.mxu0 0.0
        %2331 = vmatpush1.msra.mxu0 0.0
        %2332 = vmatprep.subr.mxu0 0.0
        %2333 = vmatpush1.msra.mxu0 0.0
        %2334 = vmatprep.subr.mxu0 0.0
        %2335 = vmatpush1.msra.mxu0 0.0
        %2336 = vmatprep.subr.mxu0 0.0
        %2337 = vmatpush1.msra.mxu0 0.0
        %2338 = vmatprep.subr.mxu0 0.0
        %2339 = vmatpush1.msra.mxu0 0.0
        %2340 = vmatprep.subr.mxu0 0.0
        %2341 = vmatpush1.msra.mxu0 0.0
        %2342 = vmatprep.subr.mxu0 0.0
        %2343 = vmatpush1.msra.mxu0 0.0
        %2344 = vmatprep.subr.mxu0 0.0
        %2345 = vmatpush1.msra.mxu0 0.0
        %2346 = vmatprep.subr.mxu0 0.0
        %2347 = vmatpush1.msra.mxu0 0.0
        %2348 = vmatprep.subr.mxu0 0.0
        %2349 = vmatpush1.msra.mxu0 0.0
        %2350 = vmatprep.subr.mxu0 0.0
        %2351 = vmatpush1.msra.mxu0 0.0
        %2352 = vmatprep.subr.mxu0 0.0
        %2353 = vmatpush1.msra.mxu0 0.0
        %2354 = vmatprep.mubr.f32.mxu0 0.0
        %2355 = vmatmul.mubr.f32.gmra.mrb[0].mxu0 %v1746
        %v2356 = vpop.f32.mrb[0].mxu0
        %v2357 = vadd.f32 0.0, %v2356
        %v2358 = vpop.f32.mrb[0].mxu0
        %v2359 = vadd.f32 0.0, %v2358
        %2360 = vmatprep.mubr.f32.mxu0 0.0
        %2361 = vmatmul.mubr.f32.gmra.mrb[0].mxu0 %v1749
        %v2362 = vpop.f32.mrb[0].mxu0
        %v2363 = vadd.f32 0.0, %v2362
        %v2364 = vpop.f32.mrb[0].mxu0
        %v2365 = vadd.f32 0.0, %v2364
        %2366 = vdwg.mxu0
        %2367 = vmatprep.subr.mxu0 %v1696
        %2368 = vmatpush1.msra.mxu0 %v1695
        %2369 = vmatprep.subr.mxu0 %v1728
        %2370 = vmatpush1.msra.mxu0 %v1727
        %2371 = vmatprep.subr.mxu0 0.0
        %2372 = vmatpush1.msra.mxu0 0.0
        %2373 = vmatprep.subr.mxu0 0.0
        %2374 = vmatpush1.msra.mxu0 0.0
        %2375 = vmatprep.subr.mxu0 0.0
        %2376 = vmatpush1.msra.mxu0 0.0
        %2377 = vmatprep.subr.mxu0 0.0
        %2378 = vmatpush1.msra.mxu0 0.0
        %2379 = vmatprep.subr.mxu0 0.0
        %2380 = vmatpush1.msra.mxu0 0.0
        %2381 = vmatprep.subr.mxu0 0.0
        %2382 = vmatpush1.msra.mxu0 0.0
        %2383 = vmatprep.subr.mxu0 0.0
        %2384 = vmatpush1.msra.mxu0 0.0
        %2385 = vmatprep.subr.mxu0 0.0
        %2386 = vmatpush1.msra.mxu0 0.0
        %2387 = vmatprep.subr.mxu0 0.0
        %2388 = vmatpush1.msra.mxu0 0.0
        %2389 = vmatprep.subr.mxu0 0.0
        %2390 = vmatpush1.msra.mxu0 0.0
        %2391 = vmatprep.subr.mxu0 0.0
        %2392 = vmatpush1.msra.mxu0 0.0
        %2393 = vmatprep.subr.mxu0 0.0
        %2394 = vmatpush1.msra.mxu0 0.0
        %2395 = vmatprep.subr.mxu0 0.0
        %2396 = vmatpush1.msra.mxu0 0.0
        %2397 = vmatprep.subr.mxu0 0.0
        %2398 = vmatpush1.msra.mxu0 0.0
        %2399 = vmatprep.subr.mxu0 0.0
        %2400 = vmatpush1.msra.mxu0 0.0
        %2401 = vmatprep.subr.mxu0 0.0
        %2402 = vmatpush1.msra.mxu0 0.0
        %2403 = vmatprep.subr.mxu0 0.0
        %2404 = vmatpush1.msra.mxu0 0.0
        %2405 = vmatprep.subr.mxu0 0.0
        %2406 = vmatpush1.msra.mxu0 0.0
        %2407 = vmatprep.subr.mxu0 0.0
        %2408 = vmatpush1.msra.mxu0 0.0
        %2409 = vmatprep.subr.mxu0 0.0
        %2410 = vmatpush1.msra.mxu0 0.0
        %2411 = vmatprep.subr.mxu0 0.0
        %2412 = vmatpush1.msra.mxu0 0.0
        %2413 = vmatprep.subr.mxu0 0.0
        %2414 = vmatpush1.msra.mxu0 0.0
        %2415 = vmatprep.subr.mxu0 0.0
        %2416 = vmatpush1.msra.mxu0 0.0
        %2417 = vmatprep.subr.mxu0 0.0
        %2418 = vmatpush1.msra.mxu0 0.0
        %2419 = vmatprep.subr.mxu0 0.0
        %2420 = vmatpush1.msra.mxu0 0.0
        %2421 = vmatprep.subr.mxu0 0.0
        %2422 = vmatpush1.msra.mxu0 0.0
        %2423 = vmatprep.subr.mxu0 0.0
        %2424 = vmatpush1.msra.mxu0 0.0
        %2425 = vmatprep.subr.mxu0 0.0
        %2426 = vmatpush1.msra.mxu0 0.0
        %2427 = vmatprep.subr.mxu0 0.0
        %2428 = vmatpush1.msra.mxu0 0.0
        %2429 = vmatprep.subr.mxu0 0.0
        %2430 = vmatpush1.msra.mxu0 0.0
        %2431 = vmatprep.mubr.f32.mxu0 0.0
        %2432 = vmatmul.mubr.f32.gmra.mrb[0].mxu0 %v1746
        %v2433 = vpop.f32.mrb[0].mxu0
        %v2434 = vadd.f32 0.0, %v2433
        %v2435 = vpop.f32.mrb[0].mxu0
        %v2436 = vadd.f32 0.0, %v2435
        %2437 = vmatprep.mubr.f32.mxu0 0.0
        %2438 = vmatmul.mubr.f32.gmra.mrb[0].mxu0 %v1749
        %v2439 = vpop.f32.mrb[0].mxu0
        %v2440 = vadd.f32 0.0, %v2439
        %v2441 = vpop.f32.mrb[0].mxu0
        %v2442 = vadd.f32 0.0, %v2441
        %2443 = vdwg.mxu0
        %2444 = vmatprep.subr.mxu0 %v1698
        %2445 = vmatpush1.msra.mxu0 %v1697
        %2446 = vmatprep.subr.mxu0 %v1730
        %2447 = vmatpush1.msra.mxu0 %v1729
        %2448 = vmatprep.subr.mxu0 0.0
        %2449 = vmatpush1.msra.mxu0 0.0
        %2450 = vmatprep.subr.mxu0 0.0
        %2451 = vmatpush1.msra.mxu0 0.0
        %2452 = vmatprep.subr.mxu0 0.0
        %2453 = vmatpush1.msra.mxu0 0.0
        %2454 = vmatprep.subr.mxu0 0.0
        %2455 = vmatpush1.msra.mxu0 0.0
        %2456 = vmatprep.subr.mxu0 0.0
        %2457 = vmatpush1.msra.mxu0 0.0
        %2458 = vmatprep.subr.mxu0 0.0
        %2459 = vmatpush1.msra.mxu0 0.0
        %2460 = vmatprep.subr.mxu0 0.0
        %2461 = vmatpush1.msra.mxu0 0.0
        %2462 = vmatprep.subr.mxu0 0.0
        %2463 = vmatpush1.msra.mxu0 0.0
        %2464 = vmatprep.subr.mxu0 0.0
        %2465 = vmatpush1.msra.mxu0 0.0
        %2466 = vmatprep.subr.mxu0 0.0
        %2467 = vmatpush1.msra.mxu0 0.0
        %2468 = vmatprep.subr.mxu0 0.0
        %2469 = vmatpush1.msra.mxu0 0.0
        %2470 = vmatprep.subr.mxu0 0.0
        %2471 = vmatpush1.msra.mxu0 0.0
        %2472 = vmatprep.subr.mxu0 0.0
        %2473 = vmatpush1.msra.mxu0 0.0
        %2474 = vmatprep.subr.mxu0 0.0
        %2475 = vmatpush1.msra.mxu0 0.0
        %2476 = vmatprep.subr.mxu0 0.0
        %2477 = vmatpush1.msra.mxu0 0.0
        %2478 = vmatprep.subr.mxu0 0.0
        %2479 = vmatpush1.msra.mxu0 0.0
        %2480 = vmatprep.subr.mxu0 0.0
        %2481 = vmatpush1.msra.mxu0 0.0
        %2482 = vmatprep.subr.mxu0 0.0
        %2483 = vmatpush1.msra.mxu0 0.0
        %2484 = vmatprep.subr.mxu0 0.0
        %2485 = vmatpush1.msra.mxu0 0.0
        %2486 = vmatprep.subr.mxu0 0.0
        %2487 = vmatpush1.msra.mxu0 0.0
        %2488 = vmatprep.subr.mxu0 0.0
        %2489 = vmatpush1.msra.mxu0 0.0
        %2490 = vmatprep.subr.mxu0 0.0
        %2491 = vmatpush1.msra.mxu0 0.0
        %2492 = vmatprep.subr.mxu0 0.0
        %2493 = vmatpush1.msra.mxu0 0.0
        %2494 = vmatprep.subr.mxu0 0.0
        %2495 = vmatpush1.msra.mxu0 0.0
        %2496 = vmatprep.subr.mxu0 0.0
        %2497 = vmatpush1.msra.mxu0 0.0
        %2498 = vmatprep.subr.mxu0 0.0
        %2499 = vmatpush1.msra.mxu0 0.0
        %2500 = vmatprep.subr.mxu0 0.0
        %2501 = vmatpush1.msra.mxu0 0.0
        %2502 = vmatprep.subr.mxu0 0.0
        %2503 = vmatpush1.msra.mxu0 0.0
        %2504 = vmatprep.subr.mxu0 0.0
        %2505 = vmatpush1.msra.mxu0 0.0
        %2506 = vmatprep.subr.mxu0 0.0
        %2507 = vmatpush1.msra.mxu0 0.0
        %2508 = vmatprep.mubr.f32.mxu0 0.0
        %2509 = vmatmul.mubr.f32.gmra.mrb[0].mxu0 %v1746
        %v2510 = vpop.f32.mrb[0].mxu0
        %v2511 = vadd.f32 0.0, %v2510
        %v2512 = vpop.f32.mrb[0].mxu0
        %v2513 = vadd.f32 0.0, %v2512
        %2514 = vmatprep.mubr.f32.mxu0 0.0
        %2515 = vmatmul.mubr.f32.gmra.mrb[0].mxu0 %v1749
        %v2516 = vpop.f32.mrb[0].mxu0
        %v2517 = vadd.f32 0.0, %v2516
        %v2518 = vpop.f32.mrb[0].mxu0
        %v2519 = vadd.f32 0.0, %v2518
        %2520 = vdwg.mxu0
        %2521 = vmatprep.subr.mxu0 %v1700
        %2522 = vmatpush1.msra.mxu0 %v1699
        %2523 = vmatprep.subr.mxu0 %v1732
        %2524 = vmatpush1.msra.mxu0 %v1731
        %2525 = vmatprep.subr.mxu0 0.0
        %2526 = vmatpush1.msra.mxu0 0.0
        %2527 = vmatprep.subr.mxu0 0.0
        %2528 = vmatpush1.msra.mxu0 0.0
        %2529 = vmatprep.subr.mxu0 0.0
        %2530 = vmatpush1.msra.mxu0 0.0
        %2531 = vmatprep.subr.mxu0 0.0
        %2532 = vmatpush1.msra.mxu0 0.0
        %2533 = vmatprep.subr.mxu0 0.0
        %2534 = vmatpush1.msra.mxu0 0.0
        %2535 = vmatprep.subr.mxu0 0.0
        %2536 = vmatpush1.msra.mxu0 0.0
        %2537 = vmatprep.subr.mxu0 0.0
        %2538 = vmatpush1.msra.mxu0 0.0
        %2539 = vmatprep.subr.mxu0 0.0
        %2540 = vmatpush1.msra.mxu0 0.0
        %2541 = vmatprep.subr.mxu0 0.0
        %2542 = vmatpush1.msra.mxu0 0.0
        %2543 = vmatprep.subr.mxu0 0.0
        %2544 = vmatpush1.msra.mxu0 0.0
        %2545 = vmatprep.subr.mxu0 0.0
        %2546 = vmatpush1.msra.mxu0 0.0
        %2547 = vmatprep.subr.mxu0 0.0
        %2548 = vmatpush1.msra.mxu0 0.0
        %2549 = vmatprep.subr.mxu0 0.0
        %2550 = vmatpush1.msra.mxu0 0.0
        %2551 = vmatprep.subr.mxu0 0.0
        %2552 = vmatpush1.msra.mxu0 0.0
        %2553 = vmatprep.subr.mxu0 0.0
        %2554 = vmatpush1.msra.mxu0 0.0
        %2555 = vmatprep.subr.mxu0 0.0
        %2556 = vmatpush1.msra.mxu0 0.0
        %2557 = vmatprep.subr.mxu0 0.0
        %2558 = vmatpush1.msra.mxu0 0.0
        %2559 = vmatprep.subr.mxu0 0.0
        %2560 = vmatpush1.msra.mxu0 0.0
        %2561 = vmatprep.subr.mxu0 0.0
        %2562 = vmatpush1.msra.mxu0 0.0
        %2563 = vmatprep.subr.mxu0 0.0
        %2564 = vmatpush1.msra.mxu0 0.0
        %2565 = vmatprep.subr.mxu0 0.0
        %2566 = vmatpush1.msra.mxu0 0.0
        %2567 = vmatprep.subr.mxu0 0.0
        %2568 = vmatpush1.msra.mxu0 0.0
        %2569 = vmatprep.subr.mxu0 0.0
        %2570 = vmatpush1.msra.mxu0 0.0
        %2571 = vmatprep.subr.mxu0 0.0
        %2572 = vmatpush1.msra.mxu0 0.0
        %2573 = vmatprep.subr.mxu0 0.0
        %2574 = vmatpush1.msra.mxu0 0.0
        %2575 = vmatprep.subr.mxu0 0.0
        %2576 = vmatpush1.msra.mxu0 0.0
        %2577 = vmatprep.subr.mxu0 0.0
        %2578 = vmatpush1.msra.mxu0 0.0
        %2579 = vmatprep.subr.mxu0 0.0
        %2580 = vmatpush1.msra.mxu0 0.0
        %2581 = vmatprep.subr.mxu0 0.0
        %2582 = vmatpush1.msra.mxu0 0.0
        %2583 = vmatprep.subr.mxu0 0.0
        %2584 = vmatpush1.msra.mxu0 0.0
        %2585 = vmatprep.mubr.f32.mxu0 0.0
        %2586 = vmatmul.mubr.f32.gmra.mrb[0].mxu0 %v1746
        %v2587 = vpop.f32.mrb[0].mxu0
        %v2588 = vadd.f32 0.0, %v2587
        %v2589 = vpop.f32.mrb[0].mxu0
        %v2590 = vadd.f32 0.0, %v2589
        %2591 = vmatprep.mubr.f32.mxu0 0.0
        %2592 = vmatmul.mubr.f32.gmra.mrb[0].mxu0 %v1749
        %v2593 = vpop.f32.mrb[0].mxu0
        %v2594 = vadd.f32 0.0, %v2593
        %v2595 = vpop.f32.mrb[0].mxu0
        %v2596 = vadd.f32 0.0, %v2595
        %2597 = vdwg.mxu0
        %2598 = vmatprep.subr.mxu0 %v1702
        %2599 = vmatpush1.msra.mxu0 %v1701
        %2600 = vmatprep.subr.mxu0 %v1734
        %2601 = vmatpush1.msra.mxu0 %v1733
        %2602 = vmatprep.subr.mxu0 0.0
        %2603 = vmatpush1.msra.mxu0 0.0
        %2604 = vmatprep.subr.mxu0 0.0
        %2605 = vmatpush1.msra.mxu0 0.0
        %2606 = vmatprep.subr.mxu0 0.0
        %2607 = vmatpush1.msra.mxu0 0.0
        %2608 = vmatprep.subr.mxu0 0.0
        %2609 = vmatpush1.msra.mxu0 0.0
        %2610 = vmatprep.subr.mxu0 0.0
        %2611 = vmatpush1.msra.mxu0 0.0
        %2612 = vmatprep.subr.mxu0 0.0
        %2613 = vmatpush1.msra.mxu0 0.0
        %2614 = vmatprep.subr.mxu0 0.0
        %2615 = vmatpush1.msra.mxu0 0.0
        %2616 = vmatprep.subr.mxu0 0.0
        %2617 = vmatpush1.msra.mxu0 0.0
        %2618 = vmatprep.subr.mxu0 0.0
        %2619 = vmatpush1.msra.mxu0 0.0
        %2620 = vmatprep.subr.mxu0 0.0
        %2621 = vmatpush1.msra.mxu0 0.0
        %2622 = vmatprep.subr.mxu0 0.0
        %2623 = vmatpush1.msra.mxu0 0.0
        %2624 = vmatprep.subr.mxu0 0.0
        %2625 = vmatpush1.msra.mxu0 0.0
        %2626 = vmatprep.subr.mxu0 0.0
        %2627 = vmatpush1.msra.mxu0 0.0
        %2628 = vmatprep.subr.mxu0 0.0
        %2629 = vmatpush1.msra.mxu0 0.0
        %2630 = vmatprep.subr.mxu0 0.0
        %2631 = vmatpush1.msra.mxu0 0.0
        %2632 = vmatprep.subr.mxu0 0.0
        %2633 = vmatpush1.msra.mxu0 0.0
        %2634 = vmatprep.subr.mxu0 0.0
        %2635 = vmatpush1.msra.mxu0 0.0
        %2636 = vmatprep.subr.mxu0 0.0
        %2637 = vmatpush1.msra.mxu0 0.0
        %2638 = vmatprep.subr.mxu0 0.0
        %2639 = vmatpush1.msra.mxu0 0.0
        %2640 = vmatprep.subr.mxu0 0.0
        %2641 = vmatpush1.msra.mxu0 0.0
        %2642 = vmatprep.subr.mxu0 0.0
        %2643 = vmatpush1.msra.mxu0 0.0
        %2644 = vmatprep.subr.mxu0 0.0
        %2645 = vmatpush1.msra.mxu0 0.0
        %2646 = vmatprep.subr.mxu0 0.0
        %2647 = vmatpush1.msra.mxu0 0.0
        %2648 = vmatprep.subr.mxu0 0.0
        %2649 = vmatpush1.msra.mxu0 0.0
        %2650 = vmatprep.subr.mxu0 0.0
        %2651 = vmatpush1.msra.mxu0 0.0
        %2652 = vmatprep.subr.mxu0 0.0
        %2653 = vmatpush1.msra.mxu0 0.0
        %2654 = vmatprep.subr.mxu0 0.0
        %2655 = vmatpush1.msra.mxu0 0.0
        %2656 = vmatprep.subr.mxu0 0.0
        %2657 = vmatpush1.msra.mxu0 0.0
        %2658 = vmatprep.subr.mxu0 0.0
        %2659 = vmatpush1.msra.mxu0 0.0
        %2660 = vmatprep.subr.mxu0 0.0
        %2661 = vmatpush1.msra.mxu0 0.0
        %2662 = vmatprep.mubr.f32.mxu0 0.0
        %2663 = vmatmul.mubr.f32.gmra.mrb[0].mxu0 %v1746
        %v2664 = vpop.f32.mrb[0].mxu0
        %v2665 = vadd.f32 0.0, %v2664
        %v2666 = vpop.f32.mrb[0].mxu0
        %v2667 = vadd.f32 0.0, %v2666
        %2668 = vmatprep.mubr.f32.mxu0 0.0
        %2669 = vmatmul.mubr.f32.gmra.mrb[0].mxu0 %v1749
        %v2670 = vpop.f32.mrb[0].mxu0
        %v2671 = vadd.f32 0.0, %v2670
        %v2672 = vpop.f32.mrb[0].mxu0
        %v2673 = vadd.f32 0.0, %v2672
        %2674 = vdwg.mxu0
        %2675 = vmatprep.subr.mxu0 %v1704
        %2676 = vmatpush1.msra.mxu0 %v1703
        %2677 = vmatprep.subr.mxu0 %v1736
        %2678 = vmatpush1.msra.mxu0 %v1735
        %2679 = vmatprep.subr.mxu0 0.0
        %2680 = vmatpush1.msra.mxu0 0.0
        %2681 = vmatprep.subr.mxu0 0.0
        %2682 = vmatpush1.msra.mxu0 0.0
        %2683 = vmatprep.subr.mxu0 0.0
        %2684 = vmatpush1.msra.mxu0 0.0
        %2685 = vmatprep.subr.mxu0 0.0
        %2686 = vmatpush1.msra.mxu0 0.0
        %2687 = vmatprep.subr.mxu0 0.0
        %2688 = vmatpush1.msra.mxu0 0.0
        %2689 = vmatprep.subr.mxu0 0.0
        %2690 = vmatpush1.msra.mxu0 0.0
        %2691 = vmatprep.subr.mxu0 0.0
        %2692 = vmatpush1.msra.mxu0 0.0
        %2693 = vmatprep.subr.mxu0 0.0
        %2694 = vmatpush1.msra.mxu0 0.0
        %2695 = vmatprep.subr.mxu0 0.0
        %2696 = vmatpush1.msra.mxu0 0.0
        %2697 = vmatprep.subr.mxu0 0.0
        %2698 = vmatpush1.msra.mxu0 0.0
        %2699 = vmatprep.subr.mxu0 0.0
        %2700 = vmatpush1.msra.mxu0 0.0
        %2701 = vmatprep.subr.mxu0 0.0
        %2702 = vmatpush1.msra.mxu0 0.0
        %2703 = vmatprep.subr.mxu0 0.0
        %2704 = vmatpush1.msra.mxu0 0.0
        %2705 = vmatprep.subr.mxu0 0.0
        %2706 = vmatpush1.msra.mxu0 0.0
        %2707 = vmatprep.subr.mxu0 0.0
        %2708 = vmatpush1.msra.mxu0 0.0
        %2709 = vmatprep.subr.mxu0 0.0
        %2710 = vmatpush1.msra.mxu0 0.0
        %2711 = vmatprep.subr.mxu0 0.0
        %2712 = vmatpush1.msra.mxu0 0.0
        %2713 = vmatprep.subr.mxu0 0.0
        %2714 = vmatpush1.msra.mxu0 0.0
        %2715 = vmatprep.subr.mxu0 0.0
        %2716 = vmatpush1.msra.mxu0 0.0
        %2717 = vmatprep.subr.mxu0 0.0
        %2718 = vmatpush1.msra.mxu0 0.0
        %2719 = vmatprep.subr.mxu0 0.0
        %2720 = vmatpush1.msra.mxu0 0.0
        %2721 = vmatprep.subr.mxu0 0.0
        %2722 = vmatpush1.msra.mxu0 0.0
        %2723 = vmatprep.subr.mxu0 0.0
        %2724 = vmatpush1.msra.mxu0 0.0
        %2725 = vmatprep.subr.mxu0 0.0
        %2726 = vmatpush1.msra.mxu0 0.0
        %2727 = vmatprep.subr.mxu0 0.0
        %2728 = vmatpush1.msra.mxu0 0.0
        %2729 = vmatprep.subr.mxu0 0.0
        %2730 = vmatpush1.msra.mxu0 0.0
        %2731 = vmatprep.subr.mxu0 0.0
        %2732 = vmatpush1.msra.mxu0 0.0
        %2733 = vmatprep.subr.mxu0 0.0
        %2734 = vmatpush1.msra.mxu0 0.0
        %2735 = vmatprep.subr.mxu0 0.0
        %2736 = vmatpush1.msra.mxu0 0.0
        %2737 = vmatprep.subr.mxu0 0.0
        %2738 = vmatpush1.msra.mxu0 0.0
        %2739 = vmatprep.mubr.f32.mxu0 0.0
        %2740 = vmatmul.mubr.f32.gmra.mrb[0].mxu0 %v1746
        %v2741 = vpop.f32.mrb[0].mxu0
        %v2742 = vadd.f32 0.0, %v2741
        %v2743 = vpop.f32.mrb[0].mxu0
        %v2744 = vadd.f32 0.0, %v2743
        %2745 = vmatprep.mubr.f32.mxu0 0.0
        %2746 = vmatmul.mubr.f32.gmra.mrb[0].mxu0 %v1749
        %v2747 = vpop.f32.mrb[0].mxu0
        %v2748 = vadd.f32 0.0, %v2747
        %v2749 = vpop.f32.mrb[0].mxu0
        %v2750 = vadd.f32 0.0, %v2749
        %2751 = vdwg.mxu0
        %2752 = vmatprep.subr.mxu0 %v1706
        %2753 = vmatpush1.msra.mxu0 %v1705
        %2754 = vmatprep.subr.mxu0 %v1738
        %2755 = vmatpush1.msra.mxu0 %v1737
        %2756 = vmatprep.subr.mxu0 0.0
        %2757 = vmatpush1.msra.mxu0 0.0
        %2758 = vmatprep.subr.mxu0 0.0
        %2759 = vmatpush1.msra.mxu0 0.0
        %2760 = vmatprep.subr.mxu0 0.0
        %2761 = vmatpush1.msra.mxu0 0.0
        %2762 = vmatprep.subr.mxu0 0.0
        %2763 = vmatpush1.msra.mxu0 0.0
        %2764 = vmatprep.subr.mxu0 0.0
        %2765 = vmatpush1.msra.mxu0 0.0
        %2766 = vmatprep.subr.mxu0 0.0
        %2767 = vmatpush1.msra.mxu0 0.0
        %2768 = vmatprep.subr.mxu0 0.0
        %2769 = vmatpush1.msra.mxu0 0.0
        %2770 = vmatprep.subr.mxu0 0.0
        %2771 = vmatpush1.msra.mxu0 0.0
        %2772 = vmatprep.subr.mxu0 0.0
        %2773 = vmatpush1.msra.mxu0 0.0
        %2774 = vmatprep.subr.mxu0 0.0
        %2775 = vmatpush1.msra.mxu0 0.0
        %2776 = vmatprep.subr.mxu0 0.0
        %2777 = vmatpush1.msra.mxu0 0.0
        %2778 = vmatprep.subr.mxu0 0.0
        %2779 = vmatpush1.msra.mxu0 0.0
        %2780 = vmatprep.subr.mxu0 0.0
        %2781 = vmatpush1.msra.mxu0 0.0
        %2782 = vmatprep.subr.mxu0 0.0
        %2783 = vmatpush1.msra.mxu0 0.0
        %2784 = vmatprep.subr.mxu0 0.0
        %2785 = vmatpush1.msra.mxu0 0.0
        %2786 = vmatprep.subr.mxu0 0.0
        %2787 = vmatpush1.msra.mxu0 0.0
        %2788 = vmatprep.subr.mxu0 0.0
        %2789 = vmatpush1.msra.mxu0 0.0
        %2790 = vmatprep.subr.mxu0 0.0
        %2791 = vmatpush1.msra.mxu0 0.0
        %2792 = vmatprep.subr.mxu0 0.0
        %2793 = vmatpush1.msra.mxu0 0.0
        %2794 = vmatprep.subr.mxu0 0.0
        %2795 = vmatpush1.msra.mxu0 0.0
        %2796 = vmatprep.subr.mxu0 0.0
        %2797 = vmatpush1.msra.mxu0 0.0
        %2798 = vmatprep.subr.mxu0 0.0
        %2799 = vmatpush1.msra.mxu0 0.0
        %2800 = vmatprep.subr.mxu0 0.0
        %2801 = vmatpush1.msra.mxu0 0.0
        %2802 = vmatprep.subr.mxu0 0.0
        %2803 = vmatpush1.msra.mxu0 0.0
        %2804 = vmatprep.subr.mxu0 0.0
        %2805 = vmatpush1.msra.mxu0 0.0
        %2806 = vmatprep.subr.mxu0 0.0
        %2807 = vmatpush1.msra.mxu0 0.0
        %2808 = vmatprep.subr.mxu0 0.0
        %2809 = vmatpush1.msra.mxu0 0.0
        %2810 = vmatprep.subr.mxu0 0.0
        %2811 = vmatpush1.msra.mxu0 0.0
        %2812 = vmatprep.subr.mxu0 0.0
        %2813 = vmatpush1.msra.mxu0 0.0
        %2814 = vmatprep.subr.mxu0 0.0
        %2815 = vmatpush1.msra.mxu0 0.0
        %2816 = vmatprep.mubr.f32.mxu0 0.0
        %2817 = vmatmul.mubr.f32.gmra.mrb[0].mxu0 %v1746
        %v2818 = vpop.f32.mrb[0].mxu0
        %v2819 = vadd.f32 0.0, %v2818
        %v2820 = vpop.f32.mrb[0].mxu0
        %v2821 = vadd.f32 0.0, %v2820
        %2822 = vmatprep.mubr.f32.mxu0 0.0
        %2823 = vmatmul.mubr.f32.gmra.mrb[0].mxu0 %v1749
        %v2824 = vpop.f32.mrb[0].mxu0
        %v2825 = vadd.f32 0.0, %v2824
        %v2826 = vpop.f32.mrb[0].mxu0
        %v2827 = vadd.f32 0.0, %v2826
        %2828 = vdwg.mxu0
        %2829 = vmatprep.subr.mxu0 %v1708
        %2830 = vmatpush1.msra.mxu0 %v1707
        %2831 = vmatprep.subr.mxu0 %v1740
        %2832 = vmatpush1.msra.mxu0 %v1739
        %2833 = vmatprep.subr.mxu0 0.0
        %2834 = vmatpush1.msra.mxu0 0.0
        %2835 = vmatprep.subr.mxu0 0.0
        %2836 = vmatpush1.msra.mxu0 0.0
        %2837 = vmatprep.subr.mxu0 0.0
        %2838 = vmatpush1.msra.mxu0 0.0
        %2839 = vmatprep.subr.mxu0 0.0
        %2840 = vmatpush1.msra.mxu0 0.0
        %2841 = vmatprep.subr.mxu0 0.0
        %2842 = vmatpush1.msra.mxu0 0.0
        %2843 = vmatprep.subr.mxu0 0.0
        %2844 = vmatpush1.msra.mxu0 0.0
        %2845 = vmatprep.subr.mxu0 0.0
        %2846 = vmatpush1.msra.mxu0 0.0
        %2847 = vmatprep.subr.mxu0 0.0
        %2848 = vmatpush1.msra.mxu0 0.0
        %2849 = vmatprep.subr.mxu0 0.0
        %2850 = vmatpush1.msra.mxu0 0.0
        %2851 = vmatprep.subr.mxu0 0.0
        %2852 = vmatpush1.msra.mxu0 0.0
        %2853 = vmatprep.subr.mxu0 0.0
        %2854 = vmatpush1.msra.mxu0 0.0
        %2855 = vmatprep.subr.mxu0 0.0
        %2856 = vmatpush1.msra.mxu0 0.0
        %2857 = vmatprep.subr.mxu0 0.0
        %2858 = vmatpush1.msra.mxu0 0.0
        %2859 = vmatprep.subr.mxu0 0.0
        %2860 = vmatpush1.msra.mxu0 0.0
        %2861 = vmatprep.subr.mxu0 0.0
        %2862 = vmatpush1.msra.mxu0 0.0
        %2863 = vmatprep.subr.mxu0 0.0
        %2864 = vmatpush1.msra.mxu0 0.0
        %2865 = vmatprep.subr.mxu0 0.0
        %2866 = vmatpush1.msra.mxu0 0.0
        %2867 = vmatprep.subr.mxu0 0.0
        %2868 = vmatpush1.msra.mxu0 0.0
        %2869 = vmatprep.subr.mxu0 0.0
        %2870 = vmatpush1.msra.mxu0 0.0
        %2871 = vmatprep.subr.mxu0 0.0
        %2872 = vmatpush1.msra.mxu0 0.0
        %2873 = vmatprep.subr.mxu0 0.0
        %2874 = vmatpush1.msra.mxu0 0.0
        %2875 = vmatprep.subr.mxu0 0.0
        %2876 = vmatpush1.msra.mxu0 0.0
        %2877 = vmatprep.subr.mxu0 0.0
        %2878 = vmatpush1.msra.mxu0 0.0
        %2879 = vmatprep.subr.mxu0 0.0
        %2880 = vmatpush1.msra.mxu0 0.0
        %2881 = vmatprep.subr.mxu0 0.0
        %2882 = vmatpush1.msra.mxu0 0.0
        %2883 = vmatprep.subr.mxu0 0.0
        %2884 = vmatpush1.msra.mxu0 0.0
        %2885 = vmatprep.subr.mxu0 0.0
        %2886 = vmatpush1.msra.mxu0 0.0
        %2887 = vmatprep.subr.mxu0 0.0
        %2888 = vmatpush1.msra.mxu0 0.0
        %2889 = vmatprep.subr.mxu0 0.0
        %2890 = vmatpush1.msra.mxu0 0.0
        %2891 = vmatprep.subr.mxu0 0.0
        %2892 = vmatpush1.msra.mxu0 0.0
        %2893 = vmatprep.mubr.f32.mxu0 0.0
        %2894 = vmatmul.mubr.f32.gmra.mrb[0].mxu0 %v1746
        %v2895 = vpop.f32.mrb[0].mxu0
        %v2896 = vadd.f32 0.0, %v2895
        %v2897 = vpop.f32.mrb[0].mxu0
        %v2898 = vadd.f32 0.0, %v2897
        %2899 = vmatprep.mubr.f32.mxu0 0.0
        %2900 = vmatmul.mubr.f32.gmra.mrb[0].mxu0 %v1749
        %v2901 = vpop.f32.mrb[0].mxu0
        %v2902 = vadd.f32 0.0, %v2901
        %v2903 = vpop.f32.mrb[0].mxu0
        %v2904 = vadd.f32 0.0, %v2903
        %2905 = vdwg.mxu0
        %2906 = vmatprep.subr.mxu0 %v1710
        %2907 = vmatpush1.msra.mxu0 %v1709
        %2908 = vmatprep.subr.mxu0 %v1742
        %2909 = vmatpush1.msra.mxu0 %v1741
        %2910 = vmatprep.subr.mxu0 0.0
        %2911 = vmatpush1.msra.mxu0 0.0
        %2912 = vmatprep.subr.mxu0 0.0
        %2913 = vmatpush1.msra.mxu0 0.0
        %2914 = vmatprep.subr.mxu0 0.0
        %2915 = vmatpush1.msra.mxu0 0.0
        %2916 = vmatprep.subr.mxu0 0.0
        %2917 = vmatpush1.msra.mxu0 0.0
        %2918 = vmatprep.subr.mxu0 0.0
        %2919 = vmatpush1.msra.mxu0 0.0
        %2920 = vmatprep.subr.mxu0 0.0
        %2921 = vmatpush1.msra.mxu0 0.0
        %2922 = vmatprep.subr.mxu0 0.0
        %2923 = vmatpush1.msra.mxu0 0.0
        %2924 = vmatprep.subr.mxu0 0.0
        %2925 = vmatpush1.msra.mxu0 0.0
        %2926 = vmatprep.subr.mxu0 0.0
        %2927 = vmatpush1.msra.mxu0 0.0
        %2928 = vmatprep.subr.mxu0 0.0
        %2929 = vmatpush1.msra.mxu0 0.0
        %2930 = vmatprep.subr.mxu0 0.0
        %2931 = vmatpush1.msra.mxu0 0.0
        %2932 = vmatprep.subr.mxu0 0.0
        %2933 = vmatpush1.msra.mxu0 0.0
        %2934 = vmatprep.subr.mxu0 0.0
        %2935 = vmatpush1.msra.mxu0 0.0
        %2936 = vmatprep.subr.mxu0 0.0
        %2937 = vmatpush1.msra.mxu0 0.0
        %2938 = vmatprep.subr.mxu0 0.0
        %2939 = vmatpush1.msra.mxu0 0.0
        %2940 = vmatprep.subr.mxu0 0.0
        %2941 = vmatpush1.msra.mxu0 0.0
        %2942 = vmatprep.subr.mxu0 0.0
        %2943 = vmatpush1.msra.mxu0 0.0
        %2944 = vmatprep.subr.mxu0 0.0
        %2945 = vmatpush1.msra.mxu0 0.0
        %2946 = vmatprep.subr.mxu0 0.0
        %2947 = vmatpush1.msra.mxu0 0.0
        %2948 = vmatprep.subr.mxu0 0.0
        %2949 = vmatpush1.msra.mxu0 0.0
        %2950 = vmatprep.subr.mxu0 0.0
        %2951 = vmatpush1.msra.mxu0 0.0
        %2952 = vmatprep.subr.mxu0 0.0
        %2953 = vmatpush1.msra.mxu0 0.0
        %2954 = vmatprep.subr.mxu0 0.0
        %2955 = vmatpush1.msra.mxu0 0.0
        %2956 = vmatprep.subr.mxu0 0.0
        %2957 = vmatpush1.msra.mxu0 0.0
        %2958 = vmatprep.subr.mxu0 0.0
        %2959 = vmatpush1.msra.mxu0 0.0
        %2960 = vmatprep.subr.mxu0 0.0
        %2961 = vmatpush1.msra.mxu0 0.0
        %2962 = vmatprep.subr.mxu0 0.0
        %2963 = vmatpush1.msra.mxu0 0.0
        %2964 = vmatprep.subr.mxu0 0.0
        %2965 = vmatpush1.msra.mxu0 0.0
        %2966 = vmatprep.subr.mxu0 0.0
        %2967 = vmatpush1.msra.mxu0 0.0
        %2968 = vmatprep.subr.mxu0 0.0
        %2969 = vmatpush1.msra.mxu0 0.0
        %2970 = vmatprep.mubr.f32.mxu0 0.0
        %2971 = vmatmul.mubr.f32.gmra.mrb[0].mxu0 %v1746
        %v2972 = vpop.f32.mrb[0].mxu0
        %v2973 = vadd.f32 0.0, %v2972
        %v2974 = vpop.f32.mrb[0].mxu0
        %v2975 = vadd.f32 0.0, %v2974
        %2976 = vmatprep.mubr.f32.mxu0 0.0
        %2977 = vmatmul.mubr.f32.gmra.mrb[0].mxu0 %v1749
        %v2978 = vpop.f32.mrb[0].mxu0
        %v2979 = vadd.f32 0.0, %v2978
        %v2980 = vpop.f32.mrb[0].mxu0
        %v2981 = vadd.f32 0.0, %v2980
        %2982 = vdwg.mxu0
        %v2983 = vmax.f32 %v1818, 0.0
        %v2984 = vmax.f32 %v1820, 0.0
        %v2985 = vmax.f32 %v1895, 0.0
        %v2986 = vmax.f32 %v1897, 0.0
        %v2987 = vmax.f32 %v1972, 0.0
        %v2988 = vmax.f32 %v1974, 0.0
        %v2989 = vmax.f32 %v2049, 0.0
        %v2990 = vmax.f32 %v2051, 0.0
        %v2991 = vmax.f32 %v2126, 0.0
        %v2992 = vmax.f32 %v2128, 0.0
        %v2993 = vmax.f32 %v2203, 0.0
        %v2994 = vmax.f32 %v2205, 0.0
        %v2995 = vmax.f32 %v2280, 0.0
        %v2996 = vmax.f32 %v2282, 0.0
        %v2997 = vmax.f32 %v2357, 0.0
        %v2998 = vmax.f32 %v2359, 0.0
        %v2999 = vmax.f32 %v2434, 0.0
        %v3000 = vmax.f32 %v2436, 0.0
        %v3001 = vmax.f32 %v2511, 0.0
        %v3002 = vmax.f32 %v2513, 0.0
        %v3003 = vmax.f32 %v2588, 0.0
        %v3004 = vmax.f32 %v2590, 0.0
        %v3005 = vmax.f32 %v2665, 0.0
        %v3006 = vmax.f32 %v2667, 0.0
        %v3007 = vmax.f32 %v2742, 0.0
        %v3008 = vmax.f32 %v2744, 0.0
        %v3009 = vmax.f32 %v2819, 0.0
        %v3010 = vmax.f32 %v2821, 0.0
        %v3011 = vmax.f32 %v2896, 0.0
        %v3012 = vmax.f32 %v2898, 0.0
        %v3013 = vmax.f32 %v2973, 0.0
        %v3014 = vmax.f32 %v2975, 0.0
        %v3015 = vmax.f32 %v1824, 0.0
        %v3016 = vmax.f32 %v1826, 0.0
        %v3017 = vmax.f32 %v1901, 0.0
        %v3018 = vmax.f32 %v1903, 0.0
        %v3019 = vmax.f32 %v1978, 0.0
        %v3020 = vmax.f32 %v1980, 0.0
        %v3021 = vmax.f32 %v2055, 0.0
        %v3022 = vmax.f32 %v2057, 0.0
        %v3023 = vmax.f32 %v2132, 0.0
        %v3024 = vmax.f32 %v2134, 0.0
        %v3025 = vmax.f32 %v2209, 0.0
        %v3026 = vmax.f32 %v2211, 0.0
        %v3027 = vmax.f32 %v2286, 0.0
        %v3028 = vmax.f32 %v2288, 0.0
        %v3029 = vmax.f32 %v2363, 0.0
        %v3030 = vmax.f32 %v2365, 0.0
        %v3031 = vmax.f32 %v2440, 0.0
        %v3032 = vmax.f32 %v2442, 0.0
        %v3033 = vmax.f32 %v2517, 0.0
        %v3034 = vmax.f32 %v2519, 0.0
        %v3035 = vmax.f32 %v2594, 0.0
        %v3036 = vmax.f32 %v2596, 0.0
        %v3037 = vmax.f32 %v2671, 0.0
        %v3038 = vmax.f32 %v2673, 0.0
        %v3039 = vmax.f32 %v2748, 0.0
        %v3040 = vmax.f32 %v2750, 0.0
        %v3041 = vmax.f32 %v2825, 0.0
        %v3042 = vmax.f32 %v2827, 0.0
        %v3043 = vmax.f32 %v2902, 0.0
        %v3044 = vmax.f32 %v2904, 0.0
        %v3045 = vmax.f32 %v2979, 0.0
        %v3046 = vmax.f32 %v2981, 0.0
        %v3047 = vld [vmem:[%s3] sm:$0xff]
        %v3048 = vld [vmem:[%s3 + $0x8] sm:$0xff]
        %3050 = vset.pattern.permute.xlu0 0
        %3051 = vperm.xlu0 %3050, %v3047
        %v3052 = vpop.permute.xlu0 %3051
        %3055 = vset.pattern.permute.xlu0 0
        %3056 = vperm.xlu0 %3055, %v3048
        %v3057 = vpop.permute.xlu0 %3056
        %v3059 = vmul.f32 %v2983, %v3052
        %v3060 = vmul.f32 %v2984, %v3052
        %v3061 = vmul.f32 %v2985, %v3052
        %v3062 = vmul.f32 %v2986, %v3052
        %v3063 = vmul.f32 %v2987, %v3052
        %v3064 = vmul.f32 %v2988, %v3052
        %v3065 = vmul.f32 %v2989, %v3052
        %v3066 = vmul.f32 %v2990, %v3052
        %v3067 = vmul.f32 %v2991, %v3052
        %v3068 = vmul.f32 %v2992, %v3052
        %v3069 = vmul.f32 %v2993, %v3052
        %v3070 = vmul.f32 %v2994, %v3052
        %v3071 = vmul.f32 %v2995, %v3052
        %v3072 = vmul.f32 %v2996, %v3052
        %v3073 = vmul.f32 %v2997, %v3052
        %v3074 = vmul.f32 %v2998, %v3052
        %v3075 = vmul.f32 %v2999, %v3052
        %v3076 = vmul.f32 %v3000, %v3052
        %v3077 = vmul.f32 %v3001, %v3052
        %v3078 = vmul.f32 %v3002, %v3052
        %v3079 = vmul.f32 %v3003, %v3052
        %v3080 = vmul.f32 %v3004, %v3052
        %v3081 = vmul.f32 %v3005, %v3052
        %v3082 = vmul.f32 %v3006, %v3052
        %v3083 = vmul.f32 %v3007, %v3052
        %v3084 = vmul.f32 %v3008, %v3052
        %v3085 = vmul.f32 %v3009, %v3052
        %v3086 = vmul.f32 %v3010, %v3052
        %v3087 = vmul.f32 %v3011, %v3052
        %v3088 = vmul.f32 %v3012, %v3052
        %v3089 = vmul.f32 %v3013, %v3052
        %v3090 = vmul.f32 %v3014, %v3052
        %v3091 = vmul.f32 %v3015, %v3057
        %v3092 = vmul.f32 %v3016, %v3057
        %v3093 = vmul.f32 %v3017, %v3057
        %v3094 = vmul.f32 %v3018, %v3057
        %v3095 = vmul.f32 %v3019, %v3057
        %v3096 = vmul.f32 %v3020, %v3057
        %v3097 = vmul.f32 %v3021, %v3057
        %v3098 = vmul.f32 %v3022, %v3057
        %v3099 = vmul.f32 %v3023, %v3057
        %v3100 = vmul.f32 %v3024, %v3057
        %v3101 = vmul.f32 %v3025, %v3057
        %v3102 = vmul.f32 %v3026, %v3057
        %v3103 = vmul.f32 %v3027, %v3057
        %v3104 = vmul.f32 %v3028, %v3057
        %v3105 = vmul.f32 %v3029, %v3057
        %v3106 = vmul.f32 %v3030, %v3057
        %v3107 = vmul.f32 %v3031, %v3057
        %v3108 = vmul.f32 %v3032, %v3057
        %v3109 = vmul.f32 %v3033, %v3057
        %v3110 = vmul.f32 %v3034, %v3057
        %v3111 = vmul.f32 %v3035, %v3057
        %v3112 = vmul.f32 %v3036, %v3057
        %v3113 = vmul.f32 %v3037, %v3057
        %v3114 = vmul.f32 %v3038, %v3057
        %v3115 = vmul.f32 %v3039, %v3057
        %v3116 = vmul.f32 %v3040, %v3057
        %v3117 = vmul.f32 %v3041, %v3057
        %v3118 = vmul.f32 %v3042, %v3057
        %v3119 = vmul.f32 %v3043, %v3057
        %v3120 = vmul.f32 %v3044, %v3057
        %v3121 = vmul.f32 %v3045, %v3057
        %v3122 = vmul.f32 %v3046, %v3057
        %v3123 = vadd.f32 %v3059, %v3091
        %v3124 = vrot.slane %v3123, 4
        %v3125 = vadd.f32 %v3123, %v3124
        %v3126 = vrot.slane %v3125, 2
        %v3127 = vadd.f32 %v3125, %v3126
        %v3128 = vrot.slane %v3127, 1
        %v3129 = vadd.f32 %v3127, %v3128
        %v3130 = vadd.f32 %v3060, %v3092
        %v3131 = vrot.slane %v3130, 4
        %v3132 = vadd.f32 %v3130, %v3131
        %v3133 = vrot.slane %v3132, 2
        %v3134 = vadd.f32 %v3132, %v3133
        %v3135 = vrot.slane %v3134, 1
        %v3136 = vadd.f32 %v3134, %v3135
        %v3137 = vadd.f32 %v3061, %v3093
        %v3138 = vrot.slane %v3137, 4
        %v3139 = vadd.f32 %v3137, %v3138
        %v3140 = vrot.slane %v3139, 2
        %v3141 = vadd.f32 %v3139, %v3140
        %v3142 = vrot.slane %v3141, 1
        %v3143 = vadd.f32 %v3141, %v3142
        %v3144 = vadd.f32 %v3062, %v3094
        %v3145 = vrot.slane %v3144, 4
        %v3146 = vadd.f32 %v3144, %v3145
        %v3147 = vrot.slane %v3146, 2
        %v3148 = vadd.f32 %v3146, %v3147
        %v3149 = vrot.slane %v3148, 1
        %v3150 = vadd.f32 %v3148, %v3149
        %v3151 = vadd.f32 %v3063, %v3095
        %v3152 = vrot.slane %v3151, 4
        %v3153 = vadd.f32 %v3151, %v3152
        %v3154 = vrot.slane %v3153, 2
        %v3155 = vadd.f32 %v3153, %v3154
        %v3156 = vrot.slane %v3155, 1
        %v3157 = vadd.f32 %v3155, %v3156
        %v3158 = vadd.f32 %v3064, %v3096
        %v3159 = vrot.slane %v3158, 4
        %v3160 = vadd.f32 %v3158, %v3159
        %v3161 = vrot.slane %v3160, 2
        %v3162 = vadd.f32 %v3160, %v3161
        %v3163 = vrot.slane %v3162, 1
        %v3164 = vadd.f32 %v3162, %v3163
        %v3165 = vadd.f32 %v3065, %v3097
        %v3166 = vrot.slane %v3165, 4
        %v3167 = vadd.f32 %v3165, %v3166
        %v3168 = vrot.slane %v3167, 2
        %v3169 = vadd.f32 %v3167, %v3168
        %v3170 = vrot.slane %v3169, 1
        %v3171 = vadd.f32 %v3169, %v3170
        %v3172 = vadd.f32 %v3066, %v3098
        %v3173 = vrot.slane %v3172, 4
        %v3174 = vadd.f32 %v3172, %v3173
        %v3175 = vrot.slane %v3174, 2
        %v3176 = vadd.f32 %v3174, %v3175
        %v3177 = vrot.slane %v3176, 1
        %v3178 = vadd.f32 %v3176, %v3177
        %v3179 = vadd.f32 %v3067, %v3099
        %v3180 = vrot.slane %v3179, 4
        %v3181 = vadd.f32 %v3179, %v3180
        %v3182 = vrot.slane %v3181, 2
        %v3183 = vadd.f32 %v3181, %v3182
        %v3184 = vrot.slane %v3183, 1
        %v3185 = vadd.f32 %v3183, %v3184
        %v3186 = vadd.f32 %v3068, %v3100
        %v3187 = vrot.slane %v3186, 4
        %v3188 = vadd.f32 %v3186, %v3187
        %v3189 = vrot.slane %v3188, 2
        %v3190 = vadd.f32 %v3188, %v3189
        %v3191 = vrot.slane %v3190, 1
        %v3192 = vadd.f32 %v3190, %v3191
        %v3193 = vadd.f32 %v3069, %v3101
        %v3194 = vrot.slane %v3193, 4
        %v3195 = vadd.f32 %v3193, %v3194
        %v3196 = vrot.slane %v3195, 2
        %v3197 = vadd.f32 %v3195, %v3196
        %v3198 = vrot.slane %v3197, 1
        %v3199 = vadd.f32 %v3197, %v3198
        %v3200 = vadd.f32 %v3070, %v3102
        %v3201 = vrot.slane %v3200, 4
        %v3202 = vadd.f32 %v3200, %v3201
        %v3203 = vrot.slane %v3202, 2
        %v3204 = vadd.f32 %v3202, %v3203
        %v3205 = vrot.slane %v3204, 1
        %v3206 = vadd.f32 %v3204, %v3205
        %v3207 = vadd.f32 %v3071, %v3103
        %v3208 = vrot.slane %v3207, 4
        %v3209 = vadd.f32 %v3207, %v3208
        %v3210 = vrot.slane %v3209, 2
        %v3211 = vadd.f32 %v3209, %v3210
        %v3212 = vrot.slane %v3211, 1
        %v3213 = vadd.f32 %v3211, %v3212
        %v3214 = vadd.f32 %v3072, %v3104
        %v3215 = vrot.slane %v3214, 4
        %v3216 = vadd.f32 %v3214, %v3215
        %v3217 = vrot.slane %v3216, 2
        %v3218 = vadd.f32 %v3216, %v3217
        %v3219 = vrot.slane %v3218, 1
        %v3220 = vadd.f32 %v3218, %v3219
        %v3221 = vadd.f32 %v3073, %v3105
        %v3222 = vrot.slane %v3221, 4
        %v3223 = vadd.f32 %v3221, %v3222
        %v3224 = vrot.slane %v3223, 2
        %v3225 = vadd.f32 %v3223, %v3224
        %v3226 = vrot.slane %v3225, 1
        %v3227 = vadd.f32 %v3225, %v3226
        %v3228 = vadd.f32 %v3074, %v3106
        %v3229 = vrot.slane %v3228, 4
        %v3230 = vadd.f32 %v3228, %v3229
        %v3231 = vrot.slane %v3230, 2
        %v3232 = vadd.f32 %v3230, %v3231
        %v3233 = vrot.slane %v3232, 1
        %v3234 = vadd.f32 %v3232, %v3233
        %v3235 = vadd.f32 %v3075, %v3107
        %v3236 = vrot.slane %v3235, 4
        %v3237 = vadd.f32 %v3235, %v3236
        %v3238 = vrot.slane %v3237, 2
        %v3239 = vadd.f32 %v3237, %v3238
        %v3240 = vrot.slane %v3239, 1
        %v3241 = vadd.f32 %v3239, %v3240
        %v3242 = vadd.f32 %v3076, %v3108
        %v3243 = vrot.slane %v3242, 4
        %v3244 = vadd.f32 %v3242, %v3243
        %v3245 = vrot.slane %v3244, 2
        %v3246 = vadd.f32 %v3244, %v3245
        %v3247 = vrot.slane %v3246, 1
        %v3248 = vadd.f32 %v3246, %v3247
        %v3249 = vadd.f32 %v3077, %v3109
        %v3250 = vrot.slane %v3249, 4
        %v3251 = vadd.f32 %v3249, %v3250
        %v3252 = vrot.slane %v3251, 2
        %v3253 = vadd.f32 %v3251, %v3252
        %v3254 = vrot.slane %v3253, 1
        %v3255 = vadd.f32 %v3253, %v3254
        %v3256 = vadd.f32 %v3078, %v3110
        %v3257 = vrot.slane %v3256, 4
        %v3258 = vadd.f32 %v3256, %v3257
        %v3259 = vrot.slane %v3258, 2
        %v3260 = vadd.f32 %v3258, %v3259
        %v3261 = vrot.slane %v3260, 1
        %v3262 = vadd.f32 %v3260, %v3261
        %v3263 = vadd.f32 %v3079, %v3111
        %v3264 = vrot.slane %v3263, 4
        %v3265 = vadd.f32 %v3263, %v3264
        %v3266 = vrot.slane %v3265, 2
        %v3267 = vadd.f32 %v3265, %v3266
        %v3268 = vrot.slane %v3267, 1
        %v3269 = vadd.f32 %v3267, %v3268
        %v3270 = vadd.f32 %v3080, %v3112
        %v3271 = vrot.slane %v3270, 4
        %v3272 = vadd.f32 %v3270, %v3271
        %v3273 = vrot.slane %v3272, 2
        %v3274 = vadd.f32 %v3272, %v3273
        %v3275 = vrot.slane %v3274, 1
        %v3276 = vadd.f32 %v3274, %v3275
        %v3277 = vadd.f32 %v3081, %v3113
        %v3278 = vrot.slane %v3277, 4
        %v3279 = vadd.f32 %v3277, %v3278
        %v3280 = vrot.slane %v3279, 2
        %v3281 = vadd.f32 %v3279, %v3280
        %v3282 = vrot.slane %v3281, 1
        %v3283 = vadd.f32 %v3281, %v3282
        %v3284 = vadd.f32 %v3082, %v3114
        %v3285 = vrot.slane %v3284, 4
        %v3286 = vadd.f32 %v3284, %v3285
        %v3287 = vrot.slane %v3286, 2
        %v3288 = vadd.f32 %v3286, %v3287
        %v3289 = vrot.slane %v3288, 1
        %v3290 = vadd.f32 %v3288, %v3289
        %v3291 = vadd.f32 %v3083, %v3115
        %v3292 = vrot.slane %v3291, 4
        %v3293 = vadd.f32 %v3291, %v3292
        %v3294 = vrot.slane %v3293, 2
        %v3295 = vadd.f32 %v3293, %v3294
        %v3296 = vrot.slane %v3295, 1
        %v3297 = vadd.f32 %v3295, %v3296
        %v3298 = vadd.f32 %v3084, %v3116
        %v3299 = vrot.slane %v3298, 4
        %v3300 = vadd.f32 %v3298, %v3299
        %v3301 = vrot.slane %v3300, 2
        %v3302 = vadd.f32 %v3300, %v3301
        %v3303 = vrot.slane %v3302, 1
        %v3304 = vadd.f32 %v3302, %v3303
        %v3305 = vadd.f32 %v3085, %v3117
        %v3306 = vrot.slane %v3305, 4
        %v3307 = vadd.f32 %v3305, %v3306
        %v3308 = vrot.slane %v3307, 2
        %v3309 = vadd.f32 %v3307, %v3308
        %v3310 = vrot.slane %v3309, 1
        %v3311 = vadd.f32 %v3309, %v3310
        %v3312 = vadd.f32 %v3086, %v3118
        %v3313 = vrot.slane %v3312, 4
        %v3314 = vadd.f32 %v3312, %v3313
        %v3315 = vrot.slane %v3314, 2
        %v3316 = vadd.f32 %v3314, %v3315
        %v3317 = vrot.slane %v3316, 1
        %v3318 = vadd.f32 %v3316, %v3317
        %v3319 = vadd.f32 %v3087, %v3119
        %v3320 = vrot.slane %v3319, 4
        %v3321 = vadd.f32 %v3319, %v3320
        %v3322 = vrot.slane %v3321, 2
        %v3323 = vadd.f32 %v3321, %v3322
        %v3324 = vrot.slane %v3323, 1
        %v3325 = vadd.f32 %v3323, %v3324
        %v3326 = vadd.f32 %v3088, %v3120
        %v3327 = vrot.slane %v3326, 4
        %v3328 = vadd.f32 %v3326, %v3327
        %v3329 = vrot.slane %v3328, 2
        %v3330 = vadd.f32 %v3328, %v3329
        %v3331 = vrot.slane %v3330, 1
        %v3332 = vadd.f32 %v3330, %v3331
        %v3333 = vadd.f32 %v3089, %v3121
        %v3334 = vrot.slane %v3333, 4
        %v3335 = vadd.f32 %v3333, %v3334
        %v3336 = vrot.slane %v3335, 2
        %v3337 = vadd.f32 %v3335, %v3336
        %v3338 = vrot.slane %v3337, 1
        %v3339 = vadd.f32 %v3337, %v3338
        %v3340 = vadd.f32 %v3090, %v3122
        %v3341 = vrot.slane %v3340, 4
        %v3342 = vadd.f32 %v3340, %v3341
        %v3343 = vrot.slane %v3342, 2
        %v3344 = vadd.f32 %v3342, %v3343
        %v3345 = vrot.slane %v3344, 1
        %v3346 = vadd.f32 %v3344, %v3345
        %v3379 = vcombine.low %v3129, %v3136
        %v3380 = vcombine.low %v3143, %v3150
        %v3381 = vcombine.low %v3157, %v3164
        %v3382 = vcombine.low %v3171, %v3178
        %v3384 = vunpack.c.l.s4 1966171168
        %v3385 = vunpack.c.0.s8 %v3384
        %v3386 = vlaneseq
        %v3387 = vshrl.u32 %v3386, 7
        %v3388 = vsub.s32 %v3385, %v3387
        %v3389 = vrot.slane %v3379, %v3388
        %v3391 = vunpack.c.l.s4 1966171168
        %v3392 = vunpack.c.0.s8 %v3391
        %v3393 = vlaneseq
        %v3394 = vshrl.u32 %v3393, 7
        %v3395 = vsub.s32 %v3392, %v3394
        %v3396 = vrot.slane %v3380, %v3395
        %v3398 = vunpack.c.l.s4 1966171168
        %v3399 = vunpack.c.0.s8 %v3398
        %v3400 = vlaneseq
        %v3401 = vshrl.u32 %v3400, 7
        %v3402 = vsub.s32 %v3399, %v3401
        %v3403 = vrot.slane %v3381, %v3402
        %v3405 = vunpack.c.l.s4 1966171168
        %v3406 = vunpack.c.0.s8 %v3405
        %v3407 = vlaneseq
        %v3408 = vshrl.u32 %v3407, 7
        %v3409 = vsub.s32 %v3406, %v3408
        %v3410 = vrot.slane %v3382, %v3409
        %v3411 = vcombine.low %v3389, %v3396
        %v3412 = vcombine.low %v3403, %v3410
        %v3414 = vunpack.c.l.s4 1966171168
        %v3415 = vunpack.c.0.s8 %v3414
        %v3416 = vlaneseq
        %v3417 = vshrl.u32 %v3416, 7
        %v3418 = vsub.s32 %v3415, %v3417
        %v3419 = vrot.slane %v3411, %v3418
        %v3421 = vunpack.c.l.s4 1966171168
        %v3422 = vunpack.c.0.s8 %v3421
        %v3423 = vlaneseq
        %v3424 = vshrl.u32 %v3423, 7
        %v3425 = vsub.s32 %v3422, %v3424
        %v3426 = vrot.slane %v3412, %v3425
        %v3427 = vcombine.low %v3419, %v3426
        %v3428 = vcombine.low %v3185, %v3192
        %v3429 = vcombine.low %v3199, %v3206
        %v3430 = vcombine.low %v3213, %v3220
        %v3431 = vcombine.low %v3227, %v3234
        %v3433 = vunpack.c.l.s4 1966171168
        %v3434 = vunpack.c.0.s8 %v3433
        %v3435 = vlaneseq
        %v3436 = vshrl.u32 %v3435, 7
        %v3437 = vsub.s32 %v3434, %v3436
        %v3438 = vrot.slane %v3428, %v3437
        %v3440 = vunpack.c.l.s4 1966171168
        %v3441 = vunpack.c.0.s8 %v3440
        %v3442 = vlaneseq
        %v3443 = vshrl.u32 %v3442, 7
        %v3444 = vsub.s32 %v3441, %v3443
        %v3445 = vrot.slane %v3429, %v3444
        %v3447 = vunpack.c.l.s4 1966171168
        %v3448 = vunpack.c.0.s8 %v3447
        %v3449 = vlaneseq
        %v3450 = vshrl.u32 %v3449, 7
        %v3451 = vsub.s32 %v3448, %v3450
        %v3452 = vrot.slane %v3430, %v3451
        %v3454 = vunpack.c.l.s4 1966171168
        %v3455 = vunpack.c.0.s8 %v3454
        %v3456 = vlaneseq
        %v3457 = vshrl.u32 %v3456, 7
        %v3458 = vsub.s32 %v3455, %v3457
        %v3459 = vrot.slane %v3431, %v3458
        %v3460 = vcombine.low %v3438, %v3445
        %v3461 = vcombine.low %v3452, %v3459
        %v3463 = vunpack.c.l.s4 1966171168
        %v3464 = vunpack.c.0.s8 %v3463
        %v3465 = vlaneseq
        %v3466 = vshrl.u32 %v3465, 7
        %v3467 = vsub.s32 %v3464, %v3466
        %v3468 = vrot.slane %v3460, %v3467
        %v3470 = vunpack.c.l.s4 1966171168
        %v3471 = vunpack.c.0.s8 %v3470
        %v3472 = vlaneseq
        %v3473 = vshrl.u32 %v3472, 7
        %v3474 = vsub.s32 %v3471, %v3473
        %v3475 = vrot.slane %v3461, %v3474
        %v3476 = vcombine.low %v3468, %v3475
        %v3477 = vcombine.low %v3241, %v3248
        %v3478 = vcombine.low %v3255, %v3262
        %v3479 = vcombine.low %v3269, %v3276
        %v3480 = vcombine.low %v3283, %v3290
        %v3482 = vunpack.c.l.s4 1966171168
        %v3483 = vunpack.c.0.s8 %v3482
        %v3484 = vlaneseq
        %v3485 = vshrl.u32 %v3484, 7
        %v3486 = vsub.s32 %v3483, %v3485
        %v3487 = vrot.slane %v3477, %v3486
        %v3489 = vunpack.c.l.s4 1966171168
        %v3490 = vunpack.c.0.s8 %v3489
        %v3491 = vlaneseq
        %v3492 = vshrl.u32 %v3491, 7
        %v3493 = vsub.s32 %v3490, %v3492
        %v3494 = vrot.slane %v3478, %v3493
        %v3496 = vunpack.c.l.s4 1966171168
        %v3497 = vunpack.c.0.s8 %v3496
        %v3498 = vlaneseq
        %v3499 = vshrl.u32 %v3498, 7
        %v3500 = vsub.s32 %v3497, %v3499
        %v3501 = vrot.slane %v3479, %v3500
        %v3503 = vunpack.c.l.s4 1966171168
        %v3504 = vunpack.c.0.s8 %v3503
        %v3505 = vlaneseq
        %v3506 = vshrl.u32 %v3505, 7
        %v3507 = vsub.s32 %v3504, %v3506
        %v3508 = vrot.slane %v3480, %v3507
        %v3509 = vcombine.low %v3487, %v3494
        %v3510 = vcombine.low %v3501, %v3508
        %v3512 = vunpack.c.l.s4 1966171168
        %v3513 = vunpack.c.0.s8 %v3512
        %v3514 = vlaneseq
        %v3515 = vshrl.u32 %v3514, 7
        %v3516 = vsub.s32 %v3513, %v3515
        %v3517 = vrot.slane %v3509, %v3516
        %v3519 = vunpack.c.l.s4 1966171168
        %v3520 = vunpack.c.0.s8 %v3519
        %v3521 = vlaneseq
        %v3522 = vshrl.u32 %v3521, 7
        %v3523 = vsub.s32 %v3520, %v3522
        %v3524 = vrot.slane %v3510, %v3523
        %v3525 = vcombine.low %v3517, %v3524
        %v3526 = vcombine.low %v3297, %v3304
        %v3527 = vcombine.low %v3311, %v3318
        %v3528 = vcombine.low %v3325, %v3332
        %v3529 = vcombine.low %v3339, %v3346
        %v3531 = vunpack.c.l.s4 1966171168
        %v3532 = vunpack.c.0.s8 %v3531
        %v3533 = vlaneseq
        %v3534 = vshrl.u32 %v3533, 7
        %v3535 = vsub.s32 %v3532, %v3534
        %v3536 = vrot.slane %v3526, %v3535
        %v3538 = vunpack.c.l.s4 1966171168
        %v3539 = vunpack.c.0.s8 %v3538
        %v3540 = vlaneseq
        %v3541 = vshrl.u32 %v3540, 7
        %v3542 = vsub.s32 %v3539, %v3541
        %v3543 = vrot.slane %v3527, %v3542
        %v3545 = vunpack.c.l.s4 1966171168
        %v3546 = vunpack.c.0.s8 %v3545
        %v3547 = vlaneseq
        %v3548 = vshrl.u32 %v3547, 7
        %v3549 = vsub.s32 %v3546, %v3548
        %v3550 = vrot.slane %v3528, %v3549
        %v3552 = vunpack.c.l.s4 1966171168
        %v3553 = vunpack.c.0.s8 %v3552
        %v3554 = vlaneseq
        %v3555 = vshrl.u32 %v3554, 7
        %v3556 = vsub.s32 %v3553, %v3555
        %v3557 = vrot.slane %v3529, %v3556
        %v3558 = vcombine.low %v3536, %v3543
        %v3559 = vcombine.low %v3550, %v3557
        %v3561 = vunpack.c.l.s4 1966171168
        %v3562 = vunpack.c.0.s8 %v3561
        %v3563 = vlaneseq
        %v3564 = vshrl.u32 %v3563, 7
        %v3565 = vsub.s32 %v3562, %v3564
        %v3566 = vrot.slane %v3558, %v3565
        %v3568 = vunpack.c.l.s4 1966171168
        %v3569 = vunpack.c.0.s8 %v3568
        %v3570 = vlaneseq
        %v3571 = vshrl.u32 %v3570, 7
        %v3572 = vsub.s32 %v3569, %v3571
        %v3573 = vrot.slane %v3559, %v3572
        %v3574 = vcombine.low %v3566, %v3573
        %3579 = vst [vmem:[%s371] sm:$0xff] %v3427
        %3580 = vst [vmem:[%s371 + $0x8] sm:$0xff] %v3476
        %3581 = vst [vmem:[%s371 + $0x10] sm:$0xff] %v3525
        %3582 = vst [vmem:[%s371 + $0x18] sm:$0xff] %v3574
        %s3583 = sand.u32 %s117, 1
        %s3584 = scalar_lea.sflag [#allocation5], %s3583
        %s3585 = sand.u32 %s117, 1
        %s3586 = smul.addr %s3585, 32
        %s3587 = scalar_lea.vmem [#allocation8], %s3586
        // Predicated region
        $region68: #{network_forward.1} parent=54 // pred_check
          %p3588 = pneg %p127
        $region69: #{network_forward.1} parent=54 // pred_check_branch
          %3590 = sbr.rel (%p3588) target = $region71
        $region70: #{network_forward.1} parent=54 // pred_region
          %s3591 = smul.u32 32, %s20
          %s3593 = ssub.s32 512, 512
          %3594 = vsyncadd %s3584, %s3593
          %s3595 = smul.addr %s3591, 16
          %s3596 = scalar_lea.hbm %s4, %s3595
          %s3598 = sshll.u32 %s3587, 4
          %s3599 = int_to_ptr.vmem [resolvable:$true] %s3598
          %3601 = dma.vmem_to_hbm [thread:$0]  %s3599, 512, %s3596, %s3584
        $region71: #{network_forward.1} parent=54 // pred_fallthru
          _
      $region55: #{network_forward.1} parent=5 // pred_fallthru
        _
      %p3602 = scmp.le.s32.totalorder 2, %s15
      // Predicated region
      $region72: #{network_forward.1} parent=5 // pred_check
        %p3603 = pneg %p3602
      $region73: #{network_forward.1} parent=5 // pred_check_branch
        %3605 = sbr.rel (%p3603) target = $region75
      $region74: #{network_forward.1} parent=5 // pred_region
        %s3606 = ssub.s32 %s15, 2
        // Predicated region
        $region76: #{network_forward.1} parent=74 // pred_check
          %p3607 = pneg %p133
        $region77: #{network_forward.1} parent=74 // pred_check_branch
          %3609 = sbr.rel (%p3607) target = $region79
        $region78: #{network_forward.1} parent=74 // pred_region
          %s3610 = sand.u32 %s118, 1
          %s3611 = scalar_lea.sflag [#allocation5], %s3610
          %s3612 = sand.u32 %s118, 1
          %s3613 = smul.addr %s3612, 32
          %s3614 = scalar_lea.vmem [#allocation8], %s3613
          %3615 = dma.done %s3611, 512
        $region79: #{network_forward.1} parent=74 // pred_fallthru
          _
      $region75: #{network_forward.1} parent=5 // pred_fallthru
        _
    $region6: #{network_forward.1} parent=1 // loop_footer
      %s19 = sadd.s32 1, %s15
    $region7: #{network_forward.1} parent=1 // loop_footer_branch
      %14 = sbr.rel target = $region3
    $region8: #{network_forward.1} parent=1 // loop_exit
      _
    %3616 = vsyncpa [#allocation4], 1
    %s3617 = scalar_lea.sflag [#allocation4], 1
    %3618 = vsyncpa %s3617, 1
    %3619 = vsyncpa [#allocation7], 1
    %3620 = vsyncpa [#allocation5], 1
    %s3621 = scalar_lea.sflag [#allocation5], 1
    %3622 = vsyncpa %s3621, 1

</llo_original>
